<compile_context>
chip_gen: v6e
topology: v6e:2x2x1
jax: 0.10.0
libtpu: 0.0.40
codegen_flags: <defaults>
</compile_context>

<pallas_src>
import functools

import jax
import jax.numpy as jnp
from jax import lax
from jax.experimental import pallas as pl
from jax.experimental.pallas import tpu as pltpu

BN_EPS = 1e-5


def _round_up(x, m):
    return (x + m - 1) // m * m


def _vmem_capacity_bytes():
    try:
        return int(pltpu.get_tpu_info().vmem_capacity_bytes)
    except Exception:
        return 64 * 2 ** 20  # conservative fallback (v7x per-TensorCore VMEM)


def _conv_stats_kernel(x_ref, w_ref, y_ref, stats_ref, col_ref, *,
                       kh, kw, slabs, cout):
    """Pass 1: im2col-in-VMEM conv (one fused matmul per slab) + partial BN stats.

    x_ref:     (1, Hp, Wp, Cin_p)        bf16  padded input, one image
    w_ref:     (KH*KW*Cin_p, Cout_p)     bf16  flattened weights (K ordered ky,kx,cin)
    y_ref:     (1, H*W, Cout)            bf16  conv output (unpadded channels)
    stats_ref: (1, 2, Cout_p)            f32   per-image partial [sum, sum_of_squares]
    col_ref:   (TRmax*W, KH*KW*Cin_p)    bf16  VMEM scratch: im2col LHS slab
    """
    _, hp, wp, cin_p = x_ref.shape
    w_out = wp - (kw - 1)
    cp = w_ref.shape[1]

    s_tot = jnp.zeros((1, cp), jnp.float32)
    sq_tot = jnp.zeros((1, cp), jnp.float32)

    for r0, tr in slabs:                       # static unroll over output-row slabs
        rows = tr * w_out
        # Assemble the im2col LHS slab in VMEM (kh*kw shifted-window copies).
        for ky in range(kh):
            for kx in range(kw):
                tap = ky * kw + kx
                win = x_ref[0, r0 + ky:r0 + ky + tr, kx:kx + w_out, :]
                col_ref[0:rows, tap * cin_p:(tap + 1) * cin_p] = (
                    win.reshape(rows, cin_p))
        # Single MXU matmul, K = KH*KW*Cin_p, f32 accumulation.
        acc = jnp.dot(col_ref[0:rows, :], w_ref[...],
                      preferred_element_type=jnp.float32)
        y_ref[0, r0 * w_out:(r0 + tr) * w_out, :] = (
            acc[:, :cout].astype(y_ref.dtype))
        s_tot = s_tot + jnp.sum(acc, axis=0, keepdims=True)
        sq_tot = sq_tot + jnp.sum(acc * acc, axis=0, keepdims=True)

    stats_ref[0, 0:1, :] = s_tot
    stats_ref[0, 1:2, :] = sq_tot


def _bn_relu_kernel(y_ref, scale_ref, shift_ref, o_ref):
    """Pass 2: folded BN affine + ReLU over an M tile (purely mem-bound)."""
    y = y_ref[...].astype(jnp.float32)
    o_ref[...] = jnp.maximum(y * scale_ref[...] + shift_ref[...], 0.0)


@functools.partial(jax.jit, static_argnames=("kernel_size",))
def conv_bn_relu_forward(x_nchw, conv_w, conv_b, bn_gamma, bn_beta, *, kernel_size):
    """Matches ConvBNReLU.forward of a freshly constructed (train-mode) module.

    x_nchw: (N, Cin, H, W); conv_w: (Cout, Cin, KH, KW); conv_b/gamma/beta: (Cout,)
    returns: (N, Cout, H, W) float32
    """
    del conv_b  # Exactly cancelled by train-mode BN batch-mean subtraction.

    assert kernel_size % 2 == 1, "'same' padding here assumes odd kernel_size, stride 1"
    kh = kw = kernel_size
    n, cin, h, w = x_nchw.shape
    cout = conv_w.shape[0]

    cin_p = _round_up(cin, 8)        # sublane-aligned contraction sub-dim
    cout_p = _round_up(cout, 128)    # lane-dense in-VMEM compute tile
    k_dim = kh * kw * cin_p

    # NCHW -> NHWC, 'same' pad (stride 1), pad Cin, bf16 for the MXU stream.
    # TODO(synk): keep NHWC end-to-end across fused layers to drop this transpose.
    x_nhwc = jnp.transpose(x_nchw, (0, 2, 3, 1))
    ph, pw = kh - 1, kw - 1
    x_pad = jnp.pad(
        x_nhwc,
        ((0, 0), (ph // 2, ph - ph // 2), (pw // 2, pw - pw // 2),
         (0, cin_p - cin)),
    ).astype(jnp.bfloat16)
    hp, wp = h + ph, w + pw

    # (Cout, Cin, KH, KW) -> (KH*KW*Cin_p, Cout_p); K ordered (ky, kx, cin) to match
    # the in-kernel im2col column layout.
    w_flat = jnp.transpose(conv_w, (2, 3, 1, 0))                  # (KH, KW, Cin, Cout)
    w_flat = jnp.pad(w_flat, ((0, 0), (0, 0),
                              (0, cin_p - cin), (0, cout_p - cout)))
    w_flat = w_flat.reshape(k_dim, cout_p).astype(jnp.bfloat16)

    hw = h * w
    m = n * hw

    # Row-slab chunking so the im2col scratch + f32 accumulator stay a bounded slab.
    target_rows = 1024
    tr = max(1, min(h, target_rows // max(w, 1)))
    slabs = tuple((r0, min(tr, h - r0)) for r0 in range(0, h, tr))
    tr_max = max(t for _, t in slabs)
    slab_rows = tr_max * w

    # Generation-aware scoped-VMEM budget (estimate already counts double-buffering).
    vmem_cap = _vmem_capacity_bytes()
    vmem_est = (2 * hp * wp * cin_p * 2        # x block (bf16, 2 buffers)
                + 2 * k_dim * cout_p * 2       # weights
                + 2 * hw * cout * 2            # y block (bf16)
                + 2 * 2 * cout_p * 4           # stats block
                + slab_rows * k_dim * 2        # im2col scratch
                + 2 * slab_rows * cout_p * 4   # f32 accumulator / temps
                + (2 << 20))                   # headroom
    vmem_limit = int(min(max(vmem_est, 32 * 2 ** 20), 0.75 * vmem_cap))

    # ---- Pass 1: conv + per-image partial BN statistics ------------------------------
    y_flat, stats = pl.pallas_call(
        functools.partial(_conv_stats_kernel, kh=kh, kw=kw, slabs=slabs, cout=cout),
        grid=(n,),
        in_specs=[
            pl.BlockSpec((1, hp, wp, cin_p), lambda i: (i, 0, 0, 0)),
            pl.BlockSpec((k_dim, cout_p), lambda i: (0, 0)),
        ],
        out_specs=[
            pl.BlockSpec((1, hw, cout), lambda i: (i, 0, 0)),
            pl.BlockSpec((1, 2, cout_p), lambda i: (i, 0, 0)),
        ],
        out_shape=[
            jax.ShapeDtypeStruct((n, hw, cout), jnp.bfloat16),
            jax.ShapeDtypeStruct((n, 2, cout_p), jnp.float32),
        ],
        scratch_shapes=[pltpu.VMEM((slab_rows, k_dim), jnp.bfloat16)],
        compiler_params=pltpu.CompilerParams(
            dimension_semantics=("parallel",),     # partial stats -> fully parallel
            vmem_limit_bytes=vmem_limit),
    )(x_pad, w_flat)

    # ---- Fold train-mode BN (biased variance) into per-channel scale/shift -----------
    # NOTE: E[x^2]-E[x]^2 in f32 can lose precision for very large N*H*W / large
    # activations (reference uses centered variance); fine at these scales.
    totals = jnp.sum(stats, axis=0)[:, :cout]            # (2, Cout), padded lanes dropped
    count = jnp.float32(m)
    mean = totals[0] / count
    var = jnp.maximum(totals[1] / count - mean * mean, 0.0)
    inv_std = lax.rsqrt(var + BN_EPS)
    g = bn_gamma.astype(jnp.float32)
    scale = (g * inv_std).reshape(1, cout)
    shift = (bn_beta.astype(jnp.float32) - mean * g * inv_std).reshape(1, cout)

    # ---- Pass 2: affine + ReLU over large M tiles (mem-bound) ------------------------
    y2 = y_flat.reshape(m, cout)
    tm = min(4096, _round_up(m, 8))
    m_pad = _round_up(m, tm)
    if m_pad != m:
        y2 = jnp.pad(y2, ((0, m_pad - m), (0, 0)))

    out = pl.pallas_call(
        _bn_relu_kernel,
        grid=(m_pad // tm,),
        in_specs=[
            pl.BlockSpec((tm, cout), lambda i: (i, 0)),
            pl.BlockSpec((1, cout), lambda i: (0, 0)),
            pl.BlockSpec((1, cout), lambda i: (0, 0)),
        ],
        out_specs=pl.BlockSpec((tm, cout), lambda i: (i, 0)),
        out_shape=jax.ShapeDtypeStruct((m_pad, cout), jnp.float32),
        compiler_params=pltpu.CompilerParams(
            dimension_semantics=("parallel",),
            vmem_limit_bytes=vmem_limit),
    )(y2, scale, shift)

    out = out[:m].reshape(n, h, w, cout)
    return jnp.transpose(out, (0, 3, 1, 2))               # NHWC -> NCHW


def _reference(x_nchw, conv_w, conv_b, bn_gamma, bn_beta):
    """Pure-JAX reference: lax conv + train-mode BN (biased var) + ReLU, f32 path.

    Inputs rounded to bf16 to mirror the kernel's bf16-input / f32-accumulate matmul;
    bias kept (it cancels under train-mode BN).
    """
    xb = x_nchw.astype(jnp.bfloat16).astype(jnp.float32)
    wb = conv_w.astype(jnp.bfloat16).astype(jnp.float32)
    pad = (conv_w.shape[2] - 1) // 2
    y = lax.conv_general_dilated(
        xb, wb, window_strides=(1, 1),
        padding=[(pad, pad), (pad, pad)],
        dimension_numbers=("NCHW", "OIHW", "NCHW"))
    y = y + conv_b[None, :, None, None]
    mean = jnp.mean(y, axis=(0, 2, 3), keepdims=True)
    var = jnp.mean((y - mean) ** 2, axis=(0, 2, 3), keepdims=True)   # biased
    y_hat = (y - mean) * lax.rsqrt(var + BN_EPS)
    y_bn = y_hat * bn_gamma[None, :, None, None] + bn_beta[None, :, None, None]
    return jnp.maximum(y_bn, 0.0)


if __name__ == "__main__":
    # Shapes consistent with ConvBNReLU(in_channels=4, out_channels=8, kernel_size=3).
    N, CIN, COUT, H, W, K = 2, 4, 8, 16, 16, 3

    key = jax.random.PRNGKey(0)
    kx_, kw_, kb_, kg_, kbt_ = jax.random.split(key, 5)
    x = jax.random.normal(kx_, (N, CIN, H, W), dtype=jnp.float32)
    conv_w = jax.random.normal(kw_, (COUT, CIN, K, K), dtype=jnp.float32) * 0.1
    conv_b = jax.random.normal(kb_, (COUT,), dtype=jnp.float32) * 0.1
    bn_gamma = 1.0 + 0.1 * jax.random.normal(kg_, (COUT,), dtype=jnp.float32)
    bn_beta = 0.1 * jax.random.normal(kbt_, (COUT,), dtype=jnp.float32)

    out = conv_bn_relu_forward(x, conv_w, conv_b, bn_gamma, bn_beta, kernel_size=K)
    out = jax.block_until_ready(out)

    ref = _reference(x, conv_w, conv_b, bn_gamma, bn_beta)
    assert out.shape == (N, COUT, H, W), out.shape
    max_err = float(jnp.max(jnp.abs(out - ref)))
    # The bf16 HBM intermediate bounds the error at ~|y| * 2^-9 * bn_scale (~2e-3 here).
    assert jnp.allclose(out, ref, atol=2e-2, rtol=2e-2), max_err

    print("KERNEL_OK")
</pallas_src>

<mosaic_0001>
module attributes {stable_mosaic.version = 11 : i64} {
  func.func @_conv_stats_kernel(%arg0: i32, %arg1: memref<1x18x18x8xbf16, #tpu.memory_space<vmem>>, %arg2: memref<72x128xbf16, #tpu.memory_space<vmem>>, %arg3: memref<1x256x8xbf16, #tpu.memory_space<vmem>>, %arg4: memref<1x2x128xf32, #tpu.memory_space<vmem>>, %arg5: memref<256x72xbf16, #tpu.memory_space<vmem>>) attributes {dimension_semantics = [#tpu.dimension_semantics<parallel>], iteration_bounds = array<i64: 2>, scalar_prefetch = 0 : i64, scratch_operands = 1 : i64, tpu.core_type = #tpu.core_type<tc>, window_params = [{transform_indices = @transform_0, window_bounds = array<i64: 1, 18, 18, 8>}, {pipeline_mode = #tpu.pipeline_mode<synchronous>, transform_indices = @transform_1, window_bounds = array<i64: 72, 128>}, {transform_indices = @transform_2, window_bounds = array<i64: 1, 256, 8>}, {transform_indices = @transform_3, window_bounds = array<i64: 1, 2, 128>}]} {
    %cst = arith.constant 0.000000e+00 : f32
    %0 = vector.broadcast %cst : f32 to vector<1x128xf32>
    %cst_0 = arith.constant 0.000000e+00 : f32
    %1 = vector.broadcast %cst_0 : f32 to vector<1x128xf32>
    %c0 = arith.constant 0 : index
    %c0_1 = arith.constant 0 : index
    %c0_2 = arith.constant 0 : index
    %c0_3 = arith.constant 0 : index
    %2 = vector.load %arg1[%c0, %c0_1, %c0_2, %c0_3] : memref<1x18x18x8xbf16, #tpu.memory_space<vmem>>, vector<1x16x16x8xbf16>
    %3 = vector.shape_cast %2 : vector<1x16x16x8xbf16> to vector<16x16x8xbf16>
    %4 = vector.shape_cast %3 : vector<16x16x8xbf16> to vector<256x8xbf16>
    %c0_4 = arith.constant 0 : index
    %c0_5 = arith.constant 0 : index
    %5 = vector.load %arg5[%c0_4, %c0_5] : memref<256x72xbf16, #tpu.memory_space<vmem>>, vector<256x8xbf16>
    tpu.vector_store %arg5[%c0_4, %c0_5], %4 {strides = array<i32>} : memref<256x72xbf16, #tpu.memory_space<vmem>>, vector<256x8xbf16>,
    %c0_6 = arith.constant 0 : index
    %c0_7 = arith.constant 0 : index
    %c1 = arith.constant 1 : index
    %c0_8 = arith.constant 0 : index
    %6 = vector.load %arg1[%c0_6, %c0_7, %c1, %c0_8] : memref<1x18x18x8xbf16, #tpu.memory_space<vmem>>, vector<1x16x16x8xbf16>
    %7 = vector.shape_cast %6 : vector<1x16x16x8xbf16> to vector<16x16x8xbf16>
    %8 = vector.shape_cast %7 : vector<16x16x8xbf16> to vector<256x8xbf16>
    %c0_9 = arith.constant 0 : index
    %c8 = arith.constant 8 : index
    %9 = vector.load %arg5[%c0_9, %c8] : memref<256x72xbf16, #tpu.memory_space<vmem>>, vector<256x8xbf16>
    tpu.vector_store %arg5[%c0_9, %c8], %8 {strides = array<i32>} : memref<256x72xbf16, #tpu.memory_space<vmem>>, vector<256x8xbf16>,
    %c0_10 = arith.constant 0 : index
    %c0_11 = arith.constant 0 : index
    %c2 = arith.constant 2 : index
    %c0_12 = arith.constant 0 : index
    %10 = vector.load %arg1[%c0_10, %c0_11, %c2, %c0_12] : memref<1x18x18x8xbf16, #tpu.memory_space<vmem>>, vector<1x16x16x8xbf16>
    %11 = vector.shape_cast %10 : vector<1x16x16x8xbf16> to vector<16x16x8xbf16>
    %12 = vector.shape_cast %11 : vector<16x16x8xbf16> to vector<256x8xbf16>
    %c0_13 = arith.constant 0 : index
    %c16 = arith.constant 16 : index
    %13 = vector.load %arg5[%c0_13, %c16] : memref<256x72xbf16, #tpu.memory_space<vmem>>, vector<256x8xbf16>
    tpu.vector_store %arg5[%c0_13, %c16], %12 {strides = array<i32>} : memref<256x72xbf16, #tpu.memory_space<vmem>>, vector<256x8xbf16>,
    %c0_14 = arith.constant 0 : index
    %c1_15 = arith.constant 1 : index
    %c0_16 = arith.constant 0 : index
    %c0_17 = arith.constant 0 : index
    %14 = vector.load %arg1[%c0_14, %c1_15, %c0_16, %c0_17] : memref<1x18x18x8xbf16, #tpu.memory_space<vmem>>, vector<1x16x16x8xbf16>
    %15 = vector.shape_cast %14 : vector<1x16x16x8xbf16> to vector<16x16x8xbf16>
    %16 = vector.shape_cast %15 : vector<16x16x8xbf16> to vector<256x8xbf16>
    %c0_18 = arith.constant 0 : index
    %c24 = arith.constant 24 : index
    %17 = vector.load %arg5[%c0_18, %c24] : memref<256x72xbf16, #tpu.memory_space<vmem>>, vector<256x8xbf16>
    tpu.vector_store %arg5[%c0_18, %c24], %16 {strides = array<i32>} : memref<256x72xbf16, #tpu.memory_space<vmem>>, vector<256x8xbf16>,
    %c0_19 = arith.constant 0 : index
    %c1_20 = arith.constant 1 : index
    %c1_21 = arith.constant 1 : index
    %c0_22 = arith.constant 0 : index
    %18 = vector.load %arg1[%c0_19, %c1_20, %c1_21, %c0_22] : memref<1x18x18x8xbf16, #tpu.memory_space<vmem>>, vector<1x16x16x8xbf16>
    %19 = vector.shape_cast %18 : vector<1x16x16x8xbf16> to vector<16x16x8xbf16>
    %20 = vector.shape_cast %19 : vector<16x16x8xbf16> to vector<256x8xbf16>
    %c0_23 = arith.constant 0 : index
    %c32 = arith.constant 32 : index
    %21 = vector.load %arg5[%c0_23, %c32] : memref<256x72xbf16, #tpu.memory_space<vmem>>, vector<256x8xbf16>
    tpu.vector_store %arg5[%c0_23, %c32], %20 {strides = array<i32>} : memref<256x72xbf16, #tpu.memory_space<vmem>>, vector<256x8xbf16>,
    %c0_24 = arith.constant 0 : index
    %c1_25 = arith.constant 1 : index
    %c2_26 = arith.constant 2 : index
    %c0_27 = arith.constant 0 : index
    %22 = vector.load %arg1[%c0_24, %c1_25, %c2_26, %c0_27] : memref<1x18x18x8xbf16, #tpu.memory_space<vmem>>, vector<1x16x16x8xbf16>
    %23 = vector.shape_cast %22 : vector<1x16x16x8xbf16> to vector<16x16x8xbf16>
    %24 = vector.shape_cast %23 : vector<16x16x8xbf16> to vector<256x8xbf16>
    %c0_28 = arith.constant 0 : index
    %c40 = arith.constant 40 : index
    %25 = vector.load %arg5[%c0_28, %c40] : memref<256x72xbf16, #tpu.memory_space<vmem>>, vector<256x8xbf16>
    tpu.vector_store %arg5[%c0_28, %c40], %24 {strides = array<i32>} : memref<256x72xbf16, #tpu.memory_space<vmem>>, vector<256x8xbf16>,
    %c0_29 = arith.constant 0 : index
    %c2_30 = arith.constant 2 : index
    %c0_31 = arith.constant 0 : index
    %c0_32 = arith.constant 0 : index
    %26 = vector.load %arg1[%c0_29, %c2_30, %c0_31, %c0_32] : memref<1x18x18x8xbf16, #tpu.memory_space<vmem>>, vector<1x16x16x8xbf16>
    %27 = vector.shape_cast %26 : vector<1x16x16x8xbf16> to vector<16x16x8xbf16>
    %28 = vector.shape_cast %27 : vector<16x16x8xbf16> to vector<256x8xbf16>
    %c0_33 = arith.constant 0 : index
    %c48 = arith.constant 48 : index
    %29 = vector.load %arg5[%c0_33, %c48] : memref<256x72xbf16, #tpu.memory_space<vmem>>, vector<256x8xbf16>
    tpu.vector_store %arg5[%c0_33, %c48], %28 {strides = array<i32>} : memref<256x72xbf16, #tpu.memory_space<vmem>>, vector<256x8xbf16>,
    %c0_34 = arith.constant 0 : index
    %c2_35 = arith.constant 2 : index
    %c1_36 = arith.constant 1 : index
    %c0_37 = arith.constant 0 : index
    %30 = vector.load %arg1[%c0_34, %c2_35, %c1_36, %c0_37] : memref<1x18x18x8xbf16, #tpu.memory_space<vmem>>, vector<1x16x16x8xbf16>
    %31 = vector.shape_cast %30 : vector<1x16x16x8xbf16> to vector<16x16x8xbf16>
    %32 = vector.shape_cast %31 : vector<16x16x8xbf16> to vector<256x8xbf16>
    %c0_38 = arith.constant 0 : index
    %c56 = arith.constant 56 : index
    %33 = vector.load %arg5[%c0_38, %c56] : memref<256x72xbf16, #tpu.memory_space<vmem>>, vector<256x8xbf16>
    tpu.vector_store %arg5[%c0_38, %c56], %32 {strides = array<i32>} : memref<256x72xbf16, #tpu.memory_space<vmem>>, vector<256x8xbf16>,
    %c0_39 = arith.constant 0 : index
    %c2_40 = arith.constant 2 : index
    %c2_41 = arith.constant 2 : index
    %c0_42 = arith.constant 0 : index
    %34 = vector.load %arg1[%c0_39, %c2_40, %c2_41, %c0_42] : memref<1x18x18x8xbf16, #tpu.memory_space<vmem>>, vector<1x16x16x8xbf16>
    %35 = vector.shape_cast %34 : vector<1x16x16x8xbf16> to vector<16x16x8xbf16>
    %36 = vector.shape_cast %35 : vector<16x16x8xbf16> to vector<256x8xbf16>
    %c0_43 = arith.constant 0 : index
    %c64 = arith.constant 64 : index
    %37 = vector.load %arg5[%c0_43, %c64] : memref<256x72xbf16, #tpu.memory_space<vmem>>, vector<256x8xbf16>
    tpu.vector_store %arg5[%c0_43, %c64], %36 {strides = array<i32>} : memref<256x72xbf16, #tpu.memory_space<vmem>>, vector<256x8xbf16>,
    %c0_44 = arith.constant 0 : index
    %c0_45 = arith.constant 0 : index
    %38 = vector.load %arg5[%c0_44, %c0_45] : memref<256x72xbf16, #tpu.memory_space<vmem>>, vector<256x72xbf16>
    %c0_46 = arith.constant 0 : index
    %c0_47 = arith.constant 0 : index
    %39 = vector.load %arg2[%c0_46, %c0_47] : memref<72x128xbf16, #tpu.memory_space<vmem>>, vector<72x128xbf16>
    %cst_48 = arith.constant dense<0.000000e+00> : vector<256x128xf32>
    %40 = tpu.matmul %38, %39, %cst_48 {dimension_numbers = #tpu.dot_dimension_numbers<[1], [0], [0], [1], [0, 0, 1, 1], [], []>} : vector<256x72xbf16>, vector<72x128xbf16>, vector<256x128xf32> -> vector<256x128xf32>
    %41 = vector.extract_strided_slice %40 {offsets = [0, 0], sizes = [256, 8], strides = [1, 1]} : vector<256x128xf32> to vector<256x8xf32>
    %42 = arith.truncf %41 : vector<256x8xf32> to vector<256x8xbf16>
    %c0_49 = arith.constant 0 : index
    %c0_50 = arith.constant 0 : index
    %c0_51 = arith.constant 0 : index
    %43 = vector.load %arg3[%c0_49, %c0_50, %c0_51] : memref<1x256x8xbf16, #tpu.memory_space<vmem>>, vector<1x256x8xbf16>
    %44 = vector.shape_cast %43 : vector<1x256x8xbf16> to vector<256x8xbf16>
    %45 = vector.shape_cast %42 : vector<256x8xbf16> to vector<1x256x8xbf16>
    tpu.vector_store %arg3[%c0_49, %c0_50, %c0_51], %45 {strides = array<i32>} : memref<1x256x8xbf16, #tpu.memory_space<vmem>>, vector<1x256x8xbf16>,
    %cst_52 = arith.constant dense<0.000000e+00> : vector<128xf32>
    %46 = vector.multi_reduction <add>, %40, %cst_52 [0] : vector<256x128xf32> to vector<128xf32>
    %47 = vector.shape_cast %46 : vector<128xf32> to vector<1x128xf32>
    %48 = arith.addf %0, %47 : vector<1x128xf32>
    %49 = arith.mulf %40, %40 : vector<256x128xf32>
    %cst_53 = arith.constant dense<0.000000e+00> : vector<128xf32>
    %50 = vector.multi_reduction <add>, %49, %cst_53 [0] : vector<256x128xf32> to vector<128xf32>
    %51 = vector.shape_cast %50 : vector<128xf32> to vector<1x128xf32>
    %52 = arith.addf %1, %51 : vector<1x128xf32>
    %c0_54 = arith.constant 0 : index
    %c0_55 = arith.constant 0 : index
    %c0_56 = arith.constant 0 : index
    %53 = vector.load %arg4[%c0_54, %c0_55, %c0_56] : memref<1x2x128xf32, #tpu.memory_space<vmem>>, vector<1x1x128xf32>
    %54 = vector.shape_cast %53 : vector<1x1x128xf32> to vector<1x128xf32>
    %55 = vector.shape_cast %48 : vector<1x128xf32> to vector<1x1x128xf32>
    tpu.vector_store %arg4[%c0_54, %c0_55, %c0_56], %55 {strides = array<i32>} : memref<1x2x128xf32, #tpu.memory_space<vmem>>, vector<1x1x128xf32>,
    %c0_57 = arith.constant 0 : index
    %c1_58 = arith.constant 1 : index
    %c0_59 = arith.constant 0 : index
    %56 = vector.load %arg4[%c0_57, %c1_58, %c0_59] : memref<1x2x128xf32, #tpu.memory_space<vmem>>, vector<1x1x128xf32>
    %57 = vector.shape_cast %56 : vector<1x1x128xf32> to vector<1x128xf32>
    %58 = vector.shape_cast %52 : vector<1x128xf32> to vector<1x1x128xf32>
    tpu.vector_store %arg4[%c0_57, %c1_58, %c0_59], %58 {strides = array<i32>} : memref<1x2x128xf32, #tpu.memory_space<vmem>>, vector<1x1x128xf32>,
    return
  }
  func.func @transform_0(%arg0: i32) -> (i32, i32, i32, i32) {
    %c0_i32 = arith.constant 0 : i32
    %c0_i32_0 = arith.constant 0 : i32
    %c0_i32_1 = arith.constant 0 : i32
    %c0_i32_2 = arith.constant 0 : i32
    return %arg0, %c0_i32, %c0_i32_0, %c0_i32_1 : i32, i32, i32, i32
  }
  func.func @transform_1(%arg0: i32) -> (i32, i32) {
    %c0_i32 = arith.constant 0 : i32
    %c0_i32_0 = arith.constant 0 : i32
    %c0_i32_1 = arith.constant 0 : i32
    return %c0_i32, %c0_i32_0 : i32, i32
  }
  func.func @transform_2(%arg0: i32) -> (i32, i32, i32) {
    %c0_i32 = arith.constant 0 : i32
    %c0_i32_0 = arith.constant 0 : i32
    %c0_i32_1 = arith.constant 0 : i32
    return %arg0, %c0_i32, %c0_i32_0 : i32, i32, i32
  }
  func.func @transform_3(%arg0: i32) -> (i32, i32, i32) {
    %c0_i32 = arith.constant 0 : i32
    %c0_i32_0 = arith.constant 0 : i32
    %c0_i32_1 = arith.constant 0 : i32
    return %arg0, %c0_i32, %c0_i32_0 : i32, i32, i32
  }
}

module attributes {stable_mosaic.version = 11 : i64} {
  func.func @_bn_relu_kernel(%arg0: i32, %arg1: memref<512x8xbf16, #tpu.memory_space<vmem>>, %arg2: memref<1x8xf32, #tpu.memory_space<vmem>>, %arg3: memref<1x8xf32, #tpu.memory_space<vmem>>, %arg4: memref<512x8xf32, #tpu.memory_space<vmem>>) attributes {dimension_semantics = [#tpu.dimension_semantics<parallel>], iteration_bounds = array<i64: 1>, scalar_prefetch = 0 : i64, scratch_operands = 0 : i64, tpu.core_type = #tpu.core_type<tc>, window_params = [{transform_indices = @transform_0, window_bounds = array<i64: 512, 8>}, {pipeline_mode = #tpu.pipeline_mode<synchronous>, transform_indices = @transform_1, window_bounds = array<i64: 1, 8>}, {pipeline_mode = #tpu.pipeline_mode<synchronous>, transform_indices = @transform_2, window_bounds = array<i64: 1, 8>}, {transform_indices = @transform_3, window_bounds = array<i64: 512, 8>}]} {
    %c0 = arith.constant 0 : index
    %c0_0 = arith.constant 0 : index
    %0 = vector.load %arg1[%c0, %c0_0] : memref<512x8xbf16, #tpu.memory_space<vmem>>, vector<512x8xbf16>
    %1 = arith.extf %0 : vector<512x8xbf16> to vector<512x8xf32>
    %c0_1 = arith.constant 0 : index
    %c0_2 = arith.constant 0 : index
    %2 = vector.load %arg2[%c0_1, %c0_2] : memref<1x8xf32, #tpu.memory_space<vmem>>, vector<1x8xf32>
    %3 = vector.broadcast %2 : vector<1x8xf32> to vector<512x8xf32>
    %4 = arith.mulf %1, %3 : vector<512x8xf32>
    %c0_3 = arith.constant 0 : index
    %c0_4 = arith.constant 0 : index
    %5 = vector.load %arg3[%c0_3, %c0_4] : memref<1x8xf32, #tpu.memory_space<vmem>>, vector<1x8xf32>
    %6 = vector.broadcast %5 : vector<1x8xf32> to vector<512x8xf32>
    %7 = arith.addf %4, %6 : vector<512x8xf32>
    %cst = arith.constant 0.000000e+00 : f32
    %8 = vector.broadcast %cst : f32 to vector<512x8xf32>
    %9 = arith.maximumf %7, %8 : vector<512x8xf32>
    %c0_5 = arith.constant 0 : index
    %c0_6 = arith.constant 0 : index
    %10 = vector.load %arg4[%c0_5, %c0_6] : memref<512x8xf32, #tpu.memory_space<vmem>>, vector<512x8xf32>
    tpu.vector_store %arg4[%c0_5, %c0_6], %9 {strides = array<i32>} : memref<512x8xf32, #tpu.memory_space<vmem>>, vector<512x8xf32>,
    return
  }
  func.func @transform_0(%arg0: i32) -> (i32, i32) {
    %c0_i32 = arith.constant 0 : i32
    %c0_i32_0 = arith.constant 0 : i32
    return %arg0, %c0_i32 : i32, i32
  }
  func.func @transform_1(%arg0: i32) -> (i32, i32) {
    %c0_i32 = arith.constant 0 : i32
    %c0_i32_0 = arith.constant 0 : i32
    %c0_i32_1 = arith.constant 0 : i32
    return %c0_i32, %c0_i32_0 : i32, i32
  }
  func.func @transform_2(%arg0: i32) -> (i32, i32) {
    %c0_i32 = arith.constant 0 : i32
    %c0_i32_0 = arith.constant 0 : i32
    %c0_i32_1 = arith.constant 0 : i32
    return %c0_i32, %c0_i32_0 : i32, i32
  }
  func.func @transform_3(%arg0: i32) -> (i32, i32) {
    %c0_i32 = arith.constant 0 : i32
    %c0_i32_0 = arith.constant 0 : i32
    return %arg0, %c0_i32 : i32, i32
  }
}

</mosaic_0001>

<llo_original>
// kernel: conv_bn_relu_forward.3
$region0: #{conv_bn_relu_forward.3}
  #allocation0 [shape = 'u32[]', space=smem, size = 0x4, offset = 0x4, fixed_abs, tag = 'smem constant byte address 0x4 - core index']
  #allocation1 [shape = 'u32[144,128]{1,0:T(1,128)}', space=vmem, size = 0x12000, scoped, tag = 'internal scratch']
  %s0 = inlined_call_operand.vmem [shape: bf16[512,8], index: 0, kind: input, shape index: {}]
  %s1 = inlined_call_operand.vmem [shape: f32[1,8], index: 1, kind: input, shape index: {}]
  %s2 = inlined_call_operand.vmem [shape: f32[1,8], index: 2, kind: input, shape index: {}]
  %s3 = inlined_call_operand.vmem [shape: f32[512,8], index: 3, kind: output, shape index: {}]
  %s4 = sld [smem:[#allocation0]]
  $region22: #{conv_bn_relu_forward.3} parent=0
    _
  %s6 = ssub.s32 1, %s4
  %s7 = scalar_select 0, %s6, %s4
  // Predicated region
  $region2: #{conv_bn_relu_forward.3} parent=0 // pred_check
    _
  $region3: #{conv_bn_relu_forward.3} parent=0 // pred_check_branch
    %9 = sbr.rel (0) target = $region5
  $region4: #{conv_bn_relu_forward.3} parent=0 // pred_region
    _
  $region5: #{conv_bn_relu_forward.3} parent=0 // pred_fallthru
    _
  // Predicated region
  $region6: #{conv_bn_relu_forward.3} parent=0 // pred_check
    _
  $region7: #{conv_bn_relu_forward.3} parent=0 // pred_check_branch
    %11 = sbr.rel (0) target = $region9
  $region8: #{conv_bn_relu_forward.3} parent=0 // pred_region
    _
  $region9: #{conv_bn_relu_forward.3} parent=0 // pred_fallthru
    _
  // Predicated region
  $region10: #{conv_bn_relu_forward.3} parent=0 // pred_check
    _
  $region11: #{conv_bn_relu_forward.3} parent=0 // pred_check_branch
    %13 = sbr.rel (0) target = $region13
  $region12: #{conv_bn_relu_forward.3} parent=0 // pred_region
    _
  $region13: #{conv_bn_relu_forward.3} parent=0 // pred_fallthru
    _
  %v14 = vld [vmem:[%s0] sm:$0xf]
  %v15 = vld [vmem:[%s0 + $0x4] sm:$0xf]
  %v16 = vld [vmem:[%s0 + $0x8] sm:$0xf]
  %v17 = vld [vmem:[%s0 + $0xc] sm:$0xf]
  %v18 = vld [vmem:[%s0 + $0x10] sm:$0xf]
  %v19 = vld [vmem:[%s0 + $0x14] sm:$0xf]
  %v20 = vld [vmem:[%s0 + $0x18] sm:$0xf]
  %v21 = vld [vmem:[%s0 + $0x1c] sm:$0xf]
  %v22 = vld [vmem:[%s0 + $0x20] sm:$0xf]
  %v23 = vld [vmem:[%s0 + $0x24] sm:$0xf]
  %v24 = vld [vmem:[%s0 + $0x28] sm:$0xf]
  %v25 = vld [vmem:[%s0 + $0x2c] sm:$0xf]
  %v26 = vld [vmem:[%s0 + $0x30] sm:$0xf]
  %v27 = vld [vmem:[%s0 + $0x34] sm:$0xf]
  %v28 = vld [vmem:[%s0 + $0x38] sm:$0xf]
  %v29 = vld [vmem:[%s0 + $0x3c] sm:$0xf]
  %v30 = vld [vmem:[%s0 + $0x40] sm:$0xf]
  %v31 = vld [vmem:[%s0 + $0x44] sm:$0xf]
  %v32 = vld [vmem:[%s0 + $0x48] sm:$0xf]
  %v33 = vld [vmem:[%s0 + $0x4c] sm:$0xf]
  %v34 = vld [vmem:[%s0 + $0x50] sm:$0xf]
  %v35 = vld [vmem:[%s0 + $0x54] sm:$0xf]
  %v36 = vld [vmem:[%s0 + $0x58] sm:$0xf]
  %v37 = vld [vmem:[%s0 + $0x5c] sm:$0xf]
  %v38 = vld [vmem:[%s0 + $0x60] sm:$0xf]
  %v39 = vld [vmem:[%s0 + $0x64] sm:$0xf]
  %v40 = vld [vmem:[%s0 + $0x68] sm:$0xf]
  %v41 = vld [vmem:[%s0 + $0x6c] sm:$0xf]
  %v42 = vld [vmem:[%s0 + $0x70] sm:$0xf]
  %v43 = vld [vmem:[%s0 + $0x74] sm:$0xf]
  %v44 = vld [vmem:[%s0 + $0x78] sm:$0xf]
  %v45 = vld [vmem:[%s0 + $0x7c] sm:$0xf]
  %v46 = vld [vmem:[%s0 + $0x80] sm:$0xf]
  %v47 = vld [vmem:[%s0 + $0x84] sm:$0xf]
  %v48 = vld [vmem:[%s0 + $0x88] sm:$0xf]
  %v49 = vld [vmem:[%s0 + $0x8c] sm:$0xf]
  %v50 = vld [vmem:[%s0 + $0x90] sm:$0xf]
  %v51 = vld [vmem:[%s0 + $0x94] sm:$0xf]
  %v52 = vld [vmem:[%s0 + $0x98] sm:$0xf]
  %v53 = vld [vmem:[%s0 + $0x9c] sm:$0xf]
  %v54 = vld [vmem:[%s0 + $0xa0] sm:$0xf]
  %v55 = vld [vmem:[%s0 + $0xa4] sm:$0xf]
  %v56 = vld [vmem:[%s0 + $0xa8] sm:$0xf]
  %v57 = vld [vmem:[%s0 + $0xac] sm:$0xf]
  %v58 = vld [vmem:[%s0 + $0xb0] sm:$0xf]
  %v59 = vld [vmem:[%s0 + $0xb4] sm:$0xf]
  %v60 = vld [vmem:[%s0 + $0xb8] sm:$0xf]
  %v61 = vld [vmem:[%s0 + $0xbc] sm:$0xf]
  %v62 = vld [vmem:[%s0 + $0xc0] sm:$0xf]
  %v63 = vld [vmem:[%s0 + $0xc4] sm:$0xf]
  %v64 = vld [vmem:[%s0 + $0xc8] sm:$0xf]
  %v65 = vld [vmem:[%s0 + $0xcc] sm:$0xf]
  %v66 = vld [vmem:[%s0 + $0xd0] sm:$0xf]
  %v67 = vld [vmem:[%s0 + $0xd4] sm:$0xf]
  %v68 = vld [vmem:[%s0 + $0xd8] sm:$0xf]
  %v69 = vld [vmem:[%s0 + $0xdc] sm:$0xf]
  %v70 = vld [vmem:[%s0 + $0xe0] sm:$0xf]
  %v71 = vld [vmem:[%s0 + $0xe4] sm:$0xf]
  %v72 = vld [vmem:[%s0 + $0xe8] sm:$0xf]
  %v73 = vld [vmem:[%s0 + $0xec] sm:$0xf]
  %v74 = vld [vmem:[%s0 + $0xf0] sm:$0xf]
  %v75 = vld [vmem:[%s0 + $0xf4] sm:$0xf]
  %v76 = vld [vmem:[%s0 + $0xf8] sm:$0xf]
  %v77 = vld [vmem:[%s0 + $0xfc] sm:$0xf]
  %v78 = vunpack.c.l.bf16 %v14
  %v79 = vunpack.c.l.bf16 %v15
  %v80 = vunpack.c.l.bf16 %v16
  %v81 = vunpack.c.l.bf16 %v17
  %v82 = vunpack.c.l.bf16 %v18
  %v83 = vunpack.c.l.bf16 %v19
  %v84 = vunpack.c.l.bf16 %v20
  %v85 = vunpack.c.l.bf16 %v21
  %v86 = vunpack.c.l.bf16 %v22
  %v87 = vunpack.c.l.bf16 %v23
  %v88 = vunpack.c.l.bf16 %v24
  %v89 = vunpack.c.l.bf16 %v25
  %v90 = vunpack.c.l.bf16 %v26
  %v91 = vunpack.c.l.bf16 %v27
  %v92 = vunpack.c.l.bf16 %v28
  %v93 = vunpack.c.l.bf16 %v29
  %v94 = vunpack.c.l.bf16 %v30
  %v95 = vunpack.c.l.bf16 %v31
  %v96 = vunpack.c.l.bf16 %v32
  %v97 = vunpack.c.l.bf16 %v33
  %v98 = vunpack.c.l.bf16 %v34
  %v99 = vunpack.c.l.bf16 %v35
  %v100 = vunpack.c.l.bf16 %v36
  %v101 = vunpack.c.l.bf16 %v37
  %v102 = vunpack.c.l.bf16 %v38
  %v103 = vunpack.c.l.bf16 %v39
  %v104 = vunpack.c.l.bf16 %v40
  %v105 = vunpack.c.l.bf16 %v41
  %v106 = vunpack.c.l.bf16 %v42
  %v107 = vunpack.c.l.bf16 %v43
  %v108 = vunpack.c.l.bf16 %v44
  %v109 = vunpack.c.l.bf16 %v45
  %v110 = vunpack.c.l.bf16 %v46
  %v111 = vunpack.c.l.bf16 %v47
  %v112 = vunpack.c.l.bf16 %v48
  %v113 = vunpack.c.l.bf16 %v49
  %v114 = vunpack.c.l.bf16 %v50
  %v115 = vunpack.c.l.bf16 %v51
  %v116 = vunpack.c.l.bf16 %v52
  %v117 = vunpack.c.l.bf16 %v53
  %v118 = vunpack.c.l.bf16 %v54
  %v119 = vunpack.c.l.bf16 %v55
  %v120 = vunpack.c.l.bf16 %v56
  %v121 = vunpack.c.l.bf16 %v57
  %v122 = vunpack.c.l.bf16 %v58
  %v123 = vunpack.c.l.bf16 %v59
  %v124 = vunpack.c.l.bf16 %v60
  %v125 = vunpack.c.l.bf16 %v61
  %v126 = vunpack.c.l.bf16 %v62
  %v127 = vunpack.c.l.bf16 %v63
  %v128 = vunpack.c.l.bf16 %v64
  %v129 = vunpack.c.l.bf16 %v65
  %v130 = vunpack.c.l.bf16 %v66
  %v131 = vunpack.c.l.bf16 %v67
  %v132 = vunpack.c.l.bf16 %v68
  %v133 = vunpack.c.l.bf16 %v69
  %v134 = vunpack.c.l.bf16 %v70
  %v135 = vunpack.c.l.bf16 %v71
  %v136 = vunpack.c.l.bf16 %v72
  %v137 = vunpack.c.l.bf16 %v73
  %v138 = vunpack.c.l.bf16 %v74
  %v139 = vunpack.c.l.bf16 %v75
  %v140 = vunpack.c.l.bf16 %v76
  %v141 = vunpack.c.l.bf16 %v77
  %v142 = vld [vmem:[%s1] sm:$0x1]
  %v144 = vlaneseq
  %v145 = vshrl.u32 %v144, 7
  %v146 = vsub.s32 0, %v145
  %v147 = vrot.slane %v142, %v146
  %v149 = vmul.f32 %v78, %v147
  %v150 = vmul.f32 %v79, %v147
  %v151 = vmul.f32 %v80, %v147
  %v152 = vmul.f32 %v81, %v147
  %v153 = vmul.f32 %v82, %v147
  %v154 = vmul.f32 %v83, %v147
  %v155 = vmul.f32 %v84, %v147
  %v156 = vmul.f32 %v85, %v147
  %v157 = vmul.f32 %v86, %v147
  %v158 = vmul.f32 %v87, %v147
  %v159 = vmul.f32 %v88, %v147
  %v160 = vmul.f32 %v89, %v147
  %v161 = vmul.f32 %v90, %v147
  %v162 = vmul.f32 %v91, %v147
  %v163 = vmul.f32 %v92, %v147
  %v164 = vmul.f32 %v93, %v147
  %v165 = vmul.f32 %v94, %v147
  %v166 = vmul.f32 %v95, %v147
  %v167 = vmul.f32 %v96, %v147
  %v168 = vmul.f32 %v97, %v147
  %v169 = vmul.f32 %v98, %v147
  %v170 = vmul.f32 %v99, %v147
  %v171 = vmul.f32 %v100, %v147
  %v172 = vmul.f32 %v101, %v147
  %v173 = vmul.f32 %v102, %v147
  %v174 = vmul.f32 %v103, %v147
  %v175 = vmul.f32 %v104, %v147
  %v176 = vmul.f32 %v105, %v147
  %v177 = vmul.f32 %v106, %v147
  %v178 = vmul.f32 %v107, %v147
  %v179 = vmul.f32 %v108, %v147
  %v180 = vmul.f32 %v109, %v147
  %v181 = vmul.f32 %v110, %v147
  %v182 = vmul.f32 %v111, %v147
  %v183 = vmul.f32 %v112, %v147
  %v184 = vmul.f32 %v113, %v147
  %v185 = vmul.f32 %v114, %v147
  %v186 = vmul.f32 %v115, %v147
  %v187 = vmul.f32 %v116, %v147
  %v188 = vmul.f32 %v117, %v147
  %v189 = vmul.f32 %v118, %v147
  %v190 = vmul.f32 %v119, %v147
  %v191 = vmul.f32 %v120, %v147
  %v192 = vmul.f32 %v121, %v147
  %v193 = vmul.f32 %v122, %v147
  %v194 = vmul.f32 %v123, %v147
  %v195 = vmul.f32 %v124, %v147
  %v196 = vmul.f32 %v125, %v147
  %v197 = vmul.f32 %v126, %v147
  %v198 = vmul.f32 %v127, %v147
  %v199 = vmul.f32 %v128, %v147
  %v200 = vmul.f32 %v129, %v147
  %v201 = vmul.f32 %v130, %v147
  %v202 = vmul.f32 %v131, %v147
  %v203 = vmul.f32 %v132, %v147
  %v204 = vmul.f32 %v133, %v147
  %v205 = vmul.f32 %v134, %v147
  %v206 = vmul.f32 %v135, %v147
  %v207 = vmul.f32 %v136, %v147
  %v208 = vmul.f32 %v137, %v147
  %v209 = vmul.f32 %v138, %v147
  %v210 = vmul.f32 %v139, %v147
  %v211 = vmul.f32 %v140, %v147
  %v212 = vmul.f32 %v141, %v147
  %v213 = vld [vmem:[%s2] sm:$0x1]
  %v215 = vlaneseq
  %v216 = vshrl.u32 %v215, 7
  %v217 = vsub.s32 0, %v216
  %v218 = vrot.slane %v213, %v217
  %v220 = vadd.f32 %v149, %v218
  %v221 = vadd.f32 %v150, %v218
  %v222 = vadd.f32 %v151, %v218
  %v223 = vadd.f32 %v152, %v218
  %v224 = vadd.f32 %v153, %v218
  %v225 = vadd.f32 %v154, %v218
  %v226 = vadd.f32 %v155, %v218
  %v227 = vadd.f32 %v156, %v218
  %v228 = vadd.f32 %v157, %v218
  %v229 = vadd.f32 %v158, %v218
  %v230 = vadd.f32 %v159, %v218
  %v231 = vadd.f32 %v160, %v218
  %v232 = vadd.f32 %v161, %v218
  %v233 = vadd.f32 %v162, %v218
  %v234 = vadd.f32 %v163, %v218
  %v235 = vadd.f32 %v164, %v218
  %v236 = vadd.f32 %v165, %v218
  %v237 = vadd.f32 %v166, %v218
  %v238 = vadd.f32 %v167, %v218
  %v239 = vadd.f32 %v168, %v218
  %v240 = vadd.f32 %v169, %v218
  %v241 = vadd.f32 %v170, %v218
  %v242 = vadd.f32 %v171, %v218
  %v243 = vadd.f32 %v172, %v218
  %v244 = vadd.f32 %v173, %v218
  %v245 = vadd.f32 %v174, %v218
  %v246 = vadd.f32 %v175, %v218
  %v247 = vadd.f32 %v176, %v218
  %v248 = vadd.f32 %v177, %v218
  %v249 = vadd.f32 %v178, %v218
  %v250 = vadd.f32 %v179, %v218
  %v251 = vadd.f32 %v180, %v218
  %v252 = vadd.f32 %v181, %v218
  %v253 = vadd.f32 %v182, %v218
  %v254 = vadd.f32 %v183, %v218
  %v255 = vadd.f32 %v184, %v218
  %v256 = vadd.f32 %v185, %v218
  %v257 = vadd.f32 %v186, %v218
  %v258 = vadd.f32 %v187, %v218
  %v259 = vadd.f32 %v188, %v218
  %v260 = vadd.f32 %v189, %v218
  %v261 = vadd.f32 %v190, %v218
  %v262 = vadd.f32 %v191, %v218
  %v263 = vadd.f32 %v192, %v218
  %v264 = vadd.f32 %v193, %v218
  %v265 = vadd.f32 %v194, %v218
  %v266 = vadd.f32 %v195, %v218
  %v267 = vadd.f32 %v196, %v218
  %v268 = vadd.f32 %v197, %v218
  %v269 = vadd.f32 %v198, %v218
  %v270 = vadd.f32 %v199, %v218
  %v271 = vadd.f32 %v200, %v218
  %v272 = vadd.f32 %v201, %v218
  %v273 = vadd.f32 %v202, %v218
  %v274 = vadd.f32 %v203, %v218
  %v275 = vadd.f32 %v204, %v218
  %v276 = vadd.f32 %v205, %v218
  %v277 = vadd.f32 %v206, %v218
  %v278 = vadd.f32 %v207, %v218
  %v279 = vadd.f32 %v208, %v218
  %v280 = vadd.f32 %v209, %v218
  %v281 = vadd.f32 %v210, %v218
  %v282 = vadd.f32 %v211, %v218
  %v283 = vadd.f32 %v212, %v218
  %v284 = vmax.f32 %v220, 0.0
  %v285 = vmax.f32 %v221, 0.0
  %v286 = vmax.f32 %v222, 0.0
  %v287 = vmax.f32 %v223, 0.0
  %v288 = vmax.f32 %v224, 0.0
  %v289 = vmax.f32 %v225, 0.0
  %v290 = vmax.f32 %v226, 0.0
  %v291 = vmax.f32 %v227, 0.0
  %v292 = vmax.f32 %v228, 0.0
  %v293 = vmax.f32 %v229, 0.0
  %v294 = vmax.f32 %v230, 0.0
  %v295 = vmax.f32 %v231, 0.0
  %v296 = vmax.f32 %v232, 0.0
  %v297 = vmax.f32 %v233, 0.0
  %v298 = vmax.f32 %v234, 0.0
  %v299 = vmax.f32 %v235, 0.0
  %v300 = vmax.f32 %v236, 0.0
  %v301 = vmax.f32 %v237, 0.0
  %v302 = vmax.f32 %v238, 0.0
  %v303 = vmax.f32 %v239, 0.0
  %v304 = vmax.f32 %v240, 0.0
  %v305 = vmax.f32 %v241, 0.0
  %v306 = vmax.f32 %v242, 0.0
  %v307 = vmax.f32 %v243, 0.0
  %v308 = vmax.f32 %v244, 0.0
  %v309 = vmax.f32 %v245, 0.0
  %v310 = vmax.f32 %v246, 0.0
  %v311 = vmax.f32 %v247, 0.0
  %v312 = vmax.f32 %v248, 0.0
  %v313 = vmax.f32 %v249, 0.0
  %v314 = vmax.f32 %v250, 0.0
  %v315 = vmax.f32 %v251, 0.0
  %v316 = vmax.f32 %v252, 0.0
  %v317 = vmax.f32 %v253, 0.0
  %v318 = vmax.f32 %v254, 0.0
  %v319 = vmax.f32 %v255, 0.0
  %v320 = vmax.f32 %v256, 0.0
  %v321 = vmax.f32 %v257, 0.0
  %v322 = vmax.f32 %v258, 0.0
  %v323 = vmax.f32 %v259, 0.0
  %v324 = vmax.f32 %v260, 0.0
  %v325 = vmax.f32 %v261, 0.0
  %v326 = vmax.f32 %v262, 0.0
  %v327 = vmax.f32 %v263, 0.0
  %v328 = vmax.f32 %v264, 0.0
  %v329 = vmax.f32 %v265, 0.0
  %v330 = vmax.f32 %v266, 0.0
  %v331 = vmax.f32 %v267, 0.0
  %v332 = vmax.f32 %v268, 0.0
  %v333 = vmax.f32 %v269, 0.0
  %v334 = vmax.f32 %v270, 0.0
  %v335 = vmax.f32 %v271, 0.0
  %v336 = vmax.f32 %v272, 0.0
  %v337 = vmax.f32 %v273, 0.0
  %v338 = vmax.f32 %v274, 0.0
  %v339 = vmax.f32 %v275, 0.0
  %v340 = vmax.f32 %v276, 0.0
  %v341 = vmax.f32 %v277, 0.0
  %v342 = vmax.f32 %v278, 0.0
  %v343 = vmax.f32 %v279, 0.0
  %v344 = vmax.f32 %v280, 0.0
  %v345 = vmax.f32 %v281, 0.0
  %v346 = vmax.f32 %v282, 0.0
  %v347 = vmax.f32 %v283, 0.0
  %vm348 = vcmask 64512
  %349 = vst.msk [vmem:[%s3] sm:$0xff] %vm348, %v284
  %350 = vst.msk [vmem:[%s3 + $0x8] sm:$0xff] %vm348, %v285
  %351 = vst.msk [vmem:[%s3 + $0x10] sm:$0xff] %vm348, %v286
  %352 = vst.msk [vmem:[%s3 + $0x18] sm:$0xff] %vm348, %v287
  %353 = vst.msk [vmem:[%s3 + $0x20] sm:$0xff] %vm348, %v288
  %354 = vst.msk [vmem:[%s3 + $0x28] sm:$0xff] %vm348, %v289
  %355 = vst.msk [vmem:[%s3 + $0x30] sm:$0xff] %vm348, %v290
  %356 = vst.msk [vmem:[%s3 + $0x38] sm:$0xff] %vm348, %v291
  %357 = vst.msk [vmem:[%s3 + $0x40] sm:$0xff] %vm348, %v292
  %358 = vst.msk [vmem:[%s3 + $0x48] sm:$0xff] %vm348, %v293
  %359 = vst.msk [vmem:[%s3 + $0x50] sm:$0xff] %vm348, %v294
  %360 = vst.msk [vmem:[%s3 + $0x58] sm:$0xff] %vm348, %v295
  %361 = vst.msk [vmem:[%s3 + $0x60] sm:$0xff] %vm348, %v296
  %362 = vst.msk [vmem:[%s3 + $0x68] sm:$0xff] %vm348, %v297
  %363 = vst.msk [vmem:[%s3 + $0x70] sm:$0xff] %vm348, %v298
  %364 = vst.msk [vmem:[%s3 + $0x78] sm:$0xff] %vm348, %v299
  %365 = vst.msk [vmem:[%s3 + $0x80] sm:$0xff] %vm348, %v300
  %366 = vst.msk [vmem:[%s3 + $0x88] sm:$0xff] %vm348, %v301
  %367 = vst.msk [vmem:[%s3 + $0x90] sm:$0xff] %vm348, %v302
  %368 = vst.msk [vmem:[%s3 + $0x98] sm:$0xff] %vm348, %v303
  %369 = vst.msk [vmem:[%s3 + $0xa0] sm:$0xff] %vm348, %v304
  %370 = vst.msk [vmem:[%s3 + $0xa8] sm:$0xff] %vm348, %v305
  %371 = vst.msk [vmem:[%s3 + $0xb0] sm:$0xff] %vm348, %v306
  %372 = vst.msk [vmem:[%s3 + $0xb8] sm:$0xff] %vm348, %v307
  %373 = vst.msk [vmem:[%s3 + $0xc0] sm:$0xff] %vm348, %v308
  %374 = vst.msk [vmem:[%s3 + $0xc8] sm:$0xff] %vm348, %v309
  %375 = vst.msk [vmem:[%s3 + $0xd0] sm:$0xff] %vm348, %v310
  %376 = vst.msk [vmem:[%s3 + $0xd8] sm:$0xff] %vm348, %v311
  %377 = vst.msk [vmem:[%s3 + $0xe0] sm:$0xff] %vm348, %v312
  %378 = vst.msk [vmem:[%s3 + $0xe8] sm:$0xff] %vm348, %v313
  %379 = vst.msk [vmem:[%s3 + $0xf0] sm:$0xff] %vm348, %v314
  %380 = vst.msk [vmem:[%s3 + $0xf8] sm:$0xff] %vm348, %v315
  %381 = vst.msk [vmem:[%s3 + $0x100] sm:$0xff] %vm348, %v316
  %382 = vst.msk [vmem:[%s3 + $0x108] sm:$0xff] %vm348, %v317
  %383 = vst.msk [vmem:[%s3 + $0x110] sm:$0xff] %vm348, %v318
  %384 = vst.msk [vmem:[%s3 + $0x118] sm:$0xff] %vm348, %v319
  %385 = vst.msk [vmem:[%s3 + $0x120] sm:$0xff] %vm348, %v320
  %386 = vst.msk [vmem:[%s3 + $0x128] sm:$0xff] %vm348, %v321
  %387 = vst.msk [vmem:[%s3 + $0x130] sm:$0xff] %vm348, %v322
  %388 = vst.msk [vmem:[%s3 + $0x138] sm:$0xff] %vm348, %v323
  %389 = vst.msk [vmem:[%s3 + $0x140] sm:$0xff] %vm348, %v324
  %390 = vst.msk [vmem:[%s3 + $0x148] sm:$0xff] %vm348, %v325
  %391 = vst.msk [vmem:[%s3 + $0x150] sm:$0xff] %vm348, %v326
  %392 = vst.msk [vmem:[%s3 + $0x158] sm:$0xff] %vm348, %v327
  %393 = vst.msk [vmem:[%s3 + $0x160] sm:$0xff] %vm348, %v328
  %394 = vst.msk [vmem:[%s3 + $0x168] sm:$0xff] %vm348, %v329
  %395 = vst.msk [vmem:[%s3 + $0x170] sm:$0xff] %vm348, %v330
  %396 = vst.msk [vmem:[%s3 + $0x178] sm:$0xff] %vm348, %v331
  %397 = vst.msk [vmem:[%s3 + $0x180] sm:$0xff] %vm348, %v332
  %398 = vst.msk [vmem:[%s3 + $0x188] sm:$0xff] %vm348, %v333
  %399 = vst.msk [vmem:[%s3 + $0x190] sm:$0xff] %vm348, %v334
  %400 = vst.msk [vmem:[%s3 + $0x198] sm:$0xff] %vm348, %v335
  %401 = vst.msk [vmem:[%s3 + $0x1a0] sm:$0xff] %vm348, %v336
  %402 = vst.msk [vmem:[%s3 + $0x1a8] sm:$0xff] %vm348, %v337
  %403 = vst.msk [vmem:[%s3 + $0x1b0] sm:$0xff] %vm348, %v338
  %404 = vst.msk [vmem:[%s3 + $0x1b8] sm:$0xff] %vm348, %v339
  %405 = vst.msk [vmem:[%s3 + $0x1c0] sm:$0xff] %vm348, %v340
  %406 = vst.msk [vmem:[%s3 + $0x1c8] sm:$0xff] %vm348, %v341
  %407 = vst.msk [vmem:[%s3 + $0x1d0] sm:$0xff] %vm348, %v342
  %408 = vst.msk [vmem:[%s3 + $0x1d8] sm:$0xff] %vm348, %v343
  %409 = vst.msk [vmem:[%s3 + $0x1e0] sm:$0xff] %vm348, %v344
  %410 = vst.msk [vmem:[%s3 + $0x1e8] sm:$0xff] %vm348, %v345
  %411 = vst.msk [vmem:[%s3 + $0x1f0] sm:$0xff] %vm348, %v346
  %412 = vst.msk [vmem:[%s3 + $0x1f8] sm:$0xff] %vm348, %v347
  // Predicated region
  $region14: #{conv_bn_relu_forward.3} parent=0 // pred_check
    _
  $region15: #{conv_bn_relu_forward.3} parent=0 // pred_check_branch
    %414 = sbr.rel (0) target = $region17
  $region16: #{conv_bn_relu_forward.3} parent=0 // pred_region
    _
  $region17: #{conv_bn_relu_forward.3} parent=0 // pred_fallthru
    _
  // Predicated region
  $region18: #{conv_bn_relu_forward.3} parent=0 // pred_check
    _
  $region19: #{conv_bn_relu_forward.3} parent=0 // pred_check_branch
    %416 = sbr.rel (0) target = $region21
  $region20: #{conv_bn_relu_forward.3} parent=0 // pred_region
    _
  $region21: #{conv_bn_relu_forward.3} parent=0 // pred_fallthru
    _

// kernel: conv_bn_relu_forward.2
$region0: #{conv_bn_relu_forward.2}
  #allocation0 [shape = 'u32[]', space=smem, size = 0x4, offset = 0x4, fixed_abs, tag = 'smem constant byte address 0x4 - core index']
  #allocation1 [shape = 'u32[144,128]{1,0:T(1,128)}', space=vmem, size = 0x12000, scoped, tag = 'internal scratch']
  #allocation2 [shape = 'bf16[256,72]{1,0:T(8,128)(2,1)}', space=vmem, size = 0x10000, scoped, tag = 'scratch operand']
  %s0 = inlined_call_operand.vmem [shape: bf16[2,18,18,8], index: 0, kind: input, shape index: {}]
  %s1 = inlined_call_operand.vmem [shape: bf16[72,128], index: 1, kind: input, shape index: {}]
  %s2 = inlined_call_operand.vmem [shape: bf16[2,256,8], index: 2, kind: output, shape index: {0}]
  %s3 = inlined_call_operand.vmem [shape: f32[2,2,128], index: 3, kind: output, shape index: {1}]
  %4 = xla_tuple %s2, %s3
  %s5 = sld [smem:[#allocation0]]
  $region49: #{conv_bn_relu_forward.2} parent=0
    _
  %s7 = ssub.s32 1, %s5
  %s8 = scalar_select 0, %s7, %s5
  loop: start=0, step=1, limit=4
  $region2: #{conv_bn_relu_forward.2} parent=0 // loop_pre_header
    _
  $region3: #{conv_bn_relu_forward.2} parent=0 // loop_header
    %s10 = sphi 0, %s14
    %p11 = scmp.ge.s32.totalorder %s10, 4
    %s20 = sphi 0, %s22
    %s23 = sphi 0, %s20
    %s24 = sphi 0, %s23
    %s40 = sphi 0, %s24
    %s44 = sphi 0, %s44
    %s46 = sphi 0, %s44
    %s47 = sphi 0, %s46
    %s61 = sphi 0, %s47
    %s67 = sphi 0, %s69
    %s70 = sphi 0, %s67
    %s71 = sphi 0, %s70
    %s87 = sphi 0, %s71
    %s93 = sphi 0, %s95
    %s96 = sphi 0, %s93
    %s97 = sphi 0, %s96
    %s113 = sphi 0, %s97
  $region4: #{conv_bn_relu_forward.2} parent=0 // loop_header_branch
    %13 = sbr.rel (%p11) target = $region8
  $region5: #{conv_bn_relu_forward.2} parent=0 // loop_body
    %s15 = ssub.s32 %s10, 1
    %s16 = ssub.s32 %s10, 2
    %s17 = sadd.s32 %s10, 1
    %s18 = ssub.s32 %s10, %s17
    %p19 = scmp.eq.s32.totalorder %s18, 0
    %s21 = sadd.s32 %s20, 1
    %s22 = scalar_select %p19, %s20, %s21
    %p25 = pneg %p19
    %p26 = scmp.eq.s32.totalorder %s10, 1
    %p27 = por %p25, %p26
    %p28 = scmp.ne.s32.totalorder %s20, %s23
    %p29 = scmp.eq.s32.totalorder %s10, 0
    %p30 = por %p28, %p29
    %p31 = scmp.ne.s32.totalorder %s20, %s23
    %p32 = scmp.eq.s32.totalorder %s15, 1
    %p33 = por %p31, %p32
    %p34 = scmp.ne.s32.totalorder %s23, %s24
    %p35 = scmp.eq.s32.totalorder %s15, 0
    %p36 = por %p34, %p35
    %p37 = scmp.ne.s32.totalorder %s23, %s24
    %p38 = scmp.eq.s32.totalorder %s16, 1
    %p39 = por %p37, %p38
    %p41 = scmp.ne.s32.totalorder %s24, %s40
    %p42 = scmp.eq.s32.totalorder %s16, 0
    %p43 = por %p41, %p42
    %s45 = sadd.s32 %s44, 1
    %p48 = scmp.eq.s32.totalorder %s10, 1
    %p49 = scmp.ne.s32.totalorder %s44, %s46
    %p50 = scmp.eq.s32.totalorder %s10, 0
    %p51 = por %p49, %p50
    %p52 = scmp.ne.s32.totalorder %s44, %s46
    %p53 = scmp.eq.s32.totalorder %s15, 1
    %p54 = por %p52, %p53
    %p55 = scmp.ne.s32.totalorder %s46, %s47
    %p56 = scmp.eq.s32.totalorder %s15, 0
    %p57 = por %p55, %p56
    %p58 = scmp.ne.s32.totalorder %s46, %s47
    %p59 = scmp.eq.s32.totalorder %s16, 1
    %p60 = por %p58, %p59
    %p62 = scmp.ne.s32.totalorder %s47, %s61
    %p63 = scmp.eq.s32.totalorder %s16, 0
    %p64 = por %p62, %p63
    %s65 = ssub.s32 %s10, %s17
    %p66 = scmp.eq.s32.totalorder %s65, 0
    %s68 = sadd.s32 %s67, 1
    %s69 = scalar_select %p66, %s67, %s68
    %p72 = pneg %p66
    %p73 = scmp.eq.s32.totalorder %s10, 1
    %p74 = por %p72, %p73
    %p75 = scmp.ne.s32.totalorder %s67, %s70
    %p76 = scmp.eq.s32.totalorder %s10, 0
    %p77 = por %p75, %p76
    %p78 = scmp.ne.s32.totalorder %s67, %s70
    %p79 = scmp.eq.s32.totalorder %s15, 1
    %p80 = por %p78, %p79
    %p81 = scmp.ne.s32.totalorder %s70, %s71
    %p82 = scmp.eq.s32.totalorder %s15, 0
    %p83 = por %p81, %p82
    %p84 = scmp.ne.s32.totalorder %s70, %s71
    %p85 = scmp.eq.s32.totalorder %s16, 1
    %p86 = por %p84, %p85
    %p88 = scmp.ne.s32.totalorder %s71, %s87
    %p89 = scmp.eq.s32.totalorder %s16, 0
    %p90 = por %p88, %p89
    %s91 = ssub.s32 %s10, %s17
    %p92 = scmp.eq.s32.totalorder %s91, 0
    %s94 = sadd.s32 %s93, 1
    %s95 = scalar_select %p92, %s93, %s94
    %p98 = pneg %p92
    %p99 = scmp.eq.s32.totalorder %s10, 1
    %p100 = por %p98, %p99
    %p101 = scmp.ne.s32.totalorder %s93, %s96
    %p102 = scmp.eq.s32.totalorder %s10, 0
    %p103 = por %p101, %p102
    %p104 = scmp.ne.s32.totalorder %s93, %s96
    %p105 = scmp.eq.s32.totalorder %s15, 1
    %p106 = por %p104, %p105
    %p107 = scmp.ne.s32.totalorder %s96, %s97
    %p108 = scmp.eq.s32.totalorder %s15, 0
    %p109 = por %p107, %p108
    %p110 = scmp.ne.s32.totalorder %s96, %s97
    %p111 = scmp.eq.s32.totalorder %s16, 1
    %p112 = por %p110, %p111
    %p114 = scmp.ne.s32.totalorder %s97, %s113
    %p115 = scmp.eq.s32.totalorder %s16, 0
    %p116 = por %p114, %p115
    %p117 = scmp.le.s32.totalorder 1, %s10
    %p118 = scmp.lt.s32.totalorder %s10, 3
    %p119 = pnand %p117, %p118
    %p120 = pneg %p119
    // Predicated region
    $region9: #{conv_bn_relu_forward.2} parent=5 // pred_check
      _
    $region10: #{conv_bn_relu_forward.2} parent=5 // pred_check_branch
      %122 = sbr.rel (%p119) target = $region12
    $region11: #{conv_bn_relu_forward.2} parent=5 // pred_region
      %s123 = ssub.s32 %s10, 1
      // Predicated region
      $region13: #{conv_bn_relu_forward.2} parent=11 // pred_check
        %p124 = pneg %p57
      $region14: #{conv_bn_relu_forward.2} parent=11 // pred_check_branch
        %126 = sbr.rel (%p124) target = $region16
      $region15: #{conv_bn_relu_forward.2} parent=11 // pred_region
        _
      $region16: #{conv_bn_relu_forward.2} parent=11 // pred_fallthru
        _
    $region12: #{conv_bn_relu_forward.2} parent=5 // pred_fallthru
      _
    %p127 = scmp.lt.s32.totalorder %s10, 2
    // Predicated region
    $region17: #{conv_bn_relu_forward.2} parent=5 // pred_check
      %p128 = pneg %p127
    $region18: #{conv_bn_relu_forward.2} parent=5 // pred_check_branch
      %130 = sbr.rel (%p128) target = $region20
    $region19: #{conv_bn_relu_forward.2} parent=5 // pred_region
      // Predicated region
      $region21: #{conv_bn_relu_forward.2} parent=19 // pred_check
        %p131 = pneg %p30
      $region22: #{conv_bn_relu_forward.2} parent=19 // pred_check_branch
        %133 = sbr.rel (%p131) target = $region24
      $region23: #{conv_bn_relu_forward.2} parent=19 // pred_region
        %p134 = scmp.lt.s32.totalorder %s10, 1
        %s135 = scalar_select %p134, %s10, 1
        %s136 = smul.addr %s135, 54
        %s137 = smul.addr %s136, 4
        %s138 = scalar_lea.vmem %s0, %s137
      $region24: #{conv_bn_relu_forward.2} parent=19 // pred_fallthru
        _
    $region20: #{conv_bn_relu_forward.2} parent=5 // pred_fallthru
      _
    %p139 = scmp.le.s32.totalorder 1, %s10
    %p140 = scmp.lt.s32.totalorder %s10, 3
    %p141 = pnand %p139, %p140
    %p142 = pneg %p141
    // Predicated region
    $region25: #{conv_bn_relu_forward.2} parent=5 // pred_check
      _
    $region26: #{conv_bn_relu_forward.2} parent=5 // pred_check_branch
      %144 = sbr.rel (%p141) target = $region28
    $region27: #{conv_bn_relu_forward.2} parent=5 // pred_region
      %s145 = ssub.s32 %s10, 1
      %p146 = scmp.lt.s32.totalorder %s15, 1
      %s147 = scalar_select %p146, %s15, 1
      %s148 = smul.addr %s147, 54
      %s149 = smul.addr %s148, 4
      %s150 = scalar_lea.vmem %s0, %s149
      %p151 = pneg %p36
      %p152 = pneg %p33
      %p153 = pneg %p57
      %p154 = pneg %p54
      %p155 = pneg %p83
      %p156 = pneg %p80
      %p157 = scmp.lt.s32.totalorder %s15, 1
      %s158 = scalar_select %p157, %s15, 1
      %s159 = smul.addr %s158, 32
      %s160 = smul.addr %s159, 4
      %s161 = scalar_lea.vmem %s2, %s160
      %p162 = pneg %p109
      %p163 = pneg %p106
      %p164 = scmp.lt.s32.totalorder %s15, 1
      %s165 = scalar_select %p164, %s15, 1
      %s166 = smul.addr %s165, 2
      %s167 = scalar_lea.vmem %s3, %s166
      %p168 = scmp.lt.s32.totalorder %s15, 1
      %s169 = scalar_select %p168, %s15, 1
      %s170 = smul.addr %s169, 54
      %s171 = smul.addr %s170, 4
      %s172 = scalar_lea.vmem %s0, %s171
      %p173 = scmp.lt.s32.totalorder %s15, 1
      %s174 = scalar_select %p173, %s15, 1
      %s175 = smul.addr %s174, 32
      %s176 = smul.addr %s175, 4
      %s177 = scalar_lea.vmem %s2, %s176
      %p178 = scmp.lt.s32.totalorder %s15, 1
      %s179 = scalar_select %p178, %s15, 1
      %s180 = smul.addr %s179, 2
      %s181 = scalar_lea.vmem %s3, %s180
      %v183 = vld [vmem:[%s172] sm:$0xf]
      %v184 = vld [vmem:[%s172 + $0x4] sm:$0xf]
      %v185 = vld [vmem:[%s172 + $0xc] sm:$0xf]
      %v186 = vld [vmem:[%s172 + $0x10] sm:$0xf]
      %v187 = vld [vmem:[%s172 + $0x18] sm:$0xf]
      %v188 = vld [vmem:[%s172 + $0x1c] sm:$0xf]
      %v189 = vld [vmem:[%s172 + $0x24] sm:$0xf]
      %v190 = vld [vmem:[%s172 + $0x28] sm:$0xf]
      %v191 = vld [vmem:[%s172 + $0x30] sm:$0xf]
      %v192 = vld [vmem:[%s172 + $0x34] sm:$0xf]
      %v193 = vld [vmem:[%s172 + $0x3c] sm:$0xf]
      %v194 = vld [vmem:[%s172 + $0x40] sm:$0xf]
      %v195 = vld [vmem:[%s172 + $0x48] sm:$0xf]
      %v196 = vld [vmem:[%s172 + $0x4c] sm:$0xf]
      %v197 = vld [vmem:[%s172 + $0x54] sm:$0xf]
      %v198 = vld [vmem:[%s172 + $0x58] sm:$0xf]
      %v199 = vld [vmem:[%s172 + $0x60] sm:$0xf]
      %v200 = vld [vmem:[%s172 + $0x64] sm:$0xf]
      %v201 = vld [vmem:[%s172 + $0x6c] sm:$0xf]
      %v202 = vld [vmem:[%s172 + $0x70] sm:$0xf]
      %v203 = vld [vmem:[%s172 + $0x78] sm:$0xf]
      %v204 = vld [vmem:[%s172 + $0x7c] sm:$0xf]
      %v205 = vld [vmem:[%s172 + $0x84] sm:$0xf]
      %v206 = vld [vmem:[%s172 + $0x88] sm:$0xf]
      %v207 = vld [vmem:[%s172 + $0x90] sm:$0xf]
      %v208 = vld [vmem:[%s172 + $0x94] sm:$0xf]
      %v209 = vld [vmem:[%s172 + $0x9c] sm:$0xf]
      %v210 = vld [vmem:[%s172 + $0xa0] sm:$0xf]
      %v211 = vld [vmem:[%s172 + $0xa8] sm:$0xf]
      %v212 = vld [vmem:[%s172 + $0xac] sm:$0xf]
      %v213 = vld [vmem:[%s172 + $0xb4] sm:$0xf]
      %v214 = vld [vmem:[%s172 + $0xb8] sm:$0xf]
      %vm215 = vcmask 60416
      %216 = vst.msk [vmem:[#allocation2] sm:$0xf] %vm215, %v183
      %217 = vst.msk [vmem:[#allocation2 + $0x4] sm:$0xf] %vm215, %v184
      %218 = vst.msk [vmem:[#allocation2 + $0x8] sm:$0xf] %vm215, %v185
      %219 = vst.msk [vmem:[#allocation2 + $0xc] sm:$0xf] %vm215, %v186
      %220 = vst.msk [vmem:[#allocation2 + $0x10] sm:$0xf] %vm215, %v187
      %221 = vst.msk [vmem:[#allocation2 + $0x14] sm:$0xf] %vm215, %v188
      %222 = vst.msk [vmem:[#allocation2 + $0x18] sm:$0xf] %vm215, %v189
      %223 = vst.msk [vmem:[#allocation2 + $0x1c] sm:$0xf] %vm215, %v190
      %224 = vst.msk [vmem:[#allocation2 + $0x20] sm:$0xf] %vm215, %v191
      %225 = vst.msk [vmem:[#allocation2 + $0x24] sm:$0xf] %vm215, %v192
      %226 = vst.msk [vmem:[#allocation2 + $0x28] sm:$0xf] %vm215, %v193
      %227 = vst.msk [vmem:[#allocation2 + $0x2c] sm:$0xf] %vm215, %v194
      %228 = vst.msk [vmem:[#allocation2 + $0x30] sm:$0xf] %vm215, %v195
      %229 = vst.msk [vmem:[#allocation2 + $0x34] sm:$0xf] %vm215, %v196
      %230 = vst.msk [vmem:[#allocation2 + $0x38] sm:$0xf] %vm215, %v197
      %231 = vst.msk [vmem:[#allocation2 + $0x3c] sm:$0xf] %vm215, %v198
      %232 = vst.msk [vmem:[#allocation2 + $0x40] sm:$0xf] %vm215, %v199
      %233 = vst.msk [vmem:[#allocation2 + $0x44] sm:$0xf] %vm215, %v200
      %234 = vst.msk [vmem:[#allocation2 + $0x48] sm:$0xf] %vm215, %v201
      %235 = vst.msk [vmem:[#allocation2 + $0x4c] sm:$0xf] %vm215, %v202
      %236 = vst.msk [vmem:[#allocation2 + $0x50] sm:$0xf] %vm215, %v203
      %237 = vst.msk [vmem:[#allocation2 + $0x54] sm:$0xf] %vm215, %v204
      %238 = vst.msk [vmem:[#allocation2 + $0x58] sm:$0xf] %vm215, %v205
      %239 = vst.msk [vmem:[#allocation2 + $0x5c] sm:$0xf] %vm215, %v206
      %240 = vst.msk [vmem:[#allocation2 + $0x60] sm:$0xf] %vm215, %v207
      %241 = vst.msk [vmem:[#allocation2 + $0x64] sm:$0xf] %vm215, %v208
      %242 = vst.msk [vmem:[#allocation2 + $0x68] sm:$0xf] %vm215, %v209
      %243 = vst.msk [vmem:[#allocation2 + $0x6c] sm:$0xf] %vm215, %v210
      %244 = vst.msk [vmem:[#allocation2 + $0x70] sm:$0xf] %vm215, %v211
      %245 = vst.msk [vmem:[#allocation2 + $0x74] sm:$0xf] %vm215, %v212
      %246 = vst.msk [vmem:[#allocation2 + $0x78] sm:$0xf] %vm215, %v213
      %247 = vst.msk [vmem:[#allocation2 + $0x7c] sm:$0xf] %vm215, %v214
      %v248 = vld [vmem:[%s172] sm:$0xf]
      %v249 = vld [vmem:[%s172 + $0x4] sm:$0xf]
      %v250 = vld [vmem:[%s172 + $0x8] sm:$0x1]
      %v251 = vld [vmem:[%s172 + $0xc] sm:$0xf]
      %v252 = vld [vmem:[%s172 + $0x10] sm:$0xf]
      %v253 = vld [vmem:[%s172 + $0x14] sm:$0x1]
      %v254 = vld [vmem:[%s172 + $0x18] sm:$0xf]
      %v255 = vld [vmem:[%s172 + $0x1c] sm:$0xf]
      %v256 = vld [vmem:[%s172 + $0x20] sm:$0x1]
      %v257 = vld [vmem:[%s172 + $0x24] sm:$0xf]
      %v258 = vld [vmem:[%s172 + $0x28] sm:$0xf]
      %v259 = vld [vmem:[%s172 + $0x2c] sm:$0x1]
      %v260 = vld [vmem:[%s172 + $0x30] sm:$0xf]
      %v261 = vld [vmem:[%s172 + $0x34] sm:$0xf]
      %v262 = vld [vmem:[%s172 + $0x38] sm:$0x1]
      %v263 = vld [vmem:[%s172 + $0x3c] sm:$0xf]
      %v264 = vld [vmem:[%s172 + $0x40] sm:$0xf]
      %v265 = vld [vmem:[%s172 + $0x44] sm:$0x1]
      %v266 = vld [vmem:[%s172 + $0x48] sm:$0xf]
      %v267 = vld [vmem:[%s172 + $0x4c] sm:$0xf]
      %v268 = vld [vmem:[%s172 + $0x50] sm:$0x1]
      %v269 = vld [vmem:[%s172 + $0x54] sm:$0xf]
      %v270 = vld [vmem:[%s172 + $0x58] sm:$0xf]
      %v271 = vld [vmem:[%s172 + $0x5c] sm:$0x1]
      %v272 = vld [vmem:[%s172 + $0x60] sm:$0xf]
      %v273 = vld [vmem:[%s172 + $0x64] sm:$0xf]
      %v274 = vld [vmem:[%s172 + $0x68] sm:$0x1]
      %v275 = vld [vmem:[%s172 + $0x6c] sm:$0xf]
      %v276 = vld [vmem:[%s172 + $0x70] sm:$0xf]
      %v277 = vld [vmem:[%s172 + $0x74] sm:$0x1]
      %v278 = vld [vmem:[%s172 + $0x78] sm:$0xf]
      %v279 = vld [vmem:[%s172 + $0x7c] sm:$0xf]
      %v280 = vld [vmem:[%s172 + $0x80] sm:$0x1]
      %v281 = vld [vmem:[%s172 + $0x84] sm:$0xf]
      %v282 = vld [vmem:[%s172 + $0x88] sm:$0xf]
      %v283 = vld [vmem:[%s172 + $0x8c] sm:$0x1]
      %v284 = vld [vmem:[%s172 + $0x90] sm:$0xf]
      %v285 = vld [vmem:[%s172 + $0x94] sm:$0xf]
      %v286 = vld [vmem:[%s172 + $0x98] sm:$0x1]
      %v287 = vld [vmem:[%s172 + $0x9c] sm:$0xf]
      %v288 = vld [vmem:[%s172 + $0xa0] sm:$0xf]
      %v289 = vld [vmem:[%s172 + $0xa4] sm:$0x1]
      %v290 = vld [vmem:[%s172 + $0xa8] sm:$0xf]
      %v291 = vld [vmem:[%s172 + $0xac] sm:$0xf]
      %v292 = vld [vmem:[%s172 + $0xb0] sm:$0x1]
      %v293 = vld [vmem:[%s172 + $0xb4] sm:$0xf]
      %v294 = vld [vmem:[%s172 + $0xb8] sm:$0xf]
      %v295 = vld [vmem:[%s172 + $0xbc] sm:$0x1]
      %vm296 = vsmask.f32 3328
      %vm297 = vsmask.f32 7440
      %vm298 = vmor %vm296, %vm297
      %v300 = vshrl.u32 %v248, 16
      %v302 = vrot.slane %v300, 4
      %v303 = vshll.u32 %v248, 16
      %v305 = vrot.slane %v303, 5
      %v306 = vor.u32 %v302, %v305
      %v307 = vrot.slane %v306, 4
      %v309 = vshll.u32 %v249, 16
      %v311 = vrot.slane %v309, 5
      %v312 = vsel %vm298, %v307, %v311
      %v313 = vshrl.u32 %v249, 16
      %v315 = vrot.slane %v313, 4
      %v316 = vor.u32 %v315, %v311
      %v317 = vrot.slane %v316, 4
      %v319 = vshll.u32 %v250, 16
      %v321 = vrot.slane %v319, 5
      %v322 = vsel %vm298, %v317, %v321
      %v324 = vshrl.u32 %v251, 16
      %v326 = vrot.slane %v324, 4
      %v327 = vshll.u32 %v251, 16
      %v329 = vrot.slane %v327, 5
      %v330 = vor.u32 %v326, %v329
      %v331 = vrot.slane %v330, 4
      %v333 = vshll.u32 %v252, 16
      %v335 = vrot.slane %v333, 5
      %v336 = vsel %vm298, %v331, %v335
      %v337 = vshrl.u32 %v252, 16
      %v339 = vrot.slane %v337, 4
      %v340 = vor.u32 %v339, %v335
      %v341 = vrot.slane %v340, 4
      %v343 = vshll.u32 %v253, 16
      %v345 = vrot.slane %v343, 5
      %v346 = vsel %vm298, %v341, %v345
      %v348 = vshrl.u32 %v254, 16
      %v350 = vrot.slane %v348, 4
      %v351 = vshll.u32 %v254, 16
      %v353 = vrot.slane %v351, 5
      %v354 = vor.u32 %v350, %v353
      %v355 = vrot.slane %v354, 4
      %v357 = vshll.u32 %v255, 16
      %v359 = vrot.slane %v357, 5
      %v360 = vsel %vm298, %v355, %v359
      %v361 = vshrl.u32 %v255, 16
      %v363 = vrot.slane %v361, 4
      %v364 = vor.u32 %v363, %v359
      %v365 = vrot.slane %v364, 4
      %v367 = vshll.u32 %v256, 16
      %v369 = vrot.slane %v367, 5
      %v370 = vsel %vm298, %v365, %v369
      %v372 = vshrl.u32 %v257, 16
      %v374 = vrot.slane %v372, 4
      %v375 = vshll.u32 %v257, 16
      %v377 = vrot.slane %v375, 5
      %v378 = vor.u32 %v374, %v377
      %v379 = vrot.slane %v378, 4
      %v381 = vshll.u32 %v258, 16
      %v383 = vrot.slane %v381, 5
      %v384 = vsel %vm298, %v379, %v383
      %v385 = vshrl.u32 %v258, 16
      %v387 = vrot.slane %v385, 4
      %v388 = vor.u32 %v387, %v383
      %v389 = vrot.slane %v388, 4
      %v391 = vshll.u32 %v259, 16
      %v393 = vrot.slane %v391, 5
      %v394 = vsel %vm298, %v389, %v393
      %v396 = vshrl.u32 %v260, 16
      %v398 = vrot.slane %v396, 4
      %v399 = vshll.u32 %v260, 16
      %v401 = vrot.slane %v399, 5
      %v402 = vor.u32 %v398, %v401
      %v403 = vrot.slane %v402, 4
      %v405 = vshll.u32 %v261, 16
      %v407 = vrot.slane %v405, 5
      %v408 = vsel %vm298, %v403, %v407
      %v409 = vshrl.u32 %v261, 16
      %v411 = vrot.slane %v409, 4
      %v412 = vor.u32 %v411, %v407
      %v413 = vrot.slane %v412, 4
      %v415 = vshll.u32 %v262, 16
      %v417 = vrot.slane %v415, 5
      %v418 = vsel %vm298, %v413, %v417
      %v420 = vshrl.u32 %v263, 16
      %v422 = vrot.slane %v420, 4
      %v423 = vshll.u32 %v263, 16
      %v425 = vrot.slane %v423, 5
      %v426 = vor.u32 %v422, %v425
      %v427 = vrot.slane %v426, 4
      %v429 = vshll.u32 %v264, 16
      %v431 = vrot.slane %v429, 5
      %v432 = vsel %vm298, %v427, %v431
      %v433 = vshrl.u32 %v264, 16
      %v435 = vrot.slane %v433, 4
      %v436 = vor.u32 %v435, %v431
      %v437 = vrot.slane %v436, 4
      %v439 = vshll.u32 %v265, 16
      %v441 = vrot.slane %v439, 5
      %v442 = vsel %vm298, %v437, %v441
      %v444 = vshrl.u32 %v266, 16
      %v446 = vrot.slane %v444, 4
      %v447 = vshll.u32 %v266, 16
      %v449 = vrot.slane %v447, 5
      %v450 = vor.u32 %v446, %v449
      %v451 = vrot.slane %v450, 4
      %v453 = vshll.u32 %v267, 16
      %v455 = vrot.slane %v453, 5
      %v456 = vsel %vm298, %v451, %v455
      %v457 = vshrl.u32 %v267, 16
      %v459 = vrot.slane %v457, 4
      %v460 = vor.u32 %v459, %v455
      %v461 = vrot.slane %v460, 4
      %v463 = vshll.u32 %v268, 16
      %v465 = vrot.slane %v463, 5
      %v466 = vsel %vm298, %v461, %v465
      %v468 = vshrl.u32 %v269, 16
      %v470 = vrot.slane %v468, 4
      %v471 = vshll.u32 %v269, 16
      %v473 = vrot.slane %v471, 5
      %v474 = vor.u32 %v470, %v473
      %v475 = vrot.slane %v474, 4
      %v477 = vshll.u32 %v270, 16
      %v479 = vrot.slane %v477, 5
      %v480 = vsel %vm298, %v475, %v479
      %v481 = vshrl.u32 %v270, 16
      %v483 = vrot.slane %v481, 4
      %v484 = vor.u32 %v483, %v479
      %v485 = vrot.slane %v484, 4
      %v487 = vshll.u32 %v271, 16
      %v489 = vrot.slane %v487, 5
      %v490 = vsel %vm298, %v485, %v489
      %v492 = vshrl.u32 %v272, 16
      %v494 = vrot.slane %v492, 4
      %v495 = vshll.u32 %v272, 16
      %v497 = vrot.slane %v495, 5
      %v498 = vor.u32 %v494, %v497
      %v499 = vrot.slane %v498, 4
      %v501 = vshll.u32 %v273, 16
      %v503 = vrot.slane %v501, 5
      %v504 = vsel %vm298, %v499, %v503
      %v505 = vshrl.u32 %v273, 16
      %v507 = vrot.slane %v505, 4
      %v508 = vor.u32 %v507, %v503
      %v509 = vrot.slane %v508, 4
      %v511 = vshll.u32 %v274, 16
      %v513 = vrot.slane %v511, 5
      %v514 = vsel %vm298, %v509, %v513
      %v516 = vshrl.u32 %v275, 16
      %v518 = vrot.slane %v516, 4
      %v519 = vshll.u32 %v275, 16
      %v521 = vrot.slane %v519, 5
      %v522 = vor.u32 %v518, %v521
      %v523 = vrot.slane %v522, 4
      %v525 = vshll.u32 %v276, 16
      %v527 = vrot.slane %v525, 5
      %v528 = vsel %vm298, %v523, %v527
      %v529 = vshrl.u32 %v276, 16
      %v531 = vrot.slane %v529, 4
      %v532 = vor.u32 %v531, %v527
      %v533 = vrot.slane %v532, 4
      %v535 = vshll.u32 %v277, 16
      %v537 = vrot.slane %v535, 5
      %v538 = vsel %vm298, %v533, %v537
      %v540 = vshrl.u32 %v278, 16
      %v542 = vrot.slane %v540, 4
      %v543 = vshll.u32 %v278, 16
      %v545 = vrot.slane %v543, 5
      %v546 = vor.u32 %v542, %v545
      %v547 = vrot.slane %v546, 4
      %v549 = vshll.u32 %v279, 16
      %v551 = vrot.slane %v549, 5
      %v552 = vsel %vm298, %v547, %v551
      %v553 = vshrl.u32 %v279, 16
      %v555 = vrot.slane %v553, 4
      %v556 = vor.u32 %v555, %v551
      %v557 = vrot.slane %v556, 4
      %v559 = vshll.u32 %v280, 16
      %v561 = vrot.slane %v559, 5
      %v562 = vsel %vm298, %v557, %v561
      %v564 = vshrl.u32 %v281, 16
      %v566 = vrot.slane %v564, 4
      %v567 = vshll.u32 %v281, 16
      %v569 = vrot.slane %v567, 5
      %v570 = vor.u32 %v566, %v569
      %v571 = vrot.slane %v570, 4
      %v573 = vshll.u32 %v282, 16
      %v575 = vrot.slane %v573, 5
      %v576 = vsel %vm298, %v571, %v575
      %v577 = vshrl.u32 %v282, 16
      %v579 = vrot.slane %v577, 4
      %v580 = vor.u32 %v579, %v575
      %v581 = vrot.slane %v580, 4
      %v583 = vshll.u32 %v283, 16
      %v585 = vrot.slane %v583, 5
      %v586 = vsel %vm298, %v581, %v585
      %v588 = vshrl.u32 %v284, 16
      %v590 = vrot.slane %v588, 4
      %v591 = vshll.u32 %v284, 16
      %v593 = vrot.slane %v591, 5
      %v594 = vor.u32 %v590, %v593
      %v595 = vrot.slane %v594, 4
      %v597 = vshll.u32 %v285, 16
      %v599 = vrot.slane %v597, 5
      %v600 = vsel %vm298, %v595, %v599
      %v601 = vshrl.u32 %v285, 16
      %v603 = vrot.slane %v601, 4
      %v604 = vor.u32 %v603, %v599
      %v605 = vrot.slane %v604, 4
      %v607 = vshll.u32 %v286, 16
      %v609 = vrot.slane %v607, 5
      %v610 = vsel %vm298, %v605, %v609
      %v612 = vshrl.u32 %v287, 16
      %v614 = vrot.slane %v612, 4
      %v615 = vshll.u32 %v287, 16
      %v617 = vrot.slane %v615, 5
      %v618 = vor.u32 %v614, %v617
      %v619 = vrot.slane %v618, 4
      %v621 = vshll.u32 %v288, 16
      %v623 = vrot.slane %v621, 5
      %v624 = vsel %vm298, %v619, %v623
      %v625 = vshrl.u32 %v288, 16
      %v627 = vrot.slane %v625, 4
      %v628 = vor.u32 %v627, %v623
      %v629 = vrot.slane %v628, 4
      %v631 = vshll.u32 %v289, 16
      %v633 = vrot.slane %v631, 5
      %v634 = vsel %vm298, %v629, %v633
      %v636 = vshrl.u32 %v290, 16
      %v638 = vrot.slane %v636, 4
      %v639 = vshll.u32 %v290, 16
      %v641 = vrot.slane %v639, 5
      %v642 = vor.u32 %v638, %v641
      %v643 = vrot.slane %v642, 4
      %v645 = vshll.u32 %v291, 16
      %v647 = vrot.slane %v645, 5
      %v648 = vsel %vm298, %v643, %v647
      %v649 = vshrl.u32 %v291, 16
      %v651 = vrot.slane %v649, 4
      %v652 = vor.u32 %v651, %v647
      %v653 = vrot.slane %v652, 4
      %v655 = vshll.u32 %v292, 16
      %v657 = vrot.slane %v655, 5
      %v658 = vsel %vm298, %v653, %v657
      %v660 = vshrl.u32 %v293, 16
      %v662 = vrot.slane %v660, 4
      %v663 = vshll.u32 %v293, 16
      %v665 = vrot.slane %v663, 5
      %v666 = vor.u32 %v662, %v665
      %v667 = vrot.slane %v666, 4
      %v669 = vshll.u32 %v294, 16
      %v671 = vrot.slane %v669, 5
      %v672 = vsel %vm298, %v667, %v671
      %v673 = vshrl.u32 %v294, 16
      %v675 = vrot.slane %v673, 4
      %v676 = vor.u32 %v675, %v671
      %v677 = vrot.slane %v676, 4
      %v679 = vshll.u32 %v295, 16
      %v681 = vrot.slane %v679, 5
      %v682 = vsel %vm298, %v677, %v681
      %683 = vrot.lane.b32.xlu0 %v312, 8
      %v684 = vpop.permute.xlu0 %683
      %685 = vrot.lane.b32.xlu0 %v322, 8
      %v686 = vpop.permute.xlu0 %685
      %687 = vrot.lane.b32.xlu0 %v336, 8
      %v688 = vpop.permute.xlu0 %687
      %689 = vrot.lane.b32.xlu0 %v346, 8
      %v690 = vpop.permute.xlu0 %689
      %691 = vrot.lane.b32.xlu0 %v360, 8
      %v692 = vpop.permute.xlu0 %691
      %693 = vrot.lane.b32.xlu0 %v370, 8
      %v694 = vpop.permute.xlu0 %693
      %695 = vrot.lane.b32.xlu0 %v384, 8
      %v696 = vpop.permute.xlu0 %695
      %697 = vrot.lane.b32.xlu0 %v394, 8
      %v698 = vpop.permute.xlu0 %697
      %699 = vrot.lane.b32.xlu0 %v408, 8
      %v700 = vpop.permute.xlu0 %699
      %701 = vrot.lane.b32.xlu0 %v418, 8
      %v702 = vpop.permute.xlu0 %701
      %703 = vrot.lane.b32.xlu0 %v432, 8
      %v704 = vpop.permute.xlu0 %703
      %705 = vrot.lane.b32.xlu0 %v442, 8
      %v706 = vpop.permute.xlu0 %705
      %707 = vrot.lane.b32.xlu0 %v456, 8
      %v708 = vpop.permute.xlu0 %707
      %709 = vrot.lane.b32.xlu0 %v466, 8
      %v710 = vpop.permute.xlu0 %709
      %711 = vrot.lane.b32.xlu0 %v480, 8
      %v712 = vpop.permute.xlu0 %711
      %713 = vrot.lane.b32.xlu0 %v490, 8
      %v714 = vpop.permute.xlu0 %713
      %715 = vrot.lane.b32.xlu0 %v504, 8
      %v716 = vpop.permute.xlu0 %715
      %717 = vrot.lane.b32.xlu0 %v514, 8
      %v718 = vpop.permute.xlu0 %717
      %719 = vrot.lane.b32.xlu0 %v528, 8
      %v720 = vpop.permute.xlu0 %719
      %721 = vrot.lane.b32.xlu0 %v538, 8
      %v722 = vpop.permute.xlu0 %721
      %723 = vrot.lane.b32.xlu0 %v552, 8
      %v724 = vpop.permute.xlu0 %723
      %725 = vrot.lane.b32.xlu0 %v562, 8
      %v726 = vpop.permute.xlu0 %725
      %727 = vrot.lane.b32.xlu0 %v576, 8
      %v728 = vpop.permute.xlu0 %727
      %729 = vrot.lane.b32.xlu0 %v586, 8
      %v730 = vpop.permute.xlu0 %729
      %731 = vrot.lane.b32.xlu0 %v600, 8
      %v732 = vpop.permute.xlu0 %731
      %733 = vrot.lane.b32.xlu0 %v610, 8
      %v734 = vpop.permute.xlu0 %733
      %735 = vrot.lane.b32.xlu0 %v624, 8
      %v736 = vpop.permute.xlu0 %735
      %737 = vrot.lane.b32.xlu0 %v634, 8
      %v738 = vpop.permute.xlu0 %737
      %739 = vrot.lane.b32.xlu0 %v648, 8
      %v740 = vpop.permute.xlu0 %739
      %741 = vrot.lane.b32.xlu0 %v658, 8
      %v742 = vpop.permute.xlu0 %741
      %743 = vrot.lane.b32.xlu0 %v672, 8
      %v744 = vpop.permute.xlu0 %743
      %745 = vrot.lane.b32.xlu0 %v682, 8
      %v746 = vpop.permute.xlu0 %745
      %vm779 = vcmask 126016
      %780 = vst.msk [vmem:[#allocation2] sm:$0xf] %vm779, %v684
      %781 = vst.msk [vmem:[#allocation2 + $0x4] sm:$0xf] %vm779, %v686
      %782 = vst.msk [vmem:[#allocation2 + $0x8] sm:$0xf] %vm779, %v688
      %783 = vst.msk [vmem:[#allocation2 + $0xc] sm:$0xf] %vm779, %v690
      %784 = vst.msk [vmem:[#allocation2 + $0x10] sm:$0xf] %vm779, %v692
      %785 = vst.msk [vmem:[#allocation2 + $0x14] sm:$0xf] %vm779, %v694
      %786 = vst.msk [vmem:[#allocation2 + $0x18] sm:$0xf] %vm779, %v696
      %787 = vst.msk [vmem:[#allocation2 + $0x1c] sm:$0xf] %vm779, %v698
      %788 = vst.msk [vmem:[#allocation2 + $0x20] sm:$0xf] %vm779, %v700
      %789 = vst.msk [vmem:[#allocation2 + $0x24] sm:$0xf] %vm779, %v702
      %790 = vst.msk [vmem:[#allocation2 + $0x28] sm:$0xf] %vm779, %v704
      %791 = vst.msk [vmem:[#allocation2 + $0x2c] sm:$0xf] %vm779, %v706
      %792 = vst.msk [vmem:[#allocation2 + $0x30] sm:$0xf] %vm779, %v708
      %793 = vst.msk [vmem:[#allocation2 + $0x34] sm:$0xf] %vm779, %v710
      %794 = vst.msk [vmem:[#allocation2 + $0x38] sm:$0xf] %vm779, %v712
      %795 = vst.msk [vmem:[#allocation2 + $0x3c] sm:$0xf] %vm779, %v714
      %796 = vst.msk [vmem:[#allocation2 + $0x40] sm:$0xf] %vm779, %v716
      %797 = vst.msk [vmem:[#allocation2 + $0x44] sm:$0xf] %vm779, %v718
      %798 = vst.msk [vmem:[#allocation2 + $0x48] sm:$0xf] %vm779, %v720
      %799 = vst.msk [vmem:[#allocation2 + $0x4c] sm:$0xf] %vm779, %v722
      %800 = vst.msk [vmem:[#allocation2 + $0x50] sm:$0xf] %vm779, %v724
      %801 = vst.msk [vmem:[#allocation2 + $0x54] sm:$0xf] %vm779, %v726
      %802 = vst.msk [vmem:[#allocation2 + $0x58] sm:$0xf] %vm779, %v728
      %803 = vst.msk [vmem:[#allocation2 + $0x5c] sm:$0xf] %vm779, %v730
      %804 = vst.msk [vmem:[#allocation2 + $0x60] sm:$0xf] %vm779, %v732
      %805 = vst.msk [vmem:[#allocation2 + $0x64] sm:$0xf] %vm779, %v734
      %806 = vst.msk [vmem:[#allocation2 + $0x68] sm:$0xf] %vm779, %v736
      %807 = vst.msk [vmem:[#allocation2 + $0x6c] sm:$0xf] %vm779, %v738
      %808 = vst.msk [vmem:[#allocation2 + $0x70] sm:$0xf] %vm779, %v740
      %809 = vst.msk [vmem:[#allocation2 + $0x74] sm:$0xf] %vm779, %v742
      %810 = vst.msk [vmem:[#allocation2 + $0x78] sm:$0xf] %vm779, %v744
      %811 = vst.msk [vmem:[#allocation2 + $0x7c] sm:$0xf] %vm779, %v746
      %v812 = vld [vmem:[%s172] sm:$0xe]
      %v813 = vld [vmem:[%s172 + $0x4] sm:$0xf]
      %v814 = vld [vmem:[%s172 + $0x8] sm:$0x1]
      %v815 = vld [vmem:[%s172 + $0xc] sm:$0xe]
      %v816 = vld [vmem:[%s172 + $0x10] sm:$0xf]
      %v817 = vld [vmem:[%s172 + $0x14] sm:$0x1]
      %v818 = vld [vmem:[%s172 + $0x18] sm:$0xe]
      %v819 = vld [vmem:[%s172 + $0x1c] sm:$0xf]
      %v820 = vld [vmem:[%s172 + $0x20] sm:$0x1]
      %v821 = vld [vmem:[%s172 + $0x24] sm:$0xe]
      %v822 = vld [vmem:[%s172 + $0x28] sm:$0xf]
      %v823 = vld [vmem:[%s172 + $0x2c] sm:$0x1]
      %v824 = vld [vmem:[%s172 + $0x30] sm:$0xe]
      %v825 = vld [vmem:[%s172 + $0x34] sm:$0xf]
      %v826 = vld [vmem:[%s172 + $0x38] sm:$0x1]
      %v827 = vld [vmem:[%s172 + $0x3c] sm:$0xe]
      %v828 = vld [vmem:[%s172 + $0x40] sm:$0xf]
      %v829 = vld [vmem:[%s172 + $0x44] sm:$0x1]
      %v830 = vld [vmem:[%s172 + $0x48] sm:$0xe]
      %v831 = vld [vmem:[%s172 + $0x4c] sm:$0xf]
      %v832 = vld [vmem:[%s172 + $0x50] sm:$0x1]
      %v833 = vld [vmem:[%s172 + $0x54] sm:$0xe]
      %v834 = vld [vmem:[%s172 + $0x58] sm:$0xf]
      %v835 = vld [vmem:[%s172 + $0x5c] sm:$0x1]
      %v836 = vld [vmem:[%s172 + $0x60] sm:$0xe]
      %v837 = vld [vmem:[%s172 + $0x64] sm:$0xf]
      %v838 = vld [vmem:[%s172 + $0x68] sm:$0x1]
      %v839 = vld [vmem:[%s172 + $0x6c] sm:$0xe]
      %v840 = vld [vmem:[%s172 + $0x70] sm:$0xf]
      %v841 = vld [vmem:[%s172 + $0x74] sm:$0x1]
      %v842 = vld [vmem:[%s172 + $0x78] sm:$0xe]
      %v843 = vld [vmem:[%s172 + $0x7c] sm:$0xf]
      %v844 = vld [vmem:[%s172 + $0x80] sm:$0x1]
      %v845 = vld [vmem:[%s172 + $0x84] sm:$0xe]
      %v846 = vld [vmem:[%s172 + $0x88] sm:$0xf]
      %v847 = vld [vmem:[%s172 + $0x8c] sm:$0x1]
      %v848 = vld [vmem:[%s172 + $0x90] sm:$0xe]
      %v849 = vld [vmem:[%s172 + $0x94] sm:$0xf]
      %v850 = vld [vmem:[%s172 + $0x98] sm:$0x1]
      %v851 = vld [vmem:[%s172 + $0x9c] sm:$0xe]
      %v852 = vld [vmem:[%s172 + $0xa0] sm:$0xf]
      %v853 = vld [vmem:[%s172 + $0xa4] sm:$0x1]
      %v854 = vld [vmem:[%s172 + $0xa8] sm:$0xe]
      %v855 = vld [vmem:[%s172 + $0xac] sm:$0xf]
      %v856 = vld [vmem:[%s172 + $0xb0] sm:$0x1]
      %v857 = vld [vmem:[%s172 + $0xb4] sm:$0xe]
      %v858 = vld [vmem:[%s172 + $0xb8] sm:$0xf]
      %v859 = vld [vmem:[%s172 + $0xbc] sm:$0x1]
      %vm908 = vcmask 1042432
      %vm909 = vcmask 1046532
      %vm910 = vmor %vm908, %vm909
      %v911 = vrot.slane %v812, 5
      %v912 = vrot.slane %v911, 4
      %v913 = vrot.slane %v813, 5
      %v914 = vsel %vm910, %v912, %v913
      %v915 = vrot.slane %v913, 4
      %v916 = vrot.slane %v814, 5
      %v917 = vsel %vm910, %v915, %v916
      %v918 = vrot.slane %v815, 5
      %v919 = vrot.slane %v918, 4
      %v920 = vrot.slane %v816, 5
      %v921 = vsel %vm910, %v919, %v920
      %v922 = vrot.slane %v920, 4
      %v923 = vrot.slane %v817, 5
      %v924 = vsel %vm910, %v922, %v923
      %v925 = vrot.slane %v818, 5
      %v926 = vrot.slane %v925, 4
      %v927 = vrot.slane %v819, 5
      %v928 = vsel %vm910, %v926, %v927
      %v929 = vrot.slane %v927, 4
      %v930 = vrot.slane %v820, 5
      %v931 = vsel %vm910, %v929, %v930
      %v932 = vrot.slane %v821, 5
      %v933 = vrot.slane %v932, 4
      %v934 = vrot.slane %v822, 5
      %v935 = vsel %vm910, %v933, %v934
      %v936 = vrot.slane %v934, 4
      %v937 = vrot.slane %v823, 5
      %v938 = vsel %vm910, %v936, %v937
      %v939 = vrot.slane %v824, 5
      %v940 = vrot.slane %v939, 4
      %v941 = vrot.slane %v825, 5
      %v942 = vsel %vm910, %v940, %v941
      %v943 = vrot.slane %v941, 4
      %v944 = vrot.slane %v826, 5
      %v945 = vsel %vm910, %v943, %v944
      %v946 = vrot.slane %v827, 5
      %v947 = vrot.slane %v946, 4
      %v948 = vrot.slane %v828, 5
      %v949 = vsel %vm910, %v947, %v948
      %v950 = vrot.slane %v948, 4
      %v951 = vrot.slane %v829, 5
      %v952 = vsel %vm910, %v950, %v951
      %v953 = vrot.slane %v830, 5
      %v954 = vrot.slane %v953, 4
      %v955 = vrot.slane %v831, 5
      %v956 = vsel %vm910, %v954, %v955
      %v957 = vrot.slane %v955, 4
      %v958 = vrot.slane %v832, 5
      %v959 = vsel %vm910, %v957, %v958
      %v960 = vrot.slane %v833, 5
      %v961 = vrot.slane %v960, 4
      %v962 = vrot.slane %v834, 5
      %v963 = vsel %vm910, %v961, %v962
      %v964 = vrot.slane %v962, 4
      %v965 = vrot.slane %v835, 5
      %v966 = vsel %vm910, %v964, %v965
      %v967 = vrot.slane %v836, 5
      %v968 = vrot.slane %v967, 4
      %v969 = vrot.slane %v837, 5
      %v970 = vsel %vm910, %v968, %v969
      %v971 = vrot.slane %v969, 4
      %v972 = vrot.slane %v838, 5
      %v973 = vsel %vm910, %v971, %v972
      %v974 = vrot.slane %v839, 5
      %v975 = vrot.slane %v974, 4
      %v976 = vrot.slane %v840, 5
      %v977 = vsel %vm910, %v975, %v976
      %v978 = vrot.slane %v976, 4
      %v979 = vrot.slane %v841, 5
      %v980 = vsel %vm910, %v978, %v979
      %v981 = vrot.slane %v842, 5
      %v982 = vrot.slane %v981, 4
      %v983 = vrot.slane %v843, 5
      %v984 = vsel %vm910, %v982, %v983
      %v985 = vrot.slane %v983, 4
      %v986 = vrot.slane %v844, 5
      %v987 = vsel %vm910, %v985, %v986
      %v988 = vrot.slane %v845, 5
      %v989 = vrot.slane %v988, 4
      %v990 = vrot.slane %v846, 5
      %v991 = vsel %vm910, %v989, %v990
      %v992 = vrot.slane %v990, 4
      %v993 = vrot.slane %v847, 5
      %v994 = vsel %vm910, %v992, %v993
      %v995 = vrot.slane %v848, 5
      %v996 = vrot.slane %v995, 4
      %v997 = vrot.slane %v849, 5
      %v998 = vsel %vm910, %v996, %v997
      %v999 = vrot.slane %v997, 4
      %v1000 = vrot.slane %v850, 5
      %v1001 = vsel %vm910, %v999, %v1000
      %v1002 = vrot.slane %v851, 5
      %v1003 = vrot.slane %v1002, 4
      %v1004 = vrot.slane %v852, 5
      %v1005 = vsel %vm910, %v1003, %v1004
      %v1006 = vrot.slane %v1004, 4
      %v1007 = vrot.slane %v853, 5
      %v1008 = vsel %vm910, %v1006, %v1007
      %v1009 = vrot.slane %v854, 5
      %v1010 = vrot.slane %v1009, 4
      %v1011 = vrot.slane %v855, 5
      %v1012 = vsel %vm910, %v1010, %v1011
      %v1013 = vrot.slane %v1011, 4
      %v1014 = vrot.slane %v856, 5
      %v1015 = vsel %vm910, %v1013, %v1014
      %v1016 = vrot.slane %v857, 5
      %v1017 = vrot.slane %v1016, 4
      %v1018 = vrot.slane %v858, 5
      %v1019 = vsel %vm910, %v1017, %v1018
      %v1020 = vrot.slane %v1018, 4
      %v1021 = vrot.slane %v859, 5
      %v1022 = vsel %vm910, %v1020, %v1021
      %1023 = vrot.lane.b32.xlu0 %v914, 16
      %v1024 = vpop.permute.xlu0 %1023
      %1025 = vrot.lane.b32.xlu0 %v917, 16
      %v1026 = vpop.permute.xlu0 %1025
      %1027 = vrot.lane.b32.xlu0 %v921, 16
      %v1028 = vpop.permute.xlu0 %1027
      %1029 = vrot.lane.b32.xlu0 %v924, 16
      %v1030 = vpop.permute.xlu0 %1029
      %1031 = vrot.lane.b32.xlu0 %v928, 16
      %v1032 = vpop.permute.xlu0 %1031
      %1033 = vrot.lane.b32.xlu0 %v931, 16
      %v1034 = vpop.permute.xlu0 %1033
      %1035 = vrot.lane.b32.xlu0 %v935, 16
      %v1036 = vpop.permute.xlu0 %1035
      %1037 = vrot.lane.b32.xlu0 %v938, 16
      %v1038 = vpop.permute.xlu0 %1037
      %1039 = vrot.lane.b32.xlu0 %v942, 16
      %v1040 = vpop.permute.xlu0 %1039
      %1041 = vrot.lane.b32.xlu0 %v945, 16
      %v1042 = vpop.permute.xlu0 %1041
      %1043 = vrot.lane.b32.xlu0 %v949, 16
      %v1044 = vpop.permute.xlu0 %1043
      %1045 = vrot.lane.b32.xlu0 %v952, 16
      %v1046 = vpop.permute.xlu0 %1045
      %1047 = vrot.lane.b32.xlu0 %v956, 16
      %v1048 = vpop.permute.xlu0 %1047
      %1049 = vrot.lane.b32.xlu0 %v959, 16
      %v1050 = vpop.permute.xlu0 %1049
      %1051 = vrot.lane.b32.xlu0 %v963, 16
      %v1052 = vpop.permute.xlu0 %1051
      %1053 = vrot.lane.b32.xlu0 %v966, 16
      %v1054 = vpop.permute.xlu0 %1053
      %1055 = vrot.lane.b32.xlu0 %v970, 16
      %v1056 = vpop.permute.xlu0 %1055
      %1057 = vrot.lane.b32.xlu0 %v973, 16
      %v1058 = vpop.permute.xlu0 %1057
      %1059 = vrot.lane.b32.xlu0 %v977, 16
      %v1060 = vpop.permute.xlu0 %1059
      %1061 = vrot.lane.b32.xlu0 %v980, 16
      %v1062 = vpop.permute.xlu0 %1061
      %1063 = vrot.lane.b32.xlu0 %v984, 16
      %v1064 = vpop.permute.xlu0 %1063
      %1065 = vrot.lane.b32.xlu0 %v987, 16
      %v1066 = vpop.permute.xlu0 %1065
      %1067 = vrot.lane.b32.xlu0 %v991, 16
      %v1068 = vpop.permute.xlu0 %1067
      %1069 = vrot.lane.b32.xlu0 %v994, 16
      %v1070 = vpop.permute.xlu0 %1069
      %1071 = vrot.lane.b32.xlu0 %v998, 16
      %v1072 = vpop.permute.xlu0 %1071
      %1073 = vrot.lane.b32.xlu0 %v1001, 16
      %v1074 = vpop.permute.xlu0 %1073
      %1075 = vrot.lane.b32.xlu0 %v1005, 16
      %v1076 = vpop.permute.xlu0 %1075
      %1077 = vrot.lane.b32.xlu0 %v1008, 16
      %v1078 = vpop.permute.xlu0 %1077
      %1079 = vrot.lane.b32.xlu0 %v1012, 16
      %v1080 = vpop.permute.xlu0 %1079
      %1081 = vrot.lane.b32.xlu0 %v1015, 16
      %v1082 = vpop.permute.xlu0 %1081
      %1083 = vrot.lane.b32.xlu0 %v1019, 16
      %v1084 = vpop.permute.xlu0 %1083
      %1085 = vrot.lane.b32.xlu0 %v1022, 16
      %v1086 = vpop.permute.xlu0 %1085
      %vm1119 = vcmask 191616
      %1120 = vst.msk [vmem:[#allocation2] sm:$0xf] %vm1119, %v1024
      %1121 = vst.msk [vmem:[#allocation2 + $0x4] sm:$0xf] %vm1119, %v1026
      %1122 = vst.msk [vmem:[#allocation2 + $0x8] sm:$0xf] %vm1119, %v1028
      %1123 = vst.msk [vmem:[#allocation2 + $0xc] sm:$0xf] %vm1119, %v1030
      %1124 = vst.msk [vmem:[#allocation2 + $0x10] sm:$0xf] %vm1119, %v1032
      %1125 = vst.msk [vmem:[#allocation2 + $0x14] sm:$0xf] %vm1119, %v1034
      %1126 = vst.msk [vmem:[#allocation2 + $0x18] sm:$0xf] %vm1119, %v1036
      %1127 = vst.msk [vmem:[#allocation2 + $0x1c] sm:$0xf] %vm1119, %v1038
      %1128 = vst.msk [vmem:[#allocation2 + $0x20] sm:$0xf] %vm1119, %v1040
      %1129 = vst.msk [vmem:[#allocation2 + $0x24] sm:$0xf] %vm1119, %v1042
      %1130 = vst.msk [vmem:[#allocation2 + $0x28] sm:$0xf] %vm1119, %v1044
      %1131 = vst.msk [vmem:[#allocation2 + $0x2c] sm:$0xf] %vm1119, %v1046
      %1132 = vst.msk [vmem:[#allocation2 + $0x30] sm:$0xf] %vm1119, %v1048
      %1133 = vst.msk [vmem:[#allocation2 + $0x34] sm:$0xf] %vm1119, %v1050
      %1134 = vst.msk [vmem:[#allocation2 + $0x38] sm:$0xf] %vm1119, %v1052
      %1135 = vst.msk [vmem:[#allocation2 + $0x3c] sm:$0xf] %vm1119, %v1054
      %1136 = vst.msk [vmem:[#allocation2 + $0x40] sm:$0xf] %vm1119, %v1056
      %1137 = vst.msk [vmem:[#allocation2 + $0x44] sm:$0xf] %vm1119, %v1058
      %1138 = vst.msk [vmem:[#allocation2 + $0x48] sm:$0xf] %vm1119, %v1060
      %1139 = vst.msk [vmem:[#allocation2 + $0x4c] sm:$0xf] %vm1119, %v1062
      %1140 = vst.msk [vmem:[#allocation2 + $0x50] sm:$0xf] %vm1119, %v1064
      %1141 = vst.msk [vmem:[#allocation2 + $0x54] sm:$0xf] %vm1119, %v1066
      %1142 = vst.msk [vmem:[#allocation2 + $0x58] sm:$0xf] %vm1119, %v1068
      %1143 = vst.msk [vmem:[#allocation2 + $0x5c] sm:$0xf] %vm1119, %v1070
      %1144 = vst.msk [vmem:[#allocation2 + $0x60] sm:$0xf] %vm1119, %v1072
      %1145 = vst.msk [vmem:[#allocation2 + $0x64] sm:$0xf] %vm1119, %v1074
      %1146 = vst.msk [vmem:[#allocation2 + $0x68] sm:$0xf] %vm1119, %v1076
      %1147 = vst.msk [vmem:[#allocation2 + $0x6c] sm:$0xf] %vm1119, %v1078
      %1148 = vst.msk [vmem:[#allocation2 + $0x70] sm:$0xf] %vm1119, %v1080
      %1149 = vst.msk [vmem:[#allocation2 + $0x74] sm:$0xf] %vm1119, %v1082
      %1150 = vst.msk [vmem:[#allocation2 + $0x78] sm:$0xf] %vm1119, %v1084
      %1151 = vst.msk [vmem:[#allocation2 + $0x7c] sm:$0xf] %vm1119, %v1086
      %s1152 = scalar_lea.vmem %s172, 12
      %v1153 = vld [vmem:[%s1152] sm:$0xf]
      %v1154 = vld [vmem:[%s1152 + $0x4] sm:$0xf]
      %v1155 = vld [vmem:[%s1152 + $0xc] sm:$0xf]
      %v1156 = vld [vmem:[%s1152 + $0x10] sm:$0xf]
      %v1157 = vld [vmem:[%s1152 + $0x18] sm:$0xf]
      %v1158 = vld [vmem:[%s1152 + $0x1c] sm:$0xf]
      %v1159 = vld [vmem:[%s1152 + $0x24] sm:$0xf]
      %v1160 = vld [vmem:[%s1152 + $0x28] sm:$0xf]
      %v1161 = vld [vmem:[%s1152 + $0x30] sm:$0xf]
      %v1162 = vld [vmem:[%s1152 + $0x34] sm:$0xf]
      %v1163 = vld [vmem:[%s1152 + $0x3c] sm:$0xf]
      %v1164 = vld [vmem:[%s1152 + $0x40] sm:$0xf]
      %v1165 = vld [vmem:[%s1152 + $0x48] sm:$0xf]
      %v1166 = vld [vmem:[%s1152 + $0x4c] sm:$0xf]
      %v1167 = vld [vmem:[%s1152 + $0x54] sm:$0xf]
      %v1168 = vld [vmem:[%s1152 + $0x58] sm:$0xf]
      %v1169 = vld [vmem:[%s1152 + $0x60] sm:$0xf]
      %v1170 = vld [vmem:[%s1152 + $0x64] sm:$0xf]
      %v1171 = vld [vmem:[%s1152 + $0x6c] sm:$0xf]
      %v1172 = vld [vmem:[%s1152 + $0x70] sm:$0xf]
      %v1173 = vld [vmem:[%s1152 + $0x78] sm:$0xf]
      %v1174 = vld [vmem:[%s1152 + $0x7c] sm:$0xf]
      %v1175 = vld [vmem:[%s1152 + $0x84] sm:$0xf]
      %v1176 = vld [vmem:[%s1152 + $0x88] sm:$0xf]
      %v1177 = vld [vmem:[%s1152 + $0x90] sm:$0xf]
      %v1178 = vld [vmem:[%s1152 + $0x94] sm:$0xf]
      %v1179 = vld [vmem:[%s1152 + $0x9c] sm:$0xf]
      %v1180 = vld [vmem:[%s1152 + $0xa0] sm:$0xf]
      %v1181 = vld [vmem:[%s1152 + $0xa8] sm:$0xf]
      %v1182 = vld [vmem:[%s1152 + $0xac] sm:$0xf]
      %v1183 = vld [vmem:[%s1152 + $0xb4] sm:$0xf]
      %v1184 = vld [vmem:[%s1152 + $0xb8] sm:$0xf]
      %1217 = vrot.lane.b32.xlu0 %v1153, 24
      %v1218 = vpop.permute.xlu0 %1217
      %1219 = vrot.lane.b32.xlu0 %v1154, 24
      %v1220 = vpop.permute.xlu0 %1219
      %1221 = vrot.lane.b32.xlu0 %v1155, 24
      %v1222 = vpop.permute.xlu0 %1221
      %1223 = vrot.lane.b32.xlu0 %v1156, 24
      %v1224 = vpop.permute.xlu0 %1223
      %1225 = vrot.lane.b32.xlu0 %v1157, 24
      %v1226 = vpop.permute.xlu0 %1225
      %1227 = vrot.lane.b32.xlu0 %v1158, 24
      %v1228 = vpop.permute.xlu0 %1227
      %1229 = vrot.lane.b32.xlu0 %v1159, 24
      %v1230 = vpop.permute.xlu0 %1229
      %1231 = vrot.lane.b32.xlu0 %v1160, 24
      %v1232 = vpop.permute.xlu0 %1231
      %1233 = vrot.lane.b32.xlu0 %v1161, 24
      %v1234 = vpop.permute.xlu0 %1233
      %1235 = vrot.lane.b32.xlu0 %v1162, 24
      %v1236 = vpop.permute.xlu0 %1235
      %1237 = vrot.lane.b32.xlu0 %v1163, 24
      %v1238 = vpop.permute.xlu0 %1237
      %1239 = vrot.lane.b32.xlu0 %v1164, 24
      %v1240 = vpop.permute.xlu0 %1239
      %1241 = vrot.lane.b32.xlu0 %v1165, 24
      %v1242 = vpop.permute.xlu0 %1241
      %1243 = vrot.lane.b32.xlu0 %v1166, 24
      %v1244 = vpop.permute.xlu0 %1243
      %1245 = vrot.lane.b32.xlu0 %v1167, 24
      %v1246 = vpop.permute.xlu0 %1245
      %1247 = vrot.lane.b32.xlu0 %v1168, 24
      %v1248 = vpop.permute.xlu0 %1247
      %1249 = vrot.lane.b32.xlu0 %v1169, 24
      %v1250 = vpop.permute.xlu0 %1249
      %1251 = vrot.lane.b32.xlu0 %v1170, 24
      %v1252 = vpop.permute.xlu0 %1251
      %1253 = vrot.lane.b32.xlu0 %v1171, 24
      %v1254 = vpop.permute.xlu0 %1253
      %1255 = vrot.lane.b32.xlu0 %v1172, 24
      %v1256 = vpop.permute.xlu0 %1255
      %1257 = vrot.lane.b32.xlu0 %v1173, 24
      %v1258 = vpop.permute.xlu0 %1257
      %1259 = vrot.lane.b32.xlu0 %v1174, 24
      %v1260 = vpop.permute.xlu0 %1259
      %1261 = vrot.lane.b32.xlu0 %v1175, 24
      %v1262 = vpop.permute.xlu0 %1261
      %1263 = vrot.lane.b32.xlu0 %v1176, 24
      %v1264 = vpop.permute.xlu0 %1263
      %1265 = vrot.lane.b32.xlu0 %v1177, 24
      %v1266 = vpop.permute.xlu0 %1265
      %1267 = vrot.lane.b32.xlu0 %v1178, 24
      %v1268 = vpop.permute.xlu0 %1267
      %1269 = vrot.lane.b32.xlu0 %v1179, 24
      %v1270 = vpop.permute.xlu0 %1269
      %1271 = vrot.lane.b32.xlu0 %v1180, 24
      %v1272 = vpop.permute.xlu0 %1271
      %1273 = vrot.lane.b32.xlu0 %v1181, 24
      %v1274 = vpop.permute.xlu0 %1273
      %1275 = vrot.lane.b32.xlu0 %v1182, 24
      %v1276 = vpop.permute.xlu0 %1275
      %1277 = vrot.lane.b32.xlu0 %v1183, 24
      %v1278 = vpop.permute.xlu0 %1277
      %1279 = vrot.lane.b32.xlu0 %v1184, 24
      %v1280 = vpop.permute.xlu0 %1279
      %vm1313 = vcmask 257216
      %1314 = vst.msk [vmem:[#allocation2] sm:$0xf] %vm1313, %v1218
      %1315 = vst.msk [vmem:[#allocation2 + $0x4] sm:$0xf] %vm1313, %v1220
      %1316 = vst.msk [vmem:[#allocation2 + $0x8] sm:$0xf] %vm1313, %v1222
      %1317 = vst.msk [vmem:[#allocation2 + $0xc] sm:$0xf] %vm1313, %v1224
      %1318 = vst.msk [vmem:[#allocation2 + $0x10] sm:$0xf] %vm1313, %v1226
      %1319 = vst.msk [vmem:[#allocation2 + $0x14] sm:$0xf] %vm1313, %v1228
      %1320 = vst.msk [vmem:[#allocation2 + $0x18] sm:$0xf] %vm1313, %v1230
      %1321 = vst.msk [vmem:[#allocation2 + $0x1c] sm:$0xf] %vm1313, %v1232
      %1322 = vst.msk [vmem:[#allocation2 + $0x20] sm:$0xf] %vm1313, %v1234
      %1323 = vst.msk [vmem:[#allocation2 + $0x24] sm:$0xf] %vm1313, %v1236
      %1324 = vst.msk [vmem:[#allocation2 + $0x28] sm:$0xf] %vm1313, %v1238
      %1325 = vst.msk [vmem:[#allocation2 + $0x2c] sm:$0xf] %vm1313, %v1240
      %1326 = vst.msk [vmem:[#allocation2 + $0x30] sm:$0xf] %vm1313, %v1242
      %1327 = vst.msk [vmem:[#allocation2 + $0x34] sm:$0xf] %vm1313, %v1244
      %1328 = vst.msk [vmem:[#allocation2 + $0x38] sm:$0xf] %vm1313, %v1246
      %1329 = vst.msk [vmem:[#allocation2 + $0x3c] sm:$0xf] %vm1313, %v1248
      %1330 = vst.msk [vmem:[#allocation2 + $0x40] sm:$0xf] %vm1313, %v1250
      %1331 = vst.msk [vmem:[#allocation2 + $0x44] sm:$0xf] %vm1313, %v1252
      %1332 = vst.msk [vmem:[#allocation2 + $0x48] sm:$0xf] %vm1313, %v1254
      %1333 = vst.msk [vmem:[#allocation2 + $0x4c] sm:$0xf] %vm1313, %v1256
      %1334 = vst.msk [vmem:[#allocation2 + $0x50] sm:$0xf] %vm1313, %v1258
      %1335 = vst.msk [vmem:[#allocation2 + $0x54] sm:$0xf] %vm1313, %v1260
      %1336 = vst.msk [vmem:[#allocation2 + $0x58] sm:$0xf] %vm1313, %v1262
      %1337 = vst.msk [vmem:[#allocation2 + $0x5c] sm:$0xf] %vm1313, %v1264
      %1338 = vst.msk [vmem:[#allocation2 + $0x60] sm:$0xf] %vm1313, %v1266
      %1339 = vst.msk [vmem:[#allocation2 + $0x64] sm:$0xf] %vm1313, %v1268
      %1340 = vst.msk [vmem:[#allocation2 + $0x68] sm:$0xf] %vm1313, %v1270
      %1341 = vst.msk [vmem:[#allocation2 + $0x6c] sm:$0xf] %vm1313, %v1272
      %1342 = vst.msk [vmem:[#allocation2 + $0x70] sm:$0xf] %vm1313, %v1274
      %1343 = vst.msk [vmem:[#allocation2 + $0x74] sm:$0xf] %vm1313, %v1276
      %1344 = vst.msk [vmem:[#allocation2 + $0x78] sm:$0xf] %vm1313, %v1278
      %1345 = vst.msk [vmem:[#allocation2 + $0x7c] sm:$0xf] %vm1313, %v1280
      %v1346 = vld [vmem:[%s1152] sm:$0xf]
      %v1347 = vld [vmem:[%s1152 + $0x4] sm:$0xf]
      %v1348 = vld [vmem:[%s1152 + $0x8] sm:$0x1]
      %v1349 = vld [vmem:[%s1152 + $0xc] sm:$0xf]
      %v1350 = vld [vmem:[%s1152 + $0x10] sm:$0xf]
      %v1351 = vld [vmem:[%s1152 + $0x14] sm:$0x1]
      %v1352 = vld [vmem:[%s1152 + $0x18] sm:$0xf]
      %v1353 = vld [vmem:[%s1152 + $0x1c] sm:$0xf]
      %v1354 = vld [vmem:[%s1152 + $0x20] sm:$0x1]
      %v1355 = vld [vmem:[%s1152 + $0x24] sm:$0xf]
      %v1356 = vld [vmem:[%s1152 + $0x28] sm:$0xf]
      %v1357 = vld [vmem:[%s1152 + $0x2c] sm:$0x1]
      %v1358 = vld [vmem:[%s1152 + $0x30] sm:$0xf]
      %v1359 = vld [vmem:[%s1152 + $0x34] sm:$0xf]
      %v1360 = vld [vmem:[%s1152 + $0x38] sm:$0x1]
      %v1361 = vld [vmem:[%s1152 + $0x3c] sm:$0xf]
      %v1362 = vld [vmem:[%s1152 + $0x40] sm:$0xf]
      %v1363 = vld [vmem:[%s1152 + $0x44] sm:$0x1]
      %v1364 = vld [vmem:[%s1152 + $0x48] sm:$0xf]
      %v1365 = vld [vmem:[%s1152 + $0x4c] sm:$0xf]
      %v1366 = vld [vmem:[%s1152 + $0x50] sm:$0x1]
      %v1367 = vld [vmem:[%s1152 + $0x54] sm:$0xf]
      %v1368 = vld [vmem:[%s1152 + $0x58] sm:$0xf]
      %v1369 = vld [vmem:[%s1152 + $0x5c] sm:$0x1]
      %v1370 = vld [vmem:[%s1152 + $0x60] sm:$0xf]
      %v1371 = vld [vmem:[%s1152 + $0x64] sm:$0xf]
      %v1372 = vld [vmem:[%s1152 + $0x68] sm:$0x1]
      %v1373 = vld [vmem:[%s1152 + $0x6c] sm:$0xf]
      %v1374 = vld [vmem:[%s1152 + $0x70] sm:$0xf]
      %v1375 = vld [vmem:[%s1152 + $0x74] sm:$0x1]
      %v1376 = vld [vmem:[%s1152 + $0x78] sm:$0xf]
      %v1377 = vld [vmem:[%s1152 + $0x7c] sm:$0xf]
      %v1378 = vld [vmem:[%s1152 + $0x80] sm:$0x1]
      %v1379 = vld [vmem:[%s1152 + $0x84] sm:$0xf]
      %v1380 = vld [vmem:[%s1152 + $0x88] sm:$0xf]
      %v1381 = vld [vmem:[%s1152 + $0x8c] sm:$0x1]
      %v1382 = vld [vmem:[%s1152 + $0x90] sm:$0xf]
      %v1383 = vld [vmem:[%s1152 + $0x94] sm:$0xf]
      %v1384 = vld [vmem:[%s1152 + $0x98] sm:$0x1]
      %v1385 = vld [vmem:[%s1152 + $0x9c] sm:$0xf]
      %v1386 = vld [vmem:[%s1152 + $0xa0] sm:$0xf]
      %v1387 = vld [vmem:[%s1152 + $0xa4] sm:$0x1]
      %v1388 = vld [vmem:[%s1152 + $0xa8] sm:$0xf]
      %v1389 = vld [vmem:[%s1152 + $0xac] sm:$0xf]
      %v1390 = vld [vmem:[%s1152 + $0xb0] sm:$0x1]
      %v1391 = vld [vmem:[%s1152 + $0xb4] sm:$0xf]
      %v1392 = vld [vmem:[%s1152 + $0xb8] sm:$0xf]
      %v1393 = vld [vmem:[%s1152 + $0xbc] sm:$0x1]
      %v1395 = vshrl.u32 %v1346, 16
      %v1397 = vrot.slane %v1395, 4
      %v1398 = vshll.u32 %v1346, 16
      %v1400 = vrot.slane %v1398, 5
      %v1401 = vor.u32 %v1397, %v1400
      %v1402 = vrot.slane %v1401, 4
      %v1404 = vshll.u32 %v1347, 16
      %v1406 = vrot.slane %v1404, 5
      %v1407 = vsel %vm298, %v1402, %v1406
      %v1408 = vshrl.u32 %v1347, 16
      %v1410 = vrot.slane %v1408, 4
      %v1411 = vor.u32 %v1410, %v1406
      %v1412 = vrot.slane %v1411, 4
      %v1414 = vshll.u32 %v1348, 16
      %v1416 = vrot.slane %v1414, 5
      %v1417 = vsel %vm298, %v1412, %v1416
      %v1419 = vshrl.u32 %v1349, 16
      %v1421 = vrot.slane %v1419, 4
      %v1422 = vshll.u32 %v1349, 16
      %v1424 = vrot.slane %v1422, 5
      %v1425 = vor.u32 %v1421, %v1424
      %v1426 = vrot.slane %v1425, 4
      %v1428 = vshll.u32 %v1350, 16
      %v1430 = vrot.slane %v1428, 5
      %v1431 = vsel %vm298, %v1426, %v1430
      %v1432 = vshrl.u32 %v1350, 16
      %v1434 = vrot.slane %v1432, 4
      %v1435 = vor.u32 %v1434, %v1430
      %v1436 = vrot.slane %v1435, 4
      %v1438 = vshll.u32 %v1351, 16
      %v1440 = vrot.slane %v1438, 5
      %v1441 = vsel %vm298, %v1436, %v1440
      %v1443 = vshrl.u32 %v1352, 16
      %v1445 = vrot.slane %v1443, 4
      %v1446 = vshll.u32 %v1352, 16
      %v1448 = vrot.slane %v1446, 5
      %v1449 = vor.u32 %v1445, %v1448
      %v1450 = vrot.slane %v1449, 4
      %v1452 = vshll.u32 %v1353, 16
      %v1454 = vrot.slane %v1452, 5
      %v1455 = vsel %vm298, %v1450, %v1454
      %v1456 = vshrl.u32 %v1353, 16
      %v1458 = vrot.slane %v1456, 4
      %v1459 = vor.u32 %v1458, %v1454
      %v1460 = vrot.slane %v1459, 4
      %v1462 = vshll.u32 %v1354, 16
      %v1464 = vrot.slane %v1462, 5
      %v1465 = vsel %vm298, %v1460, %v1464
      %v1467 = vshrl.u32 %v1355, 16
      %v1469 = vrot.slane %v1467, 4
      %v1470 = vshll.u32 %v1355, 16
      %v1472 = vrot.slane %v1470, 5
      %v1473 = vor.u32 %v1469, %v1472
      %v1474 = vrot.slane %v1473, 4
      %v1476 = vshll.u32 %v1356, 16
      %v1478 = vrot.slane %v1476, 5
      %v1479 = vsel %vm298, %v1474, %v1478
      %v1480 = vshrl.u32 %v1356, 16
      %v1482 = vrot.slane %v1480, 4
      %v1483 = vor.u32 %v1482, %v1478
      %v1484 = vrot.slane %v1483, 4
      %v1486 = vshll.u32 %v1357, 16
      %v1488 = vrot.slane %v1486, 5
      %v1489 = vsel %vm298, %v1484, %v1488
      %v1491 = vshrl.u32 %v1358, 16
      %v1493 = vrot.slane %v1491, 4
      %v1494 = vshll.u32 %v1358, 16
      %v1496 = vrot.slane %v1494, 5
      %v1497 = vor.u32 %v1493, %v1496
      %v1498 = vrot.slane %v1497, 4
      %v1500 = vshll.u32 %v1359, 16
      %v1502 = vrot.slane %v1500, 5
      %v1503 = vsel %vm298, %v1498, %v1502
      %v1504 = vshrl.u32 %v1359, 16
      %v1506 = vrot.slane %v1504, 4
      %v1507 = vor.u32 %v1506, %v1502
      %v1508 = vrot.slane %v1507, 4
      %v1510 = vshll.u32 %v1360, 16
      %v1512 = vrot.slane %v1510, 5
      %v1513 = vsel %vm298, %v1508, %v1512
      %v1515 = vshrl.u32 %v1361, 16
      %v1517 = vrot.slane %v1515, 4
      %v1518 = vshll.u32 %v1361, 16
      %v1520 = vrot.slane %v1518, 5
      %v1521 = vor.u32 %v1517, %v1520
      %v1522 = vrot.slane %v1521, 4
      %v1524 = vshll.u32 %v1362, 16
      %v1526 = vrot.slane %v1524, 5
      %v1527 = vsel %vm298, %v1522, %v1526
      %v1528 = vshrl.u32 %v1362, 16
      %v1530 = vrot.slane %v1528, 4
      %v1531 = vor.u32 %v1530, %v1526
      %v1532 = vrot.slane %v1531, 4
      %v1534 = vshll.u32 %v1363, 16
      %v1536 = vrot.slane %v1534, 5
      %v1537 = vsel %vm298, %v1532, %v1536
      %v1539 = vshrl.u32 %v1364, 16
      %v1541 = vrot.slane %v1539, 4
      %v1542 = vshll.u32 %v1364, 16
      %v1544 = vrot.slane %v1542, 5
      %v1545 = vor.u32 %v1541, %v1544
      %v1546 = vrot.slane %v1545, 4
      %v1548 = vshll.u32 %v1365, 16
      %v1550 = vrot.slane %v1548, 5
      %v1551 = vsel %vm298, %v1546, %v1550
      %v1552 = vshrl.u32 %v1365, 16
      %v1554 = vrot.slane %v1552, 4
      %v1555 = vor.u32 %v1554, %v1550
      %v1556 = vrot.slane %v1555, 4
      %v1558 = vshll.u32 %v1366, 16
      %v1560 = vrot.slane %v1558, 5
      %v1561 = vsel %vm298, %v1556, %v1560
      %v1563 = vshrl.u32 %v1367, 16
      %v1565 = vrot.slane %v1563, 4
      %v1566 = vshll.u32 %v1367, 16
      %v1568 = vrot.slane %v1566, 5
      %v1569 = vor.u32 %v1565, %v1568
      %v1570 = vrot.slane %v1569, 4
      %v1572 = vshll.u32 %v1368, 16
      %v1574 = vrot.slane %v1572, 5
      %v1575 = vsel %vm298, %v1570, %v1574
      %v1576 = vshrl.u32 %v1368, 16
      %v1578 = vrot.slane %v1576, 4
      %v1579 = vor.u32 %v1578, %v1574
      %v1580 = vrot.slane %v1579, 4
      %v1582 = vshll.u32 %v1369, 16
      %v1584 = vrot.slane %v1582, 5
      %v1585 = vsel %vm298, %v1580, %v1584
      %v1587 = vshrl.u32 %v1370, 16
      %v1589 = vrot.slane %v1587, 4
      %v1590 = vshll.u32 %v1370, 16
      %v1592 = vrot.slane %v1590, 5
      %v1593 = vor.u32 %v1589, %v1592
      %v1594 = vrot.slane %v1593, 4
      %v1596 = vshll.u32 %v1371, 16
      %v1598 = vrot.slane %v1596, 5
      %v1599 = vsel %vm298, %v1594, %v1598
      %v1600 = vshrl.u32 %v1371, 16
      %v1602 = vrot.slane %v1600, 4
      %v1603 = vor.u32 %v1602, %v1598
      %v1604 = vrot.slane %v1603, 4
      %v1606 = vshll.u32 %v1372, 16
      %v1608 = vrot.slane %v1606, 5
      %v1609 = vsel %vm298, %v1604, %v1608
      %v1611 = vshrl.u32 %v1373, 16
      %v1613 = vrot.slane %v1611, 4
      %v1614 = vshll.u32 %v1373, 16
      %v1616 = vrot.slane %v1614, 5
      %v1617 = vor.u32 %v1613, %v1616
      %v1618 = vrot.slane %v1617, 4
      %v1620 = vshll.u32 %v1374, 16
      %v1622 = vrot.slane %v1620, 5
      %v1623 = vsel %vm298, %v1618, %v1622
      %v1624 = vshrl.u32 %v1374, 16
      %v1626 = vrot.slane %v1624, 4
      %v1627 = vor.u32 %v1626, %v1622
      %v1628 = vrot.slane %v1627, 4
      %v1630 = vshll.u32 %v1375, 16
      %v1632 = vrot.slane %v1630, 5
      %v1633 = vsel %vm298, %v1628, %v1632
      %v1635 = vshrl.u32 %v1376, 16
      %v1637 = vrot.slane %v1635, 4
      %v1638 = vshll.u32 %v1376, 16
      %v1640 = vrot.slane %v1638, 5
      %v1641 = vor.u32 %v1637, %v1640
      %v1642 = vrot.slane %v1641, 4
      %v1644 = vshll.u32 %v1377, 16
      %v1646 = vrot.slane %v1644, 5
      %v1647 = vsel %vm298, %v1642, %v1646
      %v1648 = vshrl.u32 %v1377, 16
      %v1650 = vrot.slane %v1648, 4
      %v1651 = vor.u32 %v1650, %v1646
      %v1652 = vrot.slane %v1651, 4
      %v1654 = vshll.u32 %v1378, 16
      %v1656 = vrot.slane %v1654, 5
      %v1657 = vsel %vm298, %v1652, %v1656
      %v1659 = vshrl.u32 %v1379, 16
      %v1661 = vrot.slane %v1659, 4
      %v1662 = vshll.u32 %v1379, 16
      %v1664 = vrot.slane %v1662, 5
      %v1665 = vor.u32 %v1661, %v1664
      %v1666 = vrot.slane %v1665, 4
      %v1668 = vshll.u32 %v1380, 16
      %v1670 = vrot.slane %v1668, 5
      %v1671 = vsel %vm298, %v1666, %v1670
      %v1672 = vshrl.u32 %v1380, 16
      %v1674 = vrot.slane %v1672, 4
      %v1675 = vor.u32 %v1674, %v1670
      %v1676 = vrot.slane %v1675, 4
      %v1678 = vshll.u32 %v1381, 16
      %v1680 = vrot.slane %v1678, 5
      %v1681 = vsel %vm298, %v1676, %v1680
      %v1683 = vshrl.u32 %v1382, 16
      %v1685 = vrot.slane %v1683, 4
      %v1686 = vshll.u32 %v1382, 16
      %v1688 = vrot.slane %v1686, 5
      %v1689 = vor.u32 %v1685, %v1688
      %v1690 = vrot.slane %v1689, 4
      %v1692 = vshll.u32 %v1383, 16
      %v1694 = vrot.slane %v1692, 5
      %v1695 = vsel %vm298, %v1690, %v1694
      %v1696 = vshrl.u32 %v1383, 16
      %v1698 = vrot.slane %v1696, 4
      %v1699 = vor.u32 %v1698, %v1694
      %v1700 = vrot.slane %v1699, 4
      %v1702 = vshll.u32 %v1384, 16
      %v1704 = vrot.slane %v1702, 5
      %v1705 = vsel %vm298, %v1700, %v1704
      %v1707 = vshrl.u32 %v1385, 16
      %v1709 = vrot.slane %v1707, 4
      %v1710 = vshll.u32 %v1385, 16
      %v1712 = vrot.slane %v1710, 5
      %v1713 = vor.u32 %v1709, %v1712
      %v1714 = vrot.slane %v1713, 4
      %v1716 = vshll.u32 %v1386, 16
      %v1718 = vrot.slane %v1716, 5
      %v1719 = vsel %vm298, %v1714, %v1718
      %v1720 = vshrl.u32 %v1386, 16
      %v1722 = vrot.slane %v1720, 4
      %v1723 = vor.u32 %v1722, %v1718
      %v1724 = vrot.slane %v1723, 4
      %v1726 = vshll.u32 %v1387, 16
      %v1728 = vrot.slane %v1726, 5
      %v1729 = vsel %vm298, %v1724, %v1728
      %v1731 = vshrl.u32 %v1388, 16
      %v1733 = vrot.slane %v1731, 4
      %v1734 = vshll.u32 %v1388, 16
      %v1736 = vrot.slane %v1734, 5
      %v1737 = vor.u32 %v1733, %v1736
      %v1738 = vrot.slane %v1737, 4
      %v1740 = vshll.u32 %v1389, 16
      %v1742 = vrot.slane %v1740, 5
      %v1743 = vsel %vm298, %v1738, %v1742
      %v1744 = vshrl.u32 %v1389, 16
      %v1746 = vrot.slane %v1744, 4
      %v1747 = vor.u32 %v1746, %v1742
      %v1748 = vrot.slane %v1747, 4
      %v1750 = vshll.u32 %v1390, 16
      %v1752 = vrot.slane %v1750, 5
      %v1753 = vsel %vm298, %v1748, %v1752
      %v1755 = vshrl.u32 %v1391, 16
      %v1757 = vrot.slane %v1755, 4
      %v1758 = vshll.u32 %v1391, 16
      %v1760 = vrot.slane %v1758, 5
      %v1761 = vor.u32 %v1757, %v1760
      %v1762 = vrot.slane %v1761, 4
      %v1764 = vshll.u32 %v1392, 16
      %v1766 = vrot.slane %v1764, 5
      %v1767 = vsel %vm298, %v1762, %v1766
      %v1768 = vshrl.u32 %v1392, 16
      %v1770 = vrot.slane %v1768, 4
      %v1771 = vor.u32 %v1770, %v1766
      %v1772 = vrot.slane %v1771, 4
      %v1774 = vshll.u32 %v1393, 16
      %v1776 = vrot.slane %v1774, 5
      %v1777 = vsel %vm298, %v1772, %v1776
      %1778 = vrot.lane.b32.xlu0 %v1407, 32
      %v1779 = vpop.permute.xlu0 %1778
      %1780 = vrot.lane.b32.xlu0 %v1417, 32
      %v1781 = vpop.permute.xlu0 %1780
      %1782 = vrot.lane.b32.xlu0 %v1431, 32
      %v1783 = vpop.permute.xlu0 %1782
      %1784 = vrot.lane.b32.xlu0 %v1441, 32
      %v1785 = vpop.permute.xlu0 %1784
      %1786 = vrot.lane.b32.xlu0 %v1455, 32
      %v1787 = vpop.permute.xlu0 %1786
      %1788 = vrot.lane.b32.xlu0 %v1465, 32
      %v1789 = vpop.permute.xlu0 %1788
      %1790 = vrot.lane.b32.xlu0 %v1479, 32
      %v1791 = vpop.permute.xlu0 %1790
      %1792 = vrot.lane.b32.xlu0 %v1489, 32
      %v1793 = vpop.permute.xlu0 %1792
      %1794 = vrot.lane.b32.xlu0 %v1503, 32
      %v1795 = vpop.permute.xlu0 %1794
      %1796 = vrot.lane.b32.xlu0 %v1513, 32
      %v1797 = vpop.permute.xlu0 %1796
      %1798 = vrot.lane.b32.xlu0 %v1527, 32
      %v1799 = vpop.permute.xlu0 %1798
      %1800 = vrot.lane.b32.xlu0 %v1537, 32
      %v1801 = vpop.permute.xlu0 %1800
      %1802 = vrot.lane.b32.xlu0 %v1551, 32
      %v1803 = vpop.permute.xlu0 %1802
      %1804 = vrot.lane.b32.xlu0 %v1561, 32
      %v1805 = vpop.permute.xlu0 %1804
      %1806 = vrot.lane.b32.xlu0 %v1575, 32
      %v1807 = vpop.permute.xlu0 %1806
      %1808 = vrot.lane.b32.xlu0 %v1585, 32
      %v1809 = vpop.permute.xlu0 %1808
      %1810 = vrot.lane.b32.xlu0 %v1599, 32
      %v1811 = vpop.permute.xlu0 %1810
      %1812 = vrot.lane.b32.xlu0 %v1609, 32
      %v1813 = vpop.permute.xlu0 %1812
      %1814 = vrot.lane.b32.xlu0 %v1623, 32
      %v1815 = vpop.permute.xlu0 %1814
      %1816 = vrot.lane.b32.xlu0 %v1633, 32
      %v1817 = vpop.permute.xlu0 %1816
      %1818 = vrot.lane.b32.xlu0 %v1647, 32
      %v1819 = vpop.permute.xlu0 %1818
      %1820 = vrot.lane.b32.xlu0 %v1657, 32
      %v1821 = vpop.permute.xlu0 %1820
      %1822 = vrot.lane.b32.xlu0 %v1671, 32
      %v1823 = vpop.permute.xlu0 %1822
      %1824 = vrot.lane.b32.xlu0 %v1681, 32
      %v1825 = vpop.permute.xlu0 %1824
      %1826 = vrot.lane.b32.xlu0 %v1695, 32
      %v1827 = vpop.permute.xlu0 %1826
      %1828 = vrot.lane.b32.xlu0 %v1705, 32
      %v1829 = vpop.permute.xlu0 %1828
      %1830 = vrot.lane.b32.xlu0 %v1719, 32
      %v1831 = vpop.permute.xlu0 %1830
      %1832 = vrot.lane.b32.xlu0 %v1729, 32
      %v1833 = vpop.permute.xlu0 %1832
      %1834 = vrot.lane.b32.xlu0 %v1743, 32
      %v1835 = vpop.permute.xlu0 %1834
      %1836 = vrot.lane.b32.xlu0 %v1753, 32
      %v1837 = vpop.permute.xlu0 %1836
      %1838 = vrot.lane.b32.xlu0 %v1767, 32
      %v1839 = vpop.permute.xlu0 %1838
      %1840 = vrot.lane.b32.xlu0 %v1777, 32
      %v1841 = vpop.permute.xlu0 %1840
      %vm1874 = vcmask 322816
      %1875 = vst.msk [vmem:[#allocation2] sm:$0xf] %vm1874, %v1779
      %1876 = vst.msk [vmem:[#allocation2 + $0x4] sm:$0xf] %vm1874, %v1781
      %1877 = vst.msk [vmem:[#allocation2 + $0x8] sm:$0xf] %vm1874, %v1783
      %1878 = vst.msk [vmem:[#allocation2 + $0xc] sm:$0xf] %vm1874, %v1785
      %1879 = vst.msk [vmem:[#allocation2 + $0x10] sm:$0xf] %vm1874, %v1787
      %1880 = vst.msk [vmem:[#allocation2 + $0x14] sm:$0xf] %vm1874, %v1789
      %1881 = vst.msk [vmem:[#allocation2 + $0x18] sm:$0xf] %vm1874, %v1791
      %1882 = vst.msk [vmem:[#allocation2 + $0x1c] sm:$0xf] %vm1874, %v1793
      %1883 = vst.msk [vmem:[#allocation2 + $0x20] sm:$0xf] %vm1874, %v1795
      %1884 = vst.msk [vmem:[#allocation2 + $0x24] sm:$0xf] %vm1874, %v1797
      %1885 = vst.msk [vmem:[#allocation2 + $0x28] sm:$0xf] %vm1874, %v1799
      %1886 = vst.msk [vmem:[#allocation2 + $0x2c] sm:$0xf] %vm1874, %v1801
      %1887 = vst.msk [vmem:[#allocation2 + $0x30] sm:$0xf] %vm1874, %v1803
      %1888 = vst.msk [vmem:[#allocation2 + $0x34] sm:$0xf] %vm1874, %v1805
      %1889 = vst.msk [vmem:[#allocation2 + $0x38] sm:$0xf] %vm1874, %v1807
      %1890 = vst.msk [vmem:[#allocation2 + $0x3c] sm:$0xf] %vm1874, %v1809
      %1891 = vst.msk [vmem:[#allocation2 + $0x40] sm:$0xf] %vm1874, %v1811
      %1892 = vst.msk [vmem:[#allocation2 + $0x44] sm:$0xf] %vm1874, %v1813
      %1893 = vst.msk [vmem:[#allocation2 + $0x48] sm:$0xf] %vm1874, %v1815
      %1894 = vst.msk [vmem:[#allocation2 + $0x4c] sm:$0xf] %vm1874, %v1817
      %1895 = vst.msk [vmem:[#allocation2 + $0x50] sm:$0xf] %vm1874, %v1819
      %1896 = vst.msk [vmem:[#allocation2 + $0x54] sm:$0xf] %vm1874, %v1821
      %1897 = vst.msk [vmem:[#allocation2 + $0x58] sm:$0xf] %vm1874, %v1823
      %1898 = vst.msk [vmem:[#allocation2 + $0x5c] sm:$0xf] %vm1874, %v1825
      %1899 = vst.msk [vmem:[#allocation2 + $0x60] sm:$0xf] %vm1874, %v1827
      %1900 = vst.msk [vmem:[#allocation2 + $0x64] sm:$0xf] %vm1874, %v1829
      %1901 = vst.msk [vmem:[#allocation2 + $0x68] sm:$0xf] %vm1874, %v1831
      %1902 = vst.msk [vmem:[#allocation2 + $0x6c] sm:$0xf] %vm1874, %v1833
      %1903 = vst.msk [vmem:[#allocation2 + $0x70] sm:$0xf] %vm1874, %v1835
      %1904 = vst.msk [vmem:[#allocation2 + $0x74] sm:$0xf] %vm1874, %v1837
      %1905 = vst.msk [vmem:[#allocation2 + $0x78] sm:$0xf] %vm1874, %v1839
      %1906 = vst.msk [vmem:[#allocation2 + $0x7c] sm:$0xf] %vm1874, %v1841
      %v1907 = vld [vmem:[%s1152] sm:$0xe]
      %v1908 = vld [vmem:[%s1152 + $0x4] sm:$0xf]
      %v1909 = vld [vmem:[%s1152 + $0x8] sm:$0x1]
      %v1910 = vld [vmem:[%s1152 + $0xc] sm:$0xe]
      %v1911 = vld [vmem:[%s1152 + $0x10] sm:$0xf]
      %v1912 = vld [vmem:[%s1152 + $0x14] sm:$0x1]
      %v1913 = vld [vmem:[%s1152 + $0x18] sm:$0xe]
      %v1914 = vld [vmem:[%s1152 + $0x1c] sm:$0xf]
      %v1915 = vld [vmem:[%s1152 + $0x20] sm:$0x1]
      %v1916 = vld [vmem:[%s1152 + $0x24] sm:$0xe]
      %v1917 = vld [vmem:[%s1152 + $0x28] sm:$0xf]
      %v1918 = vld [vmem:[%s1152 + $0x2c] sm:$0x1]
      %v1919 = vld [vmem:[%s1152 + $0x30] sm:$0xe]
      %v1920 = vld [vmem:[%s1152 + $0x34] sm:$0xf]
      %v1921 = vld [vmem:[%s1152 + $0x38] sm:$0x1]
      %v1922 = vld [vmem:[%s1152 + $0x3c] sm:$0xe]
      %v1923 = vld [vmem:[%s1152 + $0x40] sm:$0xf]
      %v1924 = vld [vmem:[%s1152 + $0x44] sm:$0x1]
      %v1925 = vld [vmem:[%s1152 + $0x48] sm:$0xe]
      %v1926 = vld [vmem:[%s1152 + $0x4c] sm:$0xf]
      %v1927 = vld [vmem:[%s1152 + $0x50] sm:$0x1]
      %v1928 = vld [vmem:[%s1152 + $0x54] sm:$0xe]
      %v1929 = vld [vmem:[%s1152 + $0x58] sm:$0xf]
      %v1930 = vld [vmem:[%s1152 + $0x5c] sm:$0x1]
      %v1931 = vld [vmem:[%s1152 + $0x60] sm:$0xe]
      %v1932 = vld [vmem:[%s1152 + $0x64] sm:$0xf]
      %v1933 = vld [vmem:[%s1152 + $0x68] sm:$0x1]
      %v1934 = vld [vmem:[%s1152 + $0x6c] sm:$0xe]
      %v1935 = vld [vmem:[%s1152 + $0x70] sm:$0xf]
      %v1936 = vld [vmem:[%s1152 + $0x74] sm:$0x1]
      %v1937 = vld [vmem:[%s1152 + $0x78] sm:$0xe]
      %v1938 = vld [vmem:[%s1152 + $0x7c] sm:$0xf]
      %v1939 = vld [vmem:[%s1152 + $0x80] sm:$0x1]
      %v1940 = vld [vmem:[%s1152 + $0x84] sm:$0xe]
      %v1941 = vld [vmem:[%s1152 + $0x88] sm:$0xf]
      %v1942 = vld [vmem:[%s1152 + $0x8c] sm:$0x1]
      %v1943 = vld [vmem:[%s1152 + $0x90] sm:$0xe]
      %v1944 = vld [vmem:[%s1152 + $0x94] sm:$0xf]
      %v1945 = vld [vmem:[%s1152 + $0x98] sm:$0x1]
      %v1946 = vld [vmem:[%s1152 + $0x9c] sm:$0xe]
      %v1947 = vld [vmem:[%s1152 + $0xa0] sm:$0xf]
      %v1948 = vld [vmem:[%s1152 + $0xa4] sm:$0x1]
      %v1949 = vld [vmem:[%s1152 + $0xa8] sm:$0xe]
      %v1950 = vld [vmem:[%s1152 + $0xac] sm:$0xf]
      %v1951 = vld [vmem:[%s1152 + $0xb0] sm:$0x1]
      %v1952 = vld [vmem:[%s1152 + $0xb4] sm:$0xe]
      %v1953 = vld [vmem:[%s1152 + $0xb8] sm:$0xf]
      %v1954 = vld [vmem:[%s1152 + $0xbc] sm:$0x1]
      %v2003 = vrot.slane %v1907, 5
      %v2004 = vrot.slane %v2003, 4
      %v2005 = vrot.slane %v1908, 5
      %v2006 = vsel %vm910, %v2004, %v2005
      %v2007 = vrot.slane %v2005, 4
      %v2008 = vrot.slane %v1909, 5
      %v2009 = vsel %vm910, %v2007, %v2008
      %v2010 = vrot.slane %v1910, 5
      %v2011 = vrot.slane %v2010, 4
      %v2012 = vrot.slane %v1911, 5
      %v2013 = vsel %vm910, %v2011, %v2012
      %v2014 = vrot.slane %v2012, 4
      %v2015 = vrot.slane %v1912, 5
      %v2016 = vsel %vm910, %v2014, %v2015
      %v2017 = vrot.slane %v1913, 5
      %v2018 = vrot.slane %v2017, 4
      %v2019 = vrot.slane %v1914, 5
      %v2020 = vsel %vm910, %v2018, %v2019
      %v2021 = vrot.slane %v2019, 4
      %v2022 = vrot.slane %v1915, 5
      %v2023 = vsel %vm910, %v2021, %v2022
      %v2024 = vrot.slane %v1916, 5
      %v2025 = vrot.slane %v2024, 4
      %v2026 = vrot.slane %v1917, 5
      %v2027 = vsel %vm910, %v2025, %v2026
      %v2028 = vrot.slane %v2026, 4
      %v2029 = vrot.slane %v1918, 5
      %v2030 = vsel %vm910, %v2028, %v2029
      %v2031 = vrot.slane %v1919, 5
      %v2032 = vrot.slane %v2031, 4
      %v2033 = vrot.slane %v1920, 5
      %v2034 = vsel %vm910, %v2032, %v2033
      %v2035 = vrot.slane %v2033, 4
      %v2036 = vrot.slane %v1921, 5
      %v2037 = vsel %vm910, %v2035, %v2036
      %v2038 = vrot.slane %v1922, 5
      %v2039 = vrot.slane %v2038, 4
      %v2040 = vrot.slane %v1923, 5
      %v2041 = vsel %vm910, %v2039, %v2040
      %v2042 = vrot.slane %v2040, 4
      %v2043 = vrot.slane %v1924, 5
      %v2044 = vsel %vm910, %v2042, %v2043
      %v2045 = vrot.slane %v1925, 5
      %v2046 = vrot.slane %v2045, 4
      %v2047 = vrot.slane %v1926, 5
      %v2048 = vsel %vm910, %v2046, %v2047
      %v2049 = vrot.slane %v2047, 4
      %v2050 = vrot.slane %v1927, 5
      %v2051 = vsel %vm910, %v2049, %v2050
      %v2052 = vrot.slane %v1928, 5
      %v2053 = vrot.slane %v2052, 4
      %v2054 = vrot.slane %v1929, 5
      %v2055 = vsel %vm910, %v2053, %v2054
      %v2056 = vrot.slane %v2054, 4
      %v2057 = vrot.slane %v1930, 5
      %v2058 = vsel %vm910, %v2056, %v2057
      %v2059 = vrot.slane %v1931, 5
      %v2060 = vrot.slane %v2059, 4
      %v2061 = vrot.slane %v1932, 5
      %v2062 = vsel %vm910, %v2060, %v2061
      %v2063 = vrot.slane %v2061, 4
      %v2064 = vrot.slane %v1933, 5
      %v2065 = vsel %vm910, %v2063, %v2064
      %v2066 = vrot.slane %v1934, 5
      %v2067 = vrot.slane %v2066, 4
      %v2068 = vrot.slane %v1935, 5
      %v2069 = vsel %vm910, %v2067, %v2068
      %v2070 = vrot.slane %v2068, 4
      %v2071 = vrot.slane %v1936, 5
      %v2072 = vsel %vm910, %v2070, %v2071
      %v2073 = vrot.slane %v1937, 5
      %v2074 = vrot.slane %v2073, 4
      %v2075 = vrot.slane %v1938, 5
      %v2076 = vsel %vm910, %v2074, %v2075
      %v2077 = vrot.slane %v2075, 4
      %v2078 = vrot.slane %v1939, 5
      %v2079 = vsel %vm910, %v2077, %v2078
      %v2080 = vrot.slane %v1940, 5
      %v2081 = vrot.slane %v2080, 4
      %v2082 = vrot.slane %v1941, 5
      %v2083 = vsel %vm910, %v2081, %v2082
      %v2084 = vrot.slane %v2082, 4
      %v2085 = vrot.slane %v1942, 5
      %v2086 = vsel %vm910, %v2084, %v2085
      %v2087 = vrot.slane %v1943, 5
      %v2088 = vrot.slane %v2087, 4
      %v2089 = vrot.slane %v1944, 5
      %v2090 = vsel %vm910, %v2088, %v2089
      %v2091 = vrot.slane %v2089, 4
      %v2092 = vrot.slane %v1945, 5
      %v2093 = vsel %vm910, %v2091, %v2092
      %v2094 = vrot.slane %v1946, 5
      %v2095 = vrot.slane %v2094, 4
      %v2096 = vrot.slane %v1947, 5
      %v2097 = vsel %vm910, %v2095, %v2096
      %v2098 = vrot.slane %v2096, 4
      %v2099 = vrot.slane %v1948, 5
      %v2100 = vsel %vm910, %v2098, %v2099
      %v2101 = vrot.slane %v1949, 5
      %v2102 = vrot.slane %v2101, 4
      %v2103 = vrot.slane %v1950, 5
      %v2104 = vsel %vm910, %v2102, %v2103
      %v2105 = vrot.slane %v2103, 4
      %v2106 = vrot.slane %v1951, 5
      %v2107 = vsel %vm910, %v2105, %v2106
      %v2108 = vrot.slane %v1952, 5
      %v2109 = vrot.slane %v2108, 4
      %v2110 = vrot.slane %v1953, 5
      %v2111 = vsel %vm910, %v2109, %v2110
      %v2112 = vrot.slane %v2110, 4
      %v2113 = vrot.slane %v1954, 5
      %v2114 = vsel %vm910, %v2112, %v2113
      %2115 = vrot.lane.b32.xlu0 %v2006, 40
      %v2116 = vpop.permute.xlu0 %2115
      %2117 = vrot.lane.b32.xlu0 %v2009, 40
      %v2118 = vpop.permute.xlu0 %2117
      %2119 = vrot.lane.b32.xlu0 %v2013, 40
      %v2120 = vpop.permute.xlu0 %2119
      %2121 = vrot.lane.b32.xlu0 %v2016, 40
      %v2122 = vpop.permute.xlu0 %2121
      %2123 = vrot.lane.b32.xlu0 %v2020, 40
      %v2124 = vpop.permute.xlu0 %2123
      %2125 = vrot.lane.b32.xlu0 %v2023, 40
      %v2126 = vpop.permute.xlu0 %2125
      %2127 = vrot.lane.b32.xlu0 %v2027, 40
      %v2128 = vpop.permute.xlu0 %2127
      %2129 = vrot.lane.b32.xlu0 %v2030, 40
      %v2130 = vpop.permute.xlu0 %2129
      %2131 = vrot.lane.b32.xlu0 %v2034, 40
      %v2132 = vpop.permute.xlu0 %2131
      %2133 = vrot.lane.b32.xlu0 %v2037, 40
      %v2134 = vpop.permute.xlu0 %2133
      %2135 = vrot.lane.b32.xlu0 %v2041, 40
      %v2136 = vpop.permute.xlu0 %2135
      %2137 = vrot.lane.b32.xlu0 %v2044, 40
      %v2138 = vpop.permute.xlu0 %2137
      %2139 = vrot.lane.b32.xlu0 %v2048, 40
      %v2140 = vpop.permute.xlu0 %2139
      %2141 = vrot.lane.b32.xlu0 %v2051, 40
      %v2142 = vpop.permute.xlu0 %2141
      %2143 = vrot.lane.b32.xlu0 %v2055, 40
      %v2144 = vpop.permute.xlu0 %2143
      %2145 = vrot.lane.b32.xlu0 %v2058, 40
      %v2146 = vpop.permute.xlu0 %2145
      %2147 = vrot.lane.b32.xlu0 %v2062, 40
      %v2148 = vpop.permute.xlu0 %2147
      %2149 = vrot.lane.b32.xlu0 %v2065, 40
      %v2150 = vpop.permute.xlu0 %2149
      %2151 = vrot.lane.b32.xlu0 %v2069, 40
      %v2152 = vpop.permute.xlu0 %2151
      %2153 = vrot.lane.b32.xlu0 %v2072, 40
      %v2154 = vpop.permute.xlu0 %2153
      %2155 = vrot.lane.b32.xlu0 %v2076, 40
      %v2156 = vpop.permute.xlu0 %2155
      %2157 = vrot.lane.b32.xlu0 %v2079, 40
      %v2158 = vpop.permute.xlu0 %2157
      %2159 = vrot.lane.b32.xlu0 %v2083, 40
      %v2160 = vpop.permute.xlu0 %2159
      %2161 = vrot.lane.b32.xlu0 %v2086, 40
      %v2162 = vpop.permute.xlu0 %2161
      %2163 = vrot.lane.b32.xlu0 %v2090, 40
      %v2164 = vpop.permute.xlu0 %2163
      %2165 = vrot.lane.b32.xlu0 %v2093, 40
      %v2166 = vpop.permute.xlu0 %2165
      %2167 = vrot.lane.b32.xlu0 %v2097, 40
      %v2168 = vpop.permute.xlu0 %2167
      %2169 = vrot.lane.b32.xlu0 %v2100, 40
      %v2170 = vpop.permute.xlu0 %2169
      %2171 = vrot.lane.b32.xlu0 %v2104, 40
      %v2172 = vpop.permute.xlu0 %2171
      %2173 = vrot.lane.b32.xlu0 %v2107, 40
      %v2174 = vpop.permute.xlu0 %2173
      %2175 = vrot.lane.b32.xlu0 %v2111, 40
      %v2176 = vpop.permute.xlu0 %2175
      %2177 = vrot.lane.b32.xlu0 %v2114, 40
      %v2178 = vpop.permute.xlu0 %2177
      %vm2211 = vcmask 388416
      %2212 = vst.msk [vmem:[#allocation2] sm:$0xf] %vm2211, %v2116
      %2213 = vst.msk [vmem:[#allocation2 + $0x4] sm:$0xf] %vm2211, %v2118
      %2214 = vst.msk [vmem:[#allocation2 + $0x8] sm:$0xf] %vm2211, %v2120
      %2215 = vst.msk [vmem:[#allocation2 + $0xc] sm:$0xf] %vm2211, %v2122
      %2216 = vst.msk [vmem:[#allocation2 + $0x10] sm:$0xf] %vm2211, %v2124
      %2217 = vst.msk [vmem:[#allocation2 + $0x14] sm:$0xf] %vm2211, %v2126
      %2218 = vst.msk [vmem:[#allocation2 + $0x18] sm:$0xf] %vm2211, %v2128
      %2219 = vst.msk [vmem:[#allocation2 + $0x1c] sm:$0xf] %vm2211, %v2130
      %2220 = vst.msk [vmem:[#allocation2 + $0x20] sm:$0xf] %vm2211, %v2132
      %2221 = vst.msk [vmem:[#allocation2 + $0x24] sm:$0xf] %vm2211, %v2134
      %2222 = vst.msk [vmem:[#allocation2 + $0x28] sm:$0xf] %vm2211, %v2136
      %2223 = vst.msk [vmem:[#allocation2 + $0x2c] sm:$0xf] %vm2211, %v2138
      %2224 = vst.msk [vmem:[#allocation2 + $0x30] sm:$0xf] %vm2211, %v2140
      %2225 = vst.msk [vmem:[#allocation2 + $0x34] sm:$0xf] %vm2211, %v2142
      %2226 = vst.msk [vmem:[#allocation2 + $0x38] sm:$0xf] %vm2211, %v2144
      %2227 = vst.msk [vmem:[#allocation2 + $0x3c] sm:$0xf] %vm2211, %v2146
      %2228 = vst.msk [vmem:[#allocation2 + $0x40] sm:$0xf] %vm2211, %v2148
      %2229 = vst.msk [vmem:[#allocation2 + $0x44] sm:$0xf] %vm2211, %v2150
      %2230 = vst.msk [vmem:[#allocation2 + $0x48] sm:$0xf] %vm2211, %v2152
      %2231 = vst.msk [vmem:[#allocation2 + $0x4c] sm:$0xf] %vm2211, %v2154
      %2232 = vst.msk [vmem:[#allocation2 + $0x50] sm:$0xf] %vm2211, %v2156
      %2233 = vst.msk [vmem:[#allocation2 + $0x54] sm:$0xf] %vm2211, %v2158
      %2234 = vst.msk [vmem:[#allocation2 + $0x58] sm:$0xf] %vm2211, %v2160
      %2235 = vst.msk [vmem:[#allocation2 + $0x5c] sm:$0xf] %vm2211, %v2162
      %2236 = vst.msk [vmem:[#allocation2 + $0x60] sm:$0xf] %vm2211, %v2164
      %2237 = vst.msk [vmem:[#allocation2 + $0x64] sm:$0xf] %vm2211, %v2166
      %2238 = vst.msk [vmem:[#allocation2 + $0x68] sm:$0xf] %vm2211, %v2168
      %2239 = vst.msk [vmem:[#allocation2 + $0x6c] sm:$0xf] %vm2211, %v2170
      %2240 = vst.msk [vmem:[#allocation2 + $0x70] sm:$0xf] %vm2211, %v2172
      %2241 = vst.msk [vmem:[#allocation2 + $0x74] sm:$0xf] %vm2211, %v2174
      %2242 = vst.msk [vmem:[#allocation2 + $0x78] sm:$0xf] %vm2211, %v2176
      %2243 = vst.msk [vmem:[#allocation2 + $0x7c] sm:$0xf] %vm2211, %v2178
      %s2244 = scalar_lea.vmem %s172, 24
      %v2245 = vld [vmem:[%s2244] sm:$0xf]
      %v2246 = vld [vmem:[%s2244 + $0x4] sm:$0xf]
      %v2247 = vld [vmem:[%s2244 + $0xc] sm:$0xf]
      %v2248 = vld [vmem:[%s2244 + $0x10] sm:$0xf]
      %v2249 = vld [vmem:[%s2244 + $0x18] sm:$0xf]
      %v2250 = vld [vmem:[%s2244 + $0x1c] sm:$0xf]
      %v2251 = vld [vmem:[%s2244 + $0x24] sm:$0xf]
      %v2252 = vld [vmem:[%s2244 + $0x28] sm:$0xf]
      %v2253 = vld [vmem:[%s2244 + $0x30] sm:$0xf]
      %v2254 = vld [vmem:[%s2244 + $0x34] sm:$0xf]
      %v2255 = vld [vmem:[%s2244 + $0x3c] sm:$0xf]
      %v2256 = vld [vmem:[%s2244 + $0x40] sm:$0xf]
      %v2257 = vld [vmem:[%s2244 + $0x48] sm:$0xf]
      %v2258 = vld [vmem:[%s2244 + $0x4c] sm:$0xf]
      %v2259 = vld [vmem:[%s2244 + $0x54] sm:$0xf]
      %v2260 = vld [vmem:[%s2244 + $0x58] sm:$0xf]
      %v2261 = vld [vmem:[%s2244 + $0x60] sm:$0xf]
      %v2262 = vld [vmem:[%s2244 + $0x64] sm:$0xf]
      %v2263 = vld [vmem:[%s2244 + $0x6c] sm:$0xf]
      %v2264 = vld [vmem:[%s2244 + $0x70] sm:$0xf]
      %v2265 = vld [vmem:[%s2244 + $0x78] sm:$0xf]
      %v2266 = vld [vmem:[%s2244 + $0x7c] sm:$0xf]
      %v2267 = vld [vmem:[%s2244 + $0x84] sm:$0xf]
      %v2268 = vld [vmem:[%s2244 + $0x88] sm:$0xf]
      %v2269 = vld [vmem:[%s2244 + $0x90] sm:$0xf]
      %v2270 = vld [vmem:[%s2244 + $0x94] sm:$0xf]
      %v2271 = vld [vmem:[%s2244 + $0x9c] sm:$0xf]
      %v2272 = vld [vmem:[%s2244 + $0xa0] sm:$0xf]
      %v2273 = vld [vmem:[%s2244 + $0xa8] sm:$0xf]
      %v2274 = vld [vmem:[%s2244 + $0xac] sm:$0xf]
      %v2275 = vld [vmem:[%s2244 + $0xb4] sm:$0xf]
      %v2276 = vld [vmem:[%s2244 + $0xb8] sm:$0xf]
      %2309 = vrot.lane.b32.xlu0 %v2245, 48
      %v2310 = vpop.permute.xlu0 %2309
      %2311 = vrot.lane.b32.xlu0 %v2246, 48
      %v2312 = vpop.permute.xlu0 %2311
      %2313 = vrot.lane.b32.xlu0 %v2247, 48
      %v2314 = vpop.permute.xlu0 %2313
      %2315 = vrot.lane.b32.xlu0 %v2248, 48
      %v2316 = vpop.permute.xlu0 %2315
      %2317 = vrot.lane.b32.xlu0 %v2249, 48
      %v2318 = vpop.permute.xlu0 %2317
      %2319 = vrot.lane.b32.xlu0 %v2250, 48
      %v2320 = vpop.permute.xlu0 %2319
      %2321 = vrot.lane.b32.xlu0 %v2251, 48
      %v2322 = vpop.permute.xlu0 %2321
      %2323 = vrot.lane.b32.xlu0 %v2252, 48
      %v2324 = vpop.permute.xlu0 %2323
      %2325 = vrot.lane.b32.xlu0 %v2253, 48
      %v2326 = vpop.permute.xlu0 %2325
      %2327 = vrot.lane.b32.xlu0 %v2254, 48
      %v2328 = vpop.permute.xlu0 %2327
      %2329 = vrot.lane.b32.xlu0 %v2255, 48
      %v2330 = vpop.permute.xlu0 %2329
      %2331 = vrot.lane.b32.xlu0 %v2256, 48
      %v2332 = vpop.permute.xlu0 %2331
      %2333 = vrot.lane.b32.xlu0 %v2257, 48
      %v2334 = vpop.permute.xlu0 %2333
      %2335 = vrot.lane.b32.xlu0 %v2258, 48
      %v2336 = vpop.permute.xlu0 %2335
      %2337 = vrot.lane.b32.xlu0 %v2259, 48
      %v2338 = vpop.permute.xlu0 %2337
      %2339 = vrot.lane.b32.xlu0 %v2260, 48
      %v2340 = vpop.permute.xlu0 %2339
      %2341 = vrot.lane.b32.xlu0 %v2261, 48
      %v2342 = vpop.permute.xlu0 %2341
      %2343 = vrot.lane.b32.xlu0 %v2262, 48
      %v2344 = vpop.permute.xlu0 %2343
      %2345 = vrot.lane.b32.xlu0 %v2263, 48
      %v2346 = vpop.permute.xlu0 %2345
      %2347 = vrot.lane.b32.xlu0 %v2264, 48
      %v2348 = vpop.permute.xlu0 %2347
      %2349 = vrot.lane.b32.xlu0 %v2265, 48
      %v2350 = vpop.permute.xlu0 %2349
      %2351 = vrot.lane.b32.xlu0 %v2266, 48
      %v2352 = vpop.permute.xlu0 %2351
      %2353 = vrot.lane.b32.xlu0 %v2267, 48
      %v2354 = vpop.permute.xlu0 %2353
      %2355 = vrot.lane.b32.xlu0 %v2268, 48
      %v2356 = vpop.permute.xlu0 %2355
      %2357 = vrot.lane.b32.xlu0 %v2269, 48
      %v2358 = vpop.permute.xlu0 %2357
      %2359 = vrot.lane.b32.xlu0 %v2270, 48
      %v2360 = vpop.permute.xlu0 %2359
      %2361 = vrot.lane.b32.xlu0 %v2271, 48
      %v2362 = vpop.permute.xlu0 %2361
      %2363 = vrot.lane.b32.xlu0 %v2272, 48
      %v2364 = vpop.permute.xlu0 %2363
      %2365 = vrot.lane.b32.xlu0 %v2273, 48
      %v2366 = vpop.permute.xlu0 %2365
      %2367 = vrot.lane.b32.xlu0 %v2274, 48
      %v2368 = vpop.permute.xlu0 %2367
      %2369 = vrot.lane.b32.xlu0 %v2275, 48
      %v2370 = vpop.permute.xlu0 %2369
      %2371 = vrot.lane.b32.xlu0 %v2276, 48
      %v2372 = vpop.permute.xlu0 %2371
      %vm2405 = vcmask 454016
      %2406 = vst.msk [vmem:[#allocation2] sm:$0xf] %vm2405, %v2310
      %2407 = vst.msk [vmem:[#allocation2 + $0x4] sm:$0xf] %vm2405, %v2312
      %2408 = vst.msk [vmem:[#allocation2 + $0x8] sm:$0xf] %vm2405, %v2314
      %2409 = vst.msk [vmem:[#allocation2 + $0xc] sm:$0xf] %vm2405, %v2316
      %2410 = vst.msk [vmem:[#allocation2 + $0x10] sm:$0xf] %vm2405, %v2318
      %2411 = vst.msk [vmem:[#allocation2 + $0x14] sm:$0xf] %vm2405, %v2320
      %2412 = vst.msk [vmem:[#allocation2 + $0x18] sm:$0xf] %vm2405, %v2322
      %2413 = vst.msk [vmem:[#allocation2 + $0x1c] sm:$0xf] %vm2405, %v2324
      %2414 = vst.msk [vmem:[#allocation2 + $0x20] sm:$0xf] %vm2405, %v2326
      %2415 = vst.msk [vmem:[#allocation2 + $0x24] sm:$0xf] %vm2405, %v2328
      %2416 = vst.msk [vmem:[#allocation2 + $0x28] sm:$0xf] %vm2405, %v2330
      %2417 = vst.msk [vmem:[#allocation2 + $0x2c] sm:$0xf] %vm2405, %v2332
      %2418 = vst.msk [vmem:[#allocation2 + $0x30] sm:$0xf] %vm2405, %v2334
      %2419 = vst.msk [vmem:[#allocation2 + $0x34] sm:$0xf] %vm2405, %v2336
      %2420 = vst.msk [vmem:[#allocation2 + $0x38] sm:$0xf] %vm2405, %v2338
      %2421 = vst.msk [vmem:[#allocation2 + $0x3c] sm:$0xf] %vm2405, %v2340
      %2422 = vst.msk [vmem:[#allocation2 + $0x40] sm:$0xf] %vm2405, %v2342
      %2423 = vst.msk [vmem:[#allocation2 + $0x44] sm:$0xf] %vm2405, %v2344
      %2424 = vst.msk [vmem:[#allocation2 + $0x48] sm:$0xf] %vm2405, %v2346
      %2425 = vst.msk [vmem:[#allocation2 + $0x4c] sm:$0xf] %vm2405, %v2348
      %2426 = vst.msk [vmem:[#allocation2 + $0x50] sm:$0xf] %vm2405, %v2350
      %2427 = vst.msk [vmem:[#allocation2 + $0x54] sm:$0xf] %vm2405, %v2352
      %2428 = vst.msk [vmem:[#allocation2 + $0x58] sm:$0xf] %vm2405, %v2354
      %2429 = vst.msk [vmem:[#allocation2 + $0x5c] sm:$0xf] %vm2405, %v2356
      %2430 = vst.msk [vmem:[#allocation2 + $0x60] sm:$0xf] %vm2405, %v2358
      %2431 = vst.msk [vmem:[#allocation2 + $0x64] sm:$0xf] %vm2405, %v2360
      %2432 = vst.msk [vmem:[#allocation2 + $0x68] sm:$0xf] %vm2405, %v2362
      %2433 = vst.msk [vmem:[#allocation2 + $0x6c] sm:$0xf] %vm2405, %v2364
      %2434 = vst.msk [vmem:[#allocation2 + $0x70] sm:$0xf] %vm2405, %v2366
      %2435 = vst.msk [vmem:[#allocation2 + $0x74] sm:$0xf] %vm2405, %v2368
      %2436 = vst.msk [vmem:[#allocation2 + $0x78] sm:$0xf] %vm2405, %v2370
      %2437 = vst.msk [vmem:[#allocation2 + $0x7c] sm:$0xf] %vm2405, %v2372
      %v2438 = vld [vmem:[%s2244] sm:$0xf]
      %v2439 = vld [vmem:[%s2244 + $0x4] sm:$0xf]
      %v2440 = vld [vmem:[%s2244 + $0x8] sm:$0x1]
      %v2441 = vld [vmem:[%s2244 + $0xc] sm:$0xf]
      %v2442 = vld [vmem:[%s2244 + $0x10] sm:$0xf]
      %v2443 = vld [vmem:[%s2244 + $0x14] sm:$0x1]
      %v2444 = vld [vmem:[%s2244 + $0x18] sm:$0xf]
      %v2445 = vld [vmem:[%s2244 + $0x1c] sm:$0xf]
      %v2446 = vld [vmem:[%s2244 + $0x20] sm:$0x1]
      %v2447 = vld [vmem:[%s2244 + $0x24] sm:$0xf]
      %v2448 = vld [vmem:[%s2244 + $0x28] sm:$0xf]
      %v2449 = vld [vmem:[%s2244 + $0x2c] sm:$0x1]
      %v2450 = vld [vmem:[%s2244 + $0x30] sm:$0xf]
      %v2451 = vld [vmem:[%s2244 + $0x34] sm:$0xf]
      %v2452 = vld [vmem:[%s2244 + $0x38] sm:$0x1]
      %v2453 = vld [vmem:[%s2244 + $0x3c] sm:$0xf]
      %v2454 = vld [vmem:[%s2244 + $0x40] sm:$0xf]
      %v2455 = vld [vmem:[%s2244 + $0x44] sm:$0x1]
      %v2456 = vld [vmem:[%s2244 + $0x48] sm:$0xf]
      %v2457 = vld [vmem:[%s2244 + $0x4c] sm:$0xf]
      %v2458 = vld [vmem:[%s2244 + $0x50] sm:$0x1]
      %v2459 = vld [vmem:[%s2244 + $0x54] sm:$0xf]
      %v2460 = vld [vmem:[%s2244 + $0x58] sm:$0xf]
      %v2461 = vld [vmem:[%s2244 + $0x5c] sm:$0x1]
      %v2462 = vld [vmem:[%s2244 + $0x60] sm:$0xf]
      %v2463 = vld [vmem:[%s2244 + $0x64] sm:$0xf]
      %v2464 = vld [vmem:[%s2244 + $0x68] sm:$0x1]
      %v2465 = vld [vmem:[%s2244 + $0x6c] sm:$0xf]
      %v2466 = vld [vmem:[%s2244 + $0x70] sm:$0xf]
      %v2467 = vld [vmem:[%s2244 + $0x74] sm:$0x1]
      %v2468 = vld [vmem:[%s2244 + $0x78] sm:$0xf]
      %v2469 = vld [vmem:[%s2244 + $0x7c] sm:$0xf]
      %v2470 = vld [vmem:[%s2244 + $0x80] sm:$0x1]
      %v2471 = vld [vmem:[%s2244 + $0x84] sm:$0xf]
      %v2472 = vld [vmem:[%s2244 + $0x88] sm:$0xf]
      %v2473 = vld [vmem:[%s2244 + $0x8c] sm:$0x1]
      %v2474 = vld [vmem:[%s2244 + $0x90] sm:$0xf]
      %v2475 = vld [vmem:[%s2244 + $0x94] sm:$0xf]
      %v2476 = vld [vmem:[%s2244 + $0x98] sm:$0x1]
      %v2477 = vld [vmem:[%s2244 + $0x9c] sm:$0xf]
      %v2478 = vld [vmem:[%s2244 + $0xa0] sm:$0xf]
      %v2479 = vld [vmem:[%s2244 + $0xa4] sm:$0x1]
      %v2480 = vld [vmem:[%s2244 + $0xa8] sm:$0xf]
      %v2481 = vld [vmem:[%s2244 + $0xac] sm:$0xf]
      %v2482 = vld [vmem:[%s2244 + $0xb0] sm:$0x1]
      %v2483 = vld [vmem:[%s2244 + $0xb4] sm:$0xf]
      %v2484 = vld [vmem:[%s2244 + $0xb8] sm:$0xf]
      %v2485 = vld [vmem:[%s2244 + $0xbc] sm:$0x1]
      %v2487 = vshrl.u32 %v2438, 16
      %v2489 = vrot.slane %v2487, 4
      %v2490 = vshll.u32 %v2438, 16
      %v2492 = vrot.slane %v2490, 5
      %v2493 = vor.u32 %v2489, %v2492
      %v2494 = vrot.slane %v2493, 4
      %v2496 = vshll.u32 %v2439, 16
      %v2498 = vrot.slane %v2496, 5
      %v2499 = vsel %vm298, %v2494, %v2498
      %v2500 = vshrl.u32 %v2439, 16
      %v2502 = vrot.slane %v2500, 4
      %v2503 = vor.u32 %v2502, %v2498
      %v2504 = vrot.slane %v2503, 4
      %v2506 = vshll.u32 %v2440, 16
      %v2508 = vrot.slane %v2506, 5
      %v2509 = vsel %vm298, %v2504, %v2508
      %v2511 = vshrl.u32 %v2441, 16
      %v2513 = vrot.slane %v2511, 4
      %v2514 = vshll.u32 %v2441, 16
      %v2516 = vrot.slane %v2514, 5
      %v2517 = vor.u32 %v2513, %v2516
      %v2518 = vrot.slane %v2517, 4
      %v2520 = vshll.u32 %v2442, 16
      %v2522 = vrot.slane %v2520, 5
      %v2523 = vsel %vm298, %v2518, %v2522
      %v2524 = vshrl.u32 %v2442, 16
      %v2526 = vrot.slane %v2524, 4
      %v2527 = vor.u32 %v2526, %v2522
      %v2528 = vrot.slane %v2527, 4
      %v2530 = vshll.u32 %v2443, 16
      %v2532 = vrot.slane %v2530, 5
      %v2533 = vsel %vm298, %v2528, %v2532
      %v2535 = vshrl.u32 %v2444, 16
      %v2537 = vrot.slane %v2535, 4
      %v2538 = vshll.u32 %v2444, 16
      %v2540 = vrot.slane %v2538, 5
      %v2541 = vor.u32 %v2537, %v2540
      %v2542 = vrot.slane %v2541, 4
      %v2544 = vshll.u32 %v2445, 16
      %v2546 = vrot.slane %v2544, 5
      %v2547 = vsel %vm298, %v2542, %v2546
      %v2548 = vshrl.u32 %v2445, 16
      %v2550 = vrot.slane %v2548, 4
      %v2551 = vor.u32 %v2550, %v2546
      %v2552 = vrot.slane %v2551, 4
      %v2554 = vshll.u32 %v2446, 16
      %v2556 = vrot.slane %v2554, 5
      %v2557 = vsel %vm298, %v2552, %v2556
      %v2559 = vshrl.u32 %v2447, 16
      %v2561 = vrot.slane %v2559, 4
      %v2562 = vshll.u32 %v2447, 16
      %v2564 = vrot.slane %v2562, 5
      %v2565 = vor.u32 %v2561, %v2564
      %v2566 = vrot.slane %v2565, 4
      %v2568 = vshll.u32 %v2448, 16
      %v2570 = vrot.slane %v2568, 5
      %v2571 = vsel %vm298, %v2566, %v2570
      %v2572 = vshrl.u32 %v2448, 16
      %v2574 = vrot.slane %v2572, 4
      %v2575 = vor.u32 %v2574, %v2570
      %v2576 = vrot.slane %v2575, 4
      %v2578 = vshll.u32 %v2449, 16
      %v2580 = vrot.slane %v2578, 5
      %v2581 = vsel %vm298, %v2576, %v2580
      %v2583 = vshrl.u32 %v2450, 16
      %v2585 = vrot.slane %v2583, 4
      %v2586 = vshll.u32 %v2450, 16
      %v2588 = vrot.slane %v2586, 5
      %v2589 = vor.u32 %v2585, %v2588
      %v2590 = vrot.slane %v2589, 4
      %v2592 = vshll.u32 %v2451, 16
      %v2594 = vrot.slane %v2592, 5
      %v2595 = vsel %vm298, %v2590, %v2594
      %v2596 = vshrl.u32 %v2451, 16
      %v2598 = vrot.slane %v2596, 4
      %v2599 = vor.u32 %v2598, %v2594
      %v2600 = vrot.slane %v2599, 4
      %v2602 = vshll.u32 %v2452, 16
      %v2604 = vrot.slane %v2602, 5
      %v2605 = vsel %vm298, %v2600, %v2604
      %v2607 = vshrl.u32 %v2453, 16
      %v2609 = vrot.slane %v2607, 4
      %v2610 = vshll.u32 %v2453, 16
      %v2612 = vrot.slane %v2610, 5
      %v2613 = vor.u32 %v2609, %v2612
      %v2614 = vrot.slane %v2613, 4
      %v2616 = vshll.u32 %v2454, 16
      %v2618 = vrot.slane %v2616, 5
      %v2619 = vsel %vm298, %v2614, %v2618
      %v2620 = vshrl.u32 %v2454, 16
      %v2622 = vrot.slane %v2620, 4
      %v2623 = vor.u32 %v2622, %v2618
      %v2624 = vrot.slane %v2623, 4
      %v2626 = vshll.u32 %v2455, 16
      %v2628 = vrot.slane %v2626, 5
      %v2629 = vsel %vm298, %v2624, %v2628
      %v2631 = vshrl.u32 %v2456, 16
      %v2633 = vrot.slane %v2631, 4
      %v2634 = vshll.u32 %v2456, 16
      %v2636 = vrot.slane %v2634, 5
      %v2637 = vor.u32 %v2633, %v2636
      %v2638 = vrot.slane %v2637, 4
      %v2640 = vshll.u32 %v2457, 16
      %v2642 = vrot.slane %v2640, 5
      %v2643 = vsel %vm298, %v2638, %v2642
      %v2644 = vshrl.u32 %v2457, 16
      %v2646 = vrot.slane %v2644, 4
      %v2647 = vor.u32 %v2646, %v2642
      %v2648 = vrot.slane %v2647, 4
      %v2650 = vshll.u32 %v2458, 16
      %v2652 = vrot.slane %v2650, 5
      %v2653 = vsel %vm298, %v2648, %v2652
      %v2655 = vshrl.u32 %v2459, 16
      %v2657 = vrot.slane %v2655, 4
      %v2658 = vshll.u32 %v2459, 16
      %v2660 = vrot.slane %v2658, 5
      %v2661 = vor.u32 %v2657, %v2660
      %v2662 = vrot.slane %v2661, 4
      %v2664 = vshll.u32 %v2460, 16
      %v2666 = vrot.slane %v2664, 5
      %v2667 = vsel %vm298, %v2662, %v2666
      %v2668 = vshrl.u32 %v2460, 16
      %v2670 = vrot.slane %v2668, 4
      %v2671 = vor.u32 %v2670, %v2666
      %v2672 = vrot.slane %v2671, 4
      %v2674 = vshll.u32 %v2461, 16
      %v2676 = vrot.slane %v2674, 5
      %v2677 = vsel %vm298, %v2672, %v2676
      %v2679 = vshrl.u32 %v2462, 16
      %v2681 = vrot.slane %v2679, 4
      %v2682 = vshll.u32 %v2462, 16
      %v2684 = vrot.slane %v2682, 5
      %v2685 = vor.u32 %v2681, %v2684
      %v2686 = vrot.slane %v2685, 4
      %v2688 = vshll.u32 %v2463, 16
      %v2690 = vrot.slane %v2688, 5
      %v2691 = vsel %vm298, %v2686, %v2690
      %v2692 = vshrl.u32 %v2463, 16
      %v2694 = vrot.slane %v2692, 4
      %v2695 = vor.u32 %v2694, %v2690
      %v2696 = vrot.slane %v2695, 4
      %v2698 = vshll.u32 %v2464, 16
      %v2700 = vrot.slane %v2698, 5
      %v2701 = vsel %vm298, %v2696, %v2700
      %v2703 = vshrl.u32 %v2465, 16
      %v2705 = vrot.slane %v2703, 4
      %v2706 = vshll.u32 %v2465, 16
      %v2708 = vrot.slane %v2706, 5
      %v2709 = vor.u32 %v2705, %v2708
      %v2710 = vrot.slane %v2709, 4
      %v2712 = vshll.u32 %v2466, 16
      %v2714 = vrot.slane %v2712, 5
      %v2715 = vsel %vm298, %v2710, %v2714
      %v2716 = vshrl.u32 %v2466, 16
      %v2718 = vrot.slane %v2716, 4
      %v2719 = vor.u32 %v2718, %v2714
      %v2720 = vrot.slane %v2719, 4
      %v2722 = vshll.u32 %v2467, 16
      %v2724 = vrot.slane %v2722, 5
      %v2725 = vsel %vm298, %v2720, %v2724
      %v2727 = vshrl.u32 %v2468, 16
      %v2729 = vrot.slane %v2727, 4
      %v2730 = vshll.u32 %v2468, 16
      %v2732 = vrot.slane %v2730, 5
      %v2733 = vor.u32 %v2729, %v2732
      %v2734 = vrot.slane %v2733, 4
      %v2736 = vshll.u32 %v2469, 16
      %v2738 = vrot.slane %v2736, 5
      %v2739 = vsel %vm298, %v2734, %v2738
      %v2740 = vshrl.u32 %v2469, 16
      %v2742 = vrot.slane %v2740, 4
      %v2743 = vor.u32 %v2742, %v2738
      %v2744 = vrot.slane %v2743, 4
      %v2746 = vshll.u32 %v2470, 16
      %v2748 = vrot.slane %v2746, 5
      %v2749 = vsel %vm298, %v2744, %v2748
      %v2751 = vshrl.u32 %v2471, 16
      %v2753 = vrot.slane %v2751, 4
      %v2754 = vshll.u32 %v2471, 16
      %v2756 = vrot.slane %v2754, 5
      %v2757 = vor.u32 %v2753, %v2756
      %v2758 = vrot.slane %v2757, 4
      %v2760 = vshll.u32 %v2472, 16
      %v2762 = vrot.slane %v2760, 5
      %v2763 = vsel %vm298, %v2758, %v2762
      %v2764 = vshrl.u32 %v2472, 16
      %v2766 = vrot.slane %v2764, 4
      %v2767 = vor.u32 %v2766, %v2762
      %v2768 = vrot.slane %v2767, 4
      %v2770 = vshll.u32 %v2473, 16
      %v2772 = vrot.slane %v2770, 5
      %v2773 = vsel %vm298, %v2768, %v2772
      %v2775 = vshrl.u32 %v2474, 16
      %v2777 = vrot.slane %v2775, 4
      %v2778 = vshll.u32 %v2474, 16
      %v2780 = vrot.slane %v2778, 5
      %v2781 = vor.u32 %v2777, %v2780
      %v2782 = vrot.slane %v2781, 4
      %v2784 = vshll.u32 %v2475, 16
      %v2786 = vrot.slane %v2784, 5
      %v2787 = vsel %vm298, %v2782, %v2786
      %v2788 = vshrl.u32 %v2475, 16
      %v2790 = vrot.slane %v2788, 4
      %v2791 = vor.u32 %v2790, %v2786
      %v2792 = vrot.slane %v2791, 4
      %v2794 = vshll.u32 %v2476, 16
      %v2796 = vrot.slane %v2794, 5
      %v2797 = vsel %vm298, %v2792, %v2796
      %v2799 = vshrl.u32 %v2477, 16
      %v2801 = vrot.slane %v2799, 4
      %v2802 = vshll.u32 %v2477, 16
      %v2804 = vrot.slane %v2802, 5
      %v2805 = vor.u32 %v2801, %v2804
      %v2806 = vrot.slane %v2805, 4
      %v2808 = vshll.u32 %v2478, 16
      %v2810 = vrot.slane %v2808, 5
      %v2811 = vsel %vm298, %v2806, %v2810
      %v2812 = vshrl.u32 %v2478, 16
      %v2814 = vrot.slane %v2812, 4
      %v2815 = vor.u32 %v2814, %v2810
      %v2816 = vrot.slane %v2815, 4
      %v2818 = vshll.u32 %v2479, 16
      %v2820 = vrot.slane %v2818, 5
      %v2821 = vsel %vm298, %v2816, %v2820
      %v2823 = vshrl.u32 %v2480, 16
      %v2825 = vrot.slane %v2823, 4
      %v2826 = vshll.u32 %v2480, 16
      %v2828 = vrot.slane %v2826, 5
      %v2829 = vor.u32 %v2825, %v2828
      %v2830 = vrot.slane %v2829, 4
      %v2832 = vshll.u32 %v2481, 16
      %v2834 = vrot.slane %v2832, 5
      %v2835 = vsel %vm298, %v2830, %v2834
      %v2836 = vshrl.u32 %v2481, 16
      %v2838 = vrot.slane %v2836, 4
      %v2839 = vor.u32 %v2838, %v2834
      %v2840 = vrot.slane %v2839, 4
      %v2842 = vshll.u32 %v2482, 16
      %v2844 = vrot.slane %v2842, 5
      %v2845 = vsel %vm298, %v2840, %v2844
      %v2847 = vshrl.u32 %v2483, 16
      %v2849 = vrot.slane %v2847, 4
      %v2850 = vshll.u32 %v2483, 16
      %v2852 = vrot.slane %v2850, 5
      %v2853 = vor.u32 %v2849, %v2852
      %v2854 = vrot.slane %v2853, 4
      %v2856 = vshll.u32 %v2484, 16
      %v2858 = vrot.slane %v2856, 5
      %v2859 = vsel %vm298, %v2854, %v2858
      %v2860 = vshrl.u32 %v2484, 16
      %v2862 = vrot.slane %v2860, 4
      %v2863 = vor.u32 %v2862, %v2858
      %v2864 = vrot.slane %v2863, 4
      %v2866 = vshll.u32 %v2485, 16
      %v2868 = vrot.slane %v2866, 5
      %v2869 = vsel %vm298, %v2864, %v2868
      %2870 = vrot.lane.b32.xlu0 %v2499, 56
      %v2871 = vpop.permute.xlu0 %2870
      %2872 = vrot.lane.b32.xlu0 %v2509, 56
      %v2873 = vpop.permute.xlu0 %2872
      %2874 = vrot.lane.b32.xlu0 %v2523, 56
      %v2875 = vpop.permute.xlu0 %2874
      %2876 = vrot.lane.b32.xlu0 %v2533, 56
      %v2877 = vpop.permute.xlu0 %2876
      %2878 = vrot.lane.b32.xlu0 %v2547, 56
      %v2879 = vpop.permute.xlu0 %2878
      %2880 = vrot.lane.b32.xlu0 %v2557, 56
      %v2881 = vpop.permute.xlu0 %2880
      %2882 = vrot.lane.b32.xlu0 %v2571, 56
      %v2883 = vpop.permute.xlu0 %2882
      %2884 = vrot.lane.b32.xlu0 %v2581, 56
      %v2885 = vpop.permute.xlu0 %2884
      %2886 = vrot.lane.b32.xlu0 %v2595, 56
      %v2887 = vpop.permute.xlu0 %2886
      %2888 = vrot.lane.b32.xlu0 %v2605, 56
      %v2889 = vpop.permute.xlu0 %2888
      %2890 = vrot.lane.b32.xlu0 %v2619, 56
      %v2891 = vpop.permute.xlu0 %2890
      %2892 = vrot.lane.b32.xlu0 %v2629, 56
      %v2893 = vpop.permute.xlu0 %2892
      %2894 = vrot.lane.b32.xlu0 %v2643, 56
      %v2895 = vpop.permute.xlu0 %2894
      %2896 = vrot.lane.b32.xlu0 %v2653, 56
      %v2897 = vpop.permute.xlu0 %2896
      %2898 = vrot.lane.b32.xlu0 %v2667, 56
      %v2899 = vpop.permute.xlu0 %2898
      %2900 = vrot.lane.b32.xlu0 %v2677, 56
      %v2901 = vpop.permute.xlu0 %2900
      %2902 = vrot.lane.b32.xlu0 %v2691, 56
      %v2903 = vpop.permute.xlu0 %2902
      %2904 = vrot.lane.b32.xlu0 %v2701, 56
      %v2905 = vpop.permute.xlu0 %2904
      %2906 = vrot.lane.b32.xlu0 %v2715, 56
      %v2907 = vpop.permute.xlu0 %2906
      %2908 = vrot.lane.b32.xlu0 %v2725, 56
      %v2909 = vpop.permute.xlu0 %2908
      %2910 = vrot.lane.b32.xlu0 %v2739, 56
      %v2911 = vpop.permute.xlu0 %2910
      %2912 = vrot.lane.b32.xlu0 %v2749, 56
      %v2913 = vpop.permute.xlu0 %2912
      %2914 = vrot.lane.b32.xlu0 %v2763, 56
      %v2915 = vpop.permute.xlu0 %2914
      %2916 = vrot.lane.b32.xlu0 %v2773, 56
      %v2917 = vpop.permute.xlu0 %2916
      %2918 = vrot.lane.b32.xlu0 %v2787, 56
      %v2919 = vpop.permute.xlu0 %2918
      %2920 = vrot.lane.b32.xlu0 %v2797, 56
      %v2921 = vpop.permute.xlu0 %2920
      %2922 = vrot.lane.b32.xlu0 %v2811, 56
      %v2923 = vpop.permute.xlu0 %2922
      %2924 = vrot.lane.b32.xlu0 %v2821, 56
      %v2925 = vpop.permute.xlu0 %2924
      %2926 = vrot.lane.b32.xlu0 %v2835, 56
      %v2927 = vpop.permute.xlu0 %2926
      %2928 = vrot.lane.b32.xlu0 %v2845, 56
      %v2929 = vpop.permute.xlu0 %2928
      %2930 = vrot.lane.b32.xlu0 %v2859, 56
      %v2931 = vpop.permute.xlu0 %2930
      %2932 = vrot.lane.b32.xlu0 %v2869, 56
      %v2933 = vpop.permute.xlu0 %2932
      %vm2966 = vcmask 519616
      %2967 = vst.msk [vmem:[#allocation2] sm:$0xf] %vm2966, %v2871
      %2968 = vst.msk [vmem:[#allocation2 + $0x4] sm:$0xf] %vm2966, %v2873
      %2969 = vst.msk [vmem:[#allocation2 + $0x8] sm:$0xf] %vm2966, %v2875
      %2970 = vst.msk [vmem:[#allocation2 + $0xc] sm:$0xf] %vm2966, %v2877
      %2971 = vst.msk [vmem:[#allocation2 + $0x10] sm:$0xf] %vm2966, %v2879
      %2972 = vst.msk [vmem:[#allocation2 + $0x14] sm:$0xf] %vm2966, %v2881
      %2973 = vst.msk [vmem:[#allocation2 + $0x18] sm:$0xf] %vm2966, %v2883
      %2974 = vst.msk [vmem:[#allocation2 + $0x1c] sm:$0xf] %vm2966, %v2885
      %2975 = vst.msk [vmem:[#allocation2 + $0x20] sm:$0xf] %vm2966, %v2887
      %2976 = vst.msk [vmem:[#allocation2 + $0x24] sm:$0xf] %vm2966, %v2889
      %2977 = vst.msk [vmem:[#allocation2 + $0x28] sm:$0xf] %vm2966, %v2891
      %2978 = vst.msk [vmem:[#allocation2 + $0x2c] sm:$0xf] %vm2966, %v2893
      %2979 = vst.msk [vmem:[#allocation2 + $0x30] sm:$0xf] %vm2966, %v2895
      %2980 = vst.msk [vmem:[#allocation2 + $0x34] sm:$0xf] %vm2966, %v2897
      %2981 = vst.msk [vmem:[#allocation2 + $0x38] sm:$0xf] %vm2966, %v2899
      %2982 = vst.msk [vmem:[#allocation2 + $0x3c] sm:$0xf] %vm2966, %v2901
      %2983 = vst.msk [vmem:[#allocation2 + $0x40] sm:$0xf] %vm2966, %v2903
      %2984 = vst.msk [vmem:[#allocation2 + $0x44] sm:$0xf] %vm2966, %v2905
      %2985 = vst.msk [vmem:[#allocation2 + $0x48] sm:$0xf] %vm2966, %v2907
      %2986 = vst.msk [vmem:[#allocation2 + $0x4c] sm:$0xf] %vm2966, %v2909
      %2987 = vst.msk [vmem:[#allocation2 + $0x50] sm:$0xf] %vm2966, %v2911
      %2988 = vst.msk [vmem:[#allocation2 + $0x54] sm:$0xf] %vm2966, %v2913
      %2989 = vst.msk [vmem:[#allocation2 + $0x58] sm:$0xf] %vm2966, %v2915
      %2990 = vst.msk [vmem:[#allocation2 + $0x5c] sm:$0xf] %vm2966, %v2917
      %2991 = vst.msk [vmem:[#allocation2 + $0x60] sm:$0xf] %vm2966, %v2919
      %2992 = vst.msk [vmem:[#allocation2 + $0x64] sm:$0xf] %vm2966, %v2921
      %2993 = vst.msk [vmem:[#allocation2 + $0x68] sm:$0xf] %vm2966, %v2923
      %2994 = vst.msk [vmem:[#allocation2 + $0x6c] sm:$0xf] %vm2966, %v2925
      %2995 = vst.msk [vmem:[#allocation2 + $0x70] sm:$0xf] %vm2966, %v2927
      %2996 = vst.msk [vmem:[#allocation2 + $0x74] sm:$0xf] %vm2966, %v2929
      %2997 = vst.msk [vmem:[#allocation2 + $0x78] sm:$0xf] %vm2966, %v2931
      %2998 = vst.msk [vmem:[#allocation2 + $0x7c] sm:$0xf] %vm2966, %v2933
      %v2999 = vld [vmem:[%s2244] sm:$0xe]
      %v3000 = vld [vmem:[%s2244 + $0x4] sm:$0xf]
      %v3001 = vld [vmem:[%s2244 + $0x8] sm:$0x1]
      %v3002 = vld [vmem:[%s2244 + $0xc] sm:$0xe]
      %v3003 = vld [vmem:[%s2244 + $0x10] sm:$0xf]
      %v3004 = vld [vmem:[%s2244 + $0x14] sm:$0x1]
      %v3005 = vld [vmem:[%s2244 + $0x18] sm:$0xe]
      %v3006 = vld [vmem:[%s2244 + $0x1c] sm:$0xf]
      %v3007 = vld [vmem:[%s2244 + $0x20] sm:$0x1]
      %v3008 = vld [vmem:[%s2244 + $0x24] sm:$0xe]
      %v3009 = vld [vmem:[%s2244 + $0x28] sm:$0xf]
      %v3010 = vld [vmem:[%s2244 + $0x2c] sm:$0x1]
      %v3011 = vld [vmem:[%s2244 + $0x30] sm:$0xe]
      %v3012 = vld [vmem:[%s2244 + $0x34] sm:$0xf]
      %v3013 = vld [vmem:[%s2244 + $0x38] sm:$0x1]
      %v3014 = vld [vmem:[%s2244 + $0x3c] sm:$0xe]
      %v3015 = vld [vmem:[%s2244 + $0x40] sm:$0xf]
      %v3016 = vld [vmem:[%s2244 + $0x44] sm:$0x1]
      %v3017 = vld [vmem:[%s2244 + $0x48] sm:$0xe]
      %v3018 = vld [vmem:[%s2244 + $0x4c] sm:$0xf]
      %v3019 = vld [vmem:[%s2244 + $0x50] sm:$0x1]
      %v3020 = vld [vmem:[%s2244 + $0x54] sm:$0xe]
      %v3021 = vld [vmem:[%s2244 + $0x58] sm:$0xf]
      %v3022 = vld [vmem:[%s2244 + $0x5c] sm:$0x1]
      %v3023 = vld [vmem:[%s2244 + $0x60] sm:$0xe]
      %v3024 = vld [vmem:[%s2244 + $0x64] sm:$0xf]
      %v3025 = vld [vmem:[%s2244 + $0x68] sm:$0x1]
      %v3026 = vld [vmem:[%s2244 + $0x6c] sm:$0xe]
      %v3027 = vld [vmem:[%s2244 + $0x70] sm:$0xf]
      %v3028 = vld [vmem:[%s2244 + $0x74] sm:$0x1]
      %v3029 = vld [vmem:[%s2244 + $0x78] sm:$0xe]
      %v3030 = vld [vmem:[%s2244 + $0x7c] sm:$0xf]
      %v3031 = vld [vmem:[%s2244 + $0x80] sm:$0x1]
      %v3032 = vld [vmem:[%s2244 + $0x84] sm:$0xe]
      %v3033 = vld [vmem:[%s2244 + $0x88] sm:$0xf]
      %v3034 = vld [vmem:[%s2244 + $0x8c] sm:$0x1]
      %v3035 = vld [vmem:[%s2244 + $0x90] sm:$0xe]
      %v3036 = vld [vmem:[%s2244 + $0x94] sm:$0xf]
      %v3037 = vld [vmem:[%s2244 + $0x98] sm:$0x1]
      %v3038 = vld [vmem:[%s2244 + $0x9c] sm:$0xe]
      %v3039 = vld [vmem:[%s2244 + $0xa0] sm:$0xf]
      %v3040 = vld [vmem:[%s2244 + $0xa4] sm:$0x1]
      %v3041 = vld [vmem:[%s2244 + $0xa8] sm:$0xe]
      %v3042 = vld [vmem:[%s2244 + $0xac] sm:$0xf]
      %v3043 = vld [vmem:[%s2244 + $0xb0] sm:$0x1]
      %v3044 = vld [vmem:[%s2244 + $0xb4] sm:$0xe]
      %v3045 = vld [vmem:[%s2244 + $0xb8] sm:$0xf]
      %v3046 = vld [vmem:[%s2244 + $0xbc] sm:$0x1]
      %v3095 = vrot.slane %v2999, 5
      %v3096 = vrot.slane %v3095, 4
      %v3097 = vrot.slane %v3000, 5
      %v3098 = vsel %vm910, %v3096, %v3097
      %v3099 = vrot.slane %v3097, 4
      %v3100 = vrot.slane %v3001, 5
      %v3101 = vsel %vm910, %v3099, %v3100
      %v3102 = vrot.slane %v3002, 5
      %v3103 = vrot.slane %v3102, 4
      %v3104 = vrot.slane %v3003, 5
      %v3105 = vsel %vm910, %v3103, %v3104
      %v3106 = vrot.slane %v3104, 4
      %v3107 = vrot.slane %v3004, 5
      %v3108 = vsel %vm910, %v3106, %v3107
      %v3109 = vrot.slane %v3005, 5
      %v3110 = vrot.slane %v3109, 4
      %v3111 = vrot.slane %v3006, 5
      %v3112 = vsel %vm910, %v3110, %v3111
      %v3113 = vrot.slane %v3111, 4
      %v3114 = vrot.slane %v3007, 5
      %v3115 = vsel %vm910, %v3113, %v3114
      %v3116 = vrot.slane %v3008, 5
      %v3117 = vrot.slane %v3116, 4
      %v3118 = vrot.slane %v3009, 5
      %v3119 = vsel %vm910, %v3117, %v3118
      %v3120 = vrot.slane %v3118, 4
      %v3121 = vrot.slane %v3010, 5
      %v3122 = vsel %vm910, %v3120, %v3121
      %v3123 = vrot.slane %v3011, 5
      %v3124 = vrot.slane %v3123, 4
      %v3125 = vrot.slane %v3012, 5
      %v3126 = vsel %vm910, %v3124, %v3125
      %v3127 = vrot.slane %v3125, 4
      %v3128 = vrot.slane %v3013, 5
      %v3129 = vsel %vm910, %v3127, %v3128
      %v3130 = vrot.slane %v3014, 5
      %v3131 = vrot.slane %v3130, 4
      %v3132 = vrot.slane %v3015, 5
      %v3133 = vsel %vm910, %v3131, %v3132
      %v3134 = vrot.slane %v3132, 4
      %v3135 = vrot.slane %v3016, 5
      %v3136 = vsel %vm910, %v3134, %v3135
      %v3137 = vrot.slane %v3017, 5
      %v3138 = vrot.slane %v3137, 4
      %v3139 = vrot.slane %v3018, 5
      %v3140 = vsel %vm910, %v3138, %v3139
      %v3141 = vrot.slane %v3139, 4
      %v3142 = vrot.slane %v3019, 5
      %v3143 = vsel %vm910, %v3141, %v3142
      %v3144 = vrot.slane %v3020, 5
      %v3145 = vrot.slane %v3144, 4
      %v3146 = vrot.slane %v3021, 5
      %v3147 = vsel %vm910, %v3145, %v3146
      %v3148 = vrot.slane %v3146, 4
      %v3149 = vrot.slane %v3022, 5
      %v3150 = vsel %vm910, %v3148, %v3149
      %v3151 = vrot.slane %v3023, 5
      %v3152 = vrot.slane %v3151, 4
      %v3153 = vrot.slane %v3024, 5
      %v3154 = vsel %vm910, %v3152, %v3153
      %v3155 = vrot.slane %v3153, 4
      %v3156 = vrot.slane %v3025, 5
      %v3157 = vsel %vm910, %v3155, %v3156
      %v3158 = vrot.slane %v3026, 5
      %v3159 = vrot.slane %v3158, 4
      %v3160 = vrot.slane %v3027, 5
      %v3161 = vsel %vm910, %v3159, %v3160
      %v3162 = vrot.slane %v3160, 4
      %v3163 = vrot.slane %v3028, 5
      %v3164 = vsel %vm910, %v3162, %v3163
      %v3165 = vrot.slane %v3029, 5
      %v3166 = vrot.slane %v3165, 4
      %v3167 = vrot.slane %v3030, 5
      %v3168 = vsel %vm910, %v3166, %v3167
      %v3169 = vrot.slane %v3167, 4
      %v3170 = vrot.slane %v3031, 5
      %v3171 = vsel %vm910, %v3169, %v3170
      %v3172 = vrot.slane %v3032, 5
      %v3173 = vrot.slane %v3172, 4
      %v3174 = vrot.slane %v3033, 5
      %v3175 = vsel %vm910, %v3173, %v3174
      %v3176 = vrot.slane %v3174, 4
      %v3177 = vrot.slane %v3034, 5
      %v3178 = vsel %vm910, %v3176, %v3177
      %v3179 = vrot.slane %v3035, 5
      %v3180 = vrot.slane %v3179, 4
      %v3181 = vrot.slane %v3036, 5
      %v3182 = vsel %vm910, %v3180, %v3181
      %v3183 = vrot.slane %v3181, 4
      %v3184 = vrot.slane %v3037, 5
      %v3185 = vsel %vm910, %v3183, %v3184
      %v3186 = vrot.slane %v3038, 5
      %v3187 = vrot.slane %v3186, 4
      %v3188 = vrot.slane %v3039, 5
      %v3189 = vsel %vm910, %v3187, %v3188
      %v3190 = vrot.slane %v3188, 4
      %v3191 = vrot.slane %v3040, 5
      %v3192 = vsel %vm910, %v3190, %v3191
      %v3193 = vrot.slane %v3041, 5
      %v3194 = vrot.slane %v3193, 4
      %v3195 = vrot.slane %v3042, 5
      %v3196 = vsel %vm910, %v3194, %v3195
      %v3197 = vrot.slane %v3195, 4
      %v3198 = vrot.slane %v3043, 5
      %v3199 = vsel %vm910, %v3197, %v3198
      %v3200 = vrot.slane %v3044, 5
      %v3201 = vrot.slane %v3200, 4
      %v3202 = vrot.slane %v3045, 5
      %v3203 = vsel %vm910, %v3201, %v3202
      %v3204 = vrot.slane %v3202, 4
      %v3205 = vrot.slane %v3046, 5
      %v3206 = vsel %vm910, %v3204, %v3205
      %3207 = vrot.lane.b32.xlu0 %v3098, 64
      %v3208 = vpop.permute.xlu0 %3207
      %3209 = vrot.lane.b32.xlu0 %v3101, 64
      %v3210 = vpop.permute.xlu0 %3209
      %3211 = vrot.lane.b32.xlu0 %v3105, 64
      %v3212 = vpop.permute.xlu0 %3211
      %3213 = vrot.lane.b32.xlu0 %v3108, 64
      %v3214 = vpop.permute.xlu0 %3213
      %3215 = vrot.lane.b32.xlu0 %v3112, 64
      %v3216 = vpop.permute.xlu0 %3215
      %3217 = vrot.lane.b32.xlu0 %v3115, 64
      %v3218 = vpop.permute.xlu0 %3217
      %3219 = vrot.lane.b32.xlu0 %v3119, 64
      %v3220 = vpop.permute.xlu0 %3219
      %3221 = vrot.lane.b32.xlu0 %v3122, 64
      %v3222 = vpop.permute.xlu0 %3221
      %3223 = vrot.lane.b32.xlu0 %v3126, 64
      %v3224 = vpop.permute.xlu0 %3223
      %3225 = vrot.lane.b32.xlu0 %v3129, 64
      %v3226 = vpop.permute.xlu0 %3225
      %3227 = vrot.lane.b32.xlu0 %v3133, 64
      %v3228 = vpop.permute.xlu0 %3227
      %3229 = vrot.lane.b32.xlu0 %v3136, 64
      %v3230 = vpop.permute.xlu0 %3229
      %3231 = vrot.lane.b32.xlu0 %v3140, 64
      %v3232 = vpop.permute.xlu0 %3231
      %3233 = vrot.lane.b32.xlu0 %v3143, 64
      %v3234 = vpop.permute.xlu0 %3233
      %3235 = vrot.lane.b32.xlu0 %v3147, 64
      %v3236 = vpop.permute.xlu0 %3235
      %3237 = vrot.lane.b32.xlu0 %v3150, 64
      %v3238 = vpop.permute.xlu0 %3237
      %3239 = vrot.lane.b32.xlu0 %v3154, 64
      %v3240 = vpop.permute.xlu0 %3239
      %3241 = vrot.lane.b32.xlu0 %v3157, 64
      %v3242 = vpop.permute.xlu0 %3241
      %3243 = vrot.lane.b32.xlu0 %v3161, 64
      %v3244 = vpop.permute.xlu0 %3243
      %3245 = vrot.lane.b32.xlu0 %v3164, 64
      %v3246 = vpop.permute.xlu0 %3245
      %3247 = vrot.lane.b32.xlu0 %v3168, 64
      %v3248 = vpop.permute.xlu0 %3247
      %3249 = vrot.lane.b32.xlu0 %v3171, 64
      %v3250 = vpop.permute.xlu0 %3249
      %3251 = vrot.lane.b32.xlu0 %v3175, 64
      %v3252 = vpop.permute.xlu0 %3251
      %3253 = vrot.lane.b32.xlu0 %v3178, 64
      %v3254 = vpop.permute.xlu0 %3253
      %3255 = vrot.lane.b32.xlu0 %v3182, 64
      %v3256 = vpop.permute.xlu0 %3255
      %3257 = vrot.lane.b32.xlu0 %v3185, 64
      %v3258 = vpop.permute.xlu0 %3257
      %3259 = vrot.lane.b32.xlu0 %v3189, 64
      %v3260 = vpop.permute.xlu0 %3259
      %3261 = vrot.lane.b32.xlu0 %v3192, 64
      %v3262 = vpop.permute.xlu0 %3261
      %3263 = vrot.lane.b32.xlu0 %v3196, 64
      %v3264 = vpop.permute.xlu0 %3263
      %3265 = vrot.lane.b32.xlu0 %v3199, 64
      %v3266 = vpop.permute.xlu0 %3265
      %3267 = vrot.lane.b32.xlu0 %v3203, 64
      %v3268 = vpop.permute.xlu0 %3267
      %3269 = vrot.lane.b32.xlu0 %v3206, 64
      %v3270 = vpop.permute.xlu0 %3269
      %vm3303 = vcmask 585216
      %3304 = vst.msk [vmem:[#allocation2] sm:$0xf] %vm3303, %v3208
      %3305 = vst.msk [vmem:[#allocation2 + $0x4] sm:$0xf] %vm3303, %v3210
      %3306 = vst.msk [vmem:[#allocation2 + $0x8] sm:$0xf] %vm3303, %v3212
      %3307 = vst.msk [vmem:[#allocation2 + $0xc] sm:$0xf] %vm3303, %v3214
      %3308 = vst.msk [vmem:[#allocation2 + $0x10] sm:$0xf] %vm3303, %v3216
      %3309 = vst.msk [vmem:[#allocation2 + $0x14] sm:$0xf] %vm3303, %v3218
      %3310 = vst.msk [vmem:[#allocation2 + $0x18] sm:$0xf] %vm3303, %v3220
      %3311 = vst.msk [vmem:[#allocation2 + $0x1c] sm:$0xf] %vm3303, %v3222
      %3312 = vst.msk [vmem:[#allocation2 + $0x20] sm:$0xf] %vm3303, %v3224
      %3313 = vst.msk [vmem:[#allocation2 + $0x24] sm:$0xf] %vm3303, %v3226
      %3314 = vst.msk [vmem:[#allocation2 + $0x28] sm:$0xf] %vm3303, %v3228
      %3315 = vst.msk [vmem:[#allocation2 + $0x2c] sm:$0xf] %vm3303, %v3230
      %3316 = vst.msk [vmem:[#allocation2 + $0x30] sm:$0xf] %vm3303, %v3232
      %3317 = vst.msk [vmem:[#allocation2 + $0x34] sm:$0xf] %vm3303, %v3234
      %3318 = vst.msk [vmem:[#allocation2 + $0x38] sm:$0xf] %vm3303, %v3236
      %3319 = vst.msk [vmem:[#allocation2 + $0x3c] sm:$0xf] %vm3303, %v3238
      %3320 = vst.msk [vmem:[#allocation2 + $0x40] sm:$0xf] %vm3303, %v3240
      %3321 = vst.msk [vmem:[#allocation2 + $0x44] sm:$0xf] %vm3303, %v3242
      %3322 = vst.msk [vmem:[#allocation2 + $0x48] sm:$0xf] %vm3303, %v3244
      %3323 = vst.msk [vmem:[#allocation2 + $0x4c] sm:$0xf] %vm3303, %v3246
      %3324 = vst.msk [vmem:[#allocation2 + $0x50] sm:$0xf] %vm3303, %v3248
      %3325 = vst.msk [vmem:[#allocation2 + $0x54] sm:$0xf] %vm3303, %v3250
      %3326 = vst.msk [vmem:[#allocation2 + $0x58] sm:$0xf] %vm3303, %v3252
      %3327 = vst.msk [vmem:[#allocation2 + $0x5c] sm:$0xf] %vm3303, %v3254
      %3328 = vst.msk [vmem:[#allocation2 + $0x60] sm:$0xf] %vm3303, %v3256
      %3329 = vst.msk [vmem:[#allocation2 + $0x64] sm:$0xf] %vm3303, %v3258
      %3330 = vst.msk [vmem:[#allocation2 + $0x68] sm:$0xf] %vm3303, %v3260
      %3331 = vst.msk [vmem:[#allocation2 + $0x6c] sm:$0xf] %vm3303, %v3262
      %3332 = vst.msk [vmem:[#allocation2 + $0x70] sm:$0xf] %vm3303, %v3264
      %3333 = vst.msk [vmem:[#allocation2 + $0x74] sm:$0xf] %vm3303, %v3266
      %3334 = vst.msk [vmem:[#allocation2 + $0x78] sm:$0xf] %vm3303, %v3268
      %3335 = vst.msk [vmem:[#allocation2 + $0x7c] sm:$0xf] %vm3303, %v3270
      %v3336 = vld [vmem:[#allocation2] sm:$0xf]
      %v3337 = vld [vmem:[#allocation2 + $0x4] sm:$0xf]
      %v3338 = vld [vmem:[#allocation2 + $0x8] sm:$0xf]
      %v3339 = vld [vmem:[#allocation2 + $0xc] sm:$0xf]
      %v3340 = vld [vmem:[#allocation2 + $0x10] sm:$0xf]
      %v3341 = vld [vmem:[#allocation2 + $0x14] sm:$0xf]
      %v3342 = vld [vmem:[#allocation2 + $0x18] sm:$0xf]
      %v3343 = vld [vmem:[#allocation2 + $0x1c] sm:$0xf]
      %v3344 = vld [vmem:[#allocation2 + $0x20] sm:$0xf]
      %v3345 = vld [vmem:[#allocation2 + $0x24] sm:$0xf]
      %v3346 = vld [vmem:[#allocation2 + $0x28] sm:$0xf]
      %v3347 = vld [vmem:[#allocation2 + $0x2c] sm:$0xf]
      %v3348 = vld [vmem:[#allocation2 + $0x30] sm:$0xf]
      %v3349 = vld [vmem:[#allocation2 + $0x34] sm:$0xf]
      %v3350 = vld [vmem:[#allocation2 + $0x38] sm:$0xf]
      %v3351 = vld [vmem:[#allocation2 + $0x3c] sm:$0xf]
      %v3352 = vld [vmem:[#allocation2 + $0x40] sm:$0xf]
      %v3353 = vld [vmem:[#allocation2 + $0x44] sm:$0xf]
      %v3354 = vld [vmem:[#allocation2 + $0x48] sm:$0xf]
      %v3355 = vld [vmem:[#allocation2 + $0x4c] sm:$0xf]
      %v3356 = vld [vmem:[#allocation2 + $0x50] sm:$0xf]
      %v3357 = vld [vmem:[#allocation2 + $0x54] sm:$0xf]
      %v3358 = vld [vmem:[#allocation2 + $0x58] sm:$0xf]
      %v3359 = vld [vmem:[#allocation2 + $0x5c] sm:$0xf]
      %v3360 = vld [vmem:[#allocation2 + $0x60] sm:$0xf]
      %v3361 = vld [vmem:[#allocation2 + $0x64] sm:$0xf]
      %v3362 = vld [vmem:[#allocation2 + $0x68] sm:$0xf]
      %v3363 = vld [vmem:[#allocation2 + $0x6c] sm:$0xf]
      %v3364 = vld [vmem:[#allocation2 + $0x70] sm:$0xf]
      %v3365 = vld [vmem:[#allocation2 + $0x74] sm:$0xf]
      %v3366 = vld [vmem:[#allocation2 + $0x78] sm:$0xf]
      %v3367 = vld [vmem:[#allocation2 + $0x7c] sm:$0xf]
      %v3368 = vld [vmem:[%s1] sm:$0xf]
      %v3369 = vld [vmem:[%s1 + $0x4] sm:$0xf]
      %v3370 = vld [vmem:[%s1 + $0x8] sm:$0xf]
      %v3371 = vld [vmem:[%s1 + $0xc] sm:$0xf]
      %v3372 = vld [vmem:[%s1 + $0x10] sm:$0xf]
      %v3373 = vld [vmem:[%s1 + $0x14] sm:$0xf]
      %v3374 = vld [vmem:[%s1 + $0x18] sm:$0xf]
      %v3375 = vld [vmem:[%s1 + $0x1c] sm:$0xf]
      %v3376 = vld [vmem:[%s1 + $0x20] sm:$0xf]
      %v3409 = vunpack.c.l.b16 %v3336
      %v3410 = vunpack.c.l.b16 %v3337
      %v3411 = vunpack.c.l.b16 %v3338
      %v3412 = vunpack.c.l.b16 %v3339
      %v3413 = vunpack.c.l.b16 %v3340
      %v3414 = vunpack.c.l.b16 %v3341
      %v3415 = vunpack.c.l.b16 %v3342
      %v3416 = vunpack.c.l.b16 %v3343
      %v3417 = vunpack.c.l.b16 %v3344
      %v3418 = vunpack.c.l.b16 %v3345
      %v3419 = vunpack.c.l.b16 %v3346
      %v3420 = vunpack.c.l.b16 %v3347
      %v3421 = vunpack.c.l.b16 %v3348
      %v3422 = vunpack.c.l.b16 %v3349
      %v3423 = vunpack.c.l.b16 %v3350
      %v3424 = vunpack.c.l.b16 %v3351
      %v3425 = vunpack.c.l.b16 %v3352
      %v3426 = vunpack.c.l.b16 %v3353
      %v3427 = vunpack.c.l.b16 %v3354
      %v3428 = vunpack.c.l.b16 %v3355
      %v3429 = vunpack.c.l.b16 %v3356
      %v3430 = vunpack.c.l.b16 %v3357
      %v3431 = vunpack.c.l.b16 %v3358
      %v3432 = vunpack.c.l.b16 %v3359
      %v3433 = vunpack.c.l.b16 %v3360
      %v3434 = vunpack.c.l.b16 %v3361
      %v3435 = vunpack.c.l.b16 %v3362
      %v3436 = vunpack.c.l.b16 %v3363
      %v3437 = vunpack.c.l.b16 %v3364
      %v3438 = vunpack.c.l.b16 %v3365
      %v3439 = vunpack.c.l.b16 %v3366
      %v3440 = vunpack.c.l.b16 %v3367
      %v3441 = vpack.c.b16 %v3410, %v3409
      %v3442 = vpack.c.b16 %v3412, %v3411
      %v3443 = vpack.c.b16 %v3414, %v3413
      %v3444 = vpack.c.b16 %v3416, %v3415
      %v3445 = vpack.c.b16 %v3418, %v3417
      %v3446 = vpack.c.b16 %v3420, %v3419
      %v3447 = vpack.c.b16 %v3422, %v3421
      %v3448 = vpack.c.b16 %v3424, %v3423
      %v3449 = vpack.c.b16 %v3426, %v3425
      %v3450 = vpack.c.b16 %v3428, %v3427
      %v3451 = vpack.c.b16 %v3430, %v3429
      %v3452 = vpack.c.b16 %v3432, %v3431
      %v3453 = vpack.c.b16 %v3434, %v3433
      %v3454 = vpack.c.b16 %v3436, %v3435
      %v3455 = vpack.c.b16 %v3438, %v3437
      %v3456 = vpack.c.b16 %v3440, %v3439
      %v3466 = vunpack.c.l.b16 %v3368
      %v3467 = vunpack.c.l.b16 %v3369
      %v3468 = vunpack.c.l.b16 %v3370
      %v3469 = vunpack.c.l.b16 %v3371
      %v3470 = vunpack.c.l.b16 %v3372
      %v3471 = vunpack.c.l.b16 %v3373
      %v3472 = vunpack.c.l.b16 %v3374
      %v3473 = vunpack.c.l.b16 %v3375
      %v3474 = vunpack.c.l.b16 %v3376
      %v3475 = vpack.c.b16 %v3467, %v3466
      %v3476 = vpack.c.b16 %v3469, %v3468
      %v3477 = vpack.c.b16 %v3471, %v3470
      %v3478 = vpack.c.b16 %v3473, %v3472
      %v3479 = vpack.c.b16 %v3474, %v3474
      %vm3484 = vcmask 588800
      %v3486 = vsel %vm3484, %v3441, 0
      %v3489 = vsel %vm3484, %v3442, 0
      %v3492 = vsel %vm3484, %v3443, 0
      %v3495 = vsel %vm3484, %v3444, 0
      %v3498 = vsel %vm3484, %v3445, 0
      %v3501 = vsel %vm3484, %v3446, 0
      %v3504 = vsel %vm3484, %v3447, 0
      %v3507 = vsel %vm3484, %v3448, 0
      %v3510 = vsel %vm3484, %v3449, 0
      %v3513 = vsel %vm3484, %v3450, 0
      %v3516 = vsel %vm3484, %v3451, 0
      %v3519 = vsel %vm3484, %v3452, 0
      %v3522 = vsel %vm3484, %v3453, 0
      %v3525 = vsel %vm3484, %v3454, 0
      %v3528 = vsel %vm3484, %v3455, 0
      %v3531 = vsel %vm3484, %v3456, 0
      %vm3533 = vcmask 1043456
      %v3535 = vsel %vm3533, %v3479, 0
      %3537 = vmatprep.subr.bf16.mxu0 0
      %3538 = vmatpush1.bf16.msra.mxu0 0
      %3539 = vmatprep.subr.bf16.mxu0 0
      %3540 = vmatpush1.bf16.msra.mxu0 0
      %3541 = vmatprep.subr.bf16.mxu0 0
      %3542 = vmatpush1.bf16.msra.mxu0 0
      %3543 = vmatprep.subr.bf16.mxu0 0
      %3544 = vmatpush1.bf16.msra.mxu0 %v3535
      %3545 = vmatprep.subr.bf16.mxu0 0
      %3546 = vmatpush1.bf16.msra.mxu0 %v3478
      %3547 = vmatprep.subr.bf16.mxu0 0
      %3548 = vmatpush1.bf16.msra.mxu0 %v3477
      %3549 = vmatprep.subr.bf16.mxu0 0
      %3550 = vmatpush1.bf16.msra.mxu0 %v3476
      %3551 = vmatprep.subr.bf16.mxu0 0
      %3552 = vmatpush1.bf16.msra.mxu0 %v3475
      %3553 = vmatprep.subr.bf16.mxu0 0
      %3554 = vmatpush2.bf16.msra.mxu0 0
      %3555 = vmatprep.subr.bf16.mxu0 0
      %3556 = vmatpush2.bf16.msra.mxu0 0
      %3557 = vmatprep.subr.bf16.mxu0 0
      %3558 = vmatpush2.bf16.msra.mxu0 0
      %3559 = vmatprep.subr.bf16.mxu0 0
      %3560 = vmatpush2.bf16.msra.mxu0 0
      %3561 = vmatprep.subr.bf16.mxu0 0
      %3562 = vmatpush2.bf16.msra.mxu0 0
      %3563 = vmatprep.subr.bf16.mxu0 0
      %3564 = vmatpush2.bf16.msra.mxu0 0
      %3565 = vmatprep.subr.bf16.mxu0 0
      %3566 = vmatpush2.bf16.msra.mxu0 0
      %3567 = vmatprep.subr.bf16.mxu0 0
      %3568 = vmatpush2.bf16.msra.mxu0 0
      %3569 = vmatprep.mubr.bf16.mxu0 0
      %3570 = vmatmul.mubr.bf16.gmra.mxu0 %v3486
      %v3571 = vpop.f32.mrf.mxu0
      %v3572 = vadd.f32 0.0, %v3571
      %v3573 = vpop.f32.mrf.mxu0
      %v3574 = vpop.f32.mrf.mxu0
      %v3575 = vadd.f32 0.0, %v3574
      %v3576 = vpop.f32.mrf.mxu0
      %3577 = vmatprep.mubr.bf16.mxu0 0
      %3578 = vmatmul.mubr.bf16.gmra.mxu0 %v3489
      %v3579 = vpop.f32.mrf.mxu0
      %v3580 = vadd.f32 0.0, %v3579
      %v3581 = vpop.f32.mrf.mxu0
      %v3582 = vpop.f32.mrf.mxu0
      %v3583 = vadd.f32 0.0, %v3582
      %v3584 = vpop.f32.mrf.mxu0
      %3585 = vmatprep.mubr.bf16.mxu0 0
      %3586 = vmatmul.mubr.bf16.gmra.mxu0 %v3492
      %v3587 = vpop.f32.mrf.mxu0
      %v3588 = vadd.f32 0.0, %v3587
      %v3589 = vpop.f32.mrf.mxu0
      %v3590 = vpop.f32.mrf.mxu0
      %v3591 = vadd.f32 0.0, %v3590
      %v3592 = vpop.f32.mrf.mxu0
      %3593 = vmatprep.mubr.bf16.mxu0 0
      %3594 = vmatmul.mubr.bf16.gmra.mxu0 %v3495
      %v3595 = vpop.f32.mrf.mxu0
      %v3596 = vadd.f32 0.0, %v3595
      %v3597 = vpop.f32.mrf.mxu0
      %v3598 = vpop.f32.mrf.mxu0
      %v3599 = vadd.f32 0.0, %v3598
      %v3600 = vpop.f32.mrf.mxu0
      %3601 = vmatprep.mubr.bf16.mxu0 0
      %3602 = vmatmul.mubr.bf16.gmra.mxu0 %v3498
      %v3603 = vpop.f32.mrf.mxu0
      %v3604 = vadd.f32 0.0, %v3603
      %v3605 = vpop.f32.mrf.mxu0
      %v3606 = vpop.f32.mrf.mxu0
      %v3607 = vadd.f32 0.0, %v3606
      %v3608 = vpop.f32.mrf.mxu0
      %3609 = vmatprep.mubr.bf16.mxu0 0
      %3610 = vmatmul.mubr.bf16.gmra.mxu0 %v3501
      %v3611 = vpop.f32.mrf.mxu0
      %v3612 = vadd.f32 0.0, %v3611
      %v3613 = vpop.f32.mrf.mxu0
      %v3614 = vpop.f32.mrf.mxu0
      %v3615 = vadd.f32 0.0, %v3614
      %v3616 = vpop.f32.mrf.mxu0
      %3617 = vmatprep.mubr.bf16.mxu0 0
      %3618 = vmatmul.mubr.bf16.gmra.mxu0 %v3504
      %v3619 = vpop.f32.mrf.mxu0
      %v3620 = vadd.f32 0.0, %v3619
      %v3621 = vpop.f32.mrf.mxu0
      %v3622 = vpop.f32.mrf.mxu0
      %v3623 = vadd.f32 0.0, %v3622
      %v3624 = vpop.f32.mrf.mxu0
      %3625 = vmatprep.mubr.bf16.mxu0 0
      %3626 = vmatmul.mubr.bf16.gmra.mxu0 %v3507
      %v3627 = vpop.f32.mrf.mxu0
      %v3628 = vadd.f32 0.0, %v3627
      %v3629 = vpop.f32.mrf.mxu0
      %v3630 = vpop.f32.mrf.mxu0
      %v3631 = vadd.f32 0.0, %v3630
      %v3632 = vpop.f32.mrf.mxu0
      %3633 = vmatprep.mubr.bf16.mxu0 0
      %3634 = vmatmul.mubr.bf16.gmra.mxu0 %v3510
      %v3635 = vpop.f32.mrf.mxu0
      %v3636 = vadd.f32 0.0, %v3635
      %v3637 = vpop.f32.mrf.mxu0
      %v3638 = vpop.f32.mrf.mxu0
      %v3639 = vadd.f32 0.0, %v3638
      %v3640 = vpop.f32.mrf.mxu0
      %3641 = vmatprep.mubr.bf16.mxu0 0
      %3642 = vmatmul.mubr.bf16.gmra.mxu0 %v3513
      %v3643 = vpop.f32.mrf.mxu0
      %v3644 = vadd.f32 0.0, %v3643
      %v3645 = vpop.f32.mrf.mxu0
      %v3646 = vpop.f32.mrf.mxu0
      %v3647 = vadd.f32 0.0, %v3646
      %v3648 = vpop.f32.mrf.mxu0
      %3649 = vmatprep.mubr.bf16.mxu0 0
      %3650 = vmatmul.mubr.bf16.gmra.mxu0 %v3516
      %v3651 = vpop.f32.mrf.mxu0
      %v3652 = vadd.f32 0.0, %v3651
      %v3653 = vpop.f32.mrf.mxu0
      %v3654 = vpop.f32.mrf.mxu0
      %v3655 = vadd.f32 0.0, %v3654
      %v3656 = vpop.f32.mrf.mxu0
      %3657 = vmatprep.mubr.bf16.mxu0 0
      %3658 = vmatmul.mubr.bf16.gmra.mxu0 %v3519
      %v3659 = vpop.f32.mrf.mxu0
      %v3660 = vadd.f32 0.0, %v3659
      %v3661 = vpop.f32.mrf.mxu0
      %v3662 = vpop.f32.mrf.mxu0
      %v3663 = vadd.f32 0.0, %v3662
      %v3664 = vpop.f32.mrf.mxu0
      %3665 = vmatprep.mubr.bf16.mxu0 0
      %3666 = vmatmul.mubr.bf16.gmra.mxu0 %v3522
      %v3667 = vpop.f32.mrf.mxu0
      %v3668 = vadd.f32 0.0, %v3667
      %v3669 = vpop.f32.mrf.mxu0
      %v3670 = vpop.f32.mrf.mxu0
      %v3671 = vadd.f32 0.0, %v3670
      %v3672 = vpop.f32.mrf.mxu0
      %3673 = vmatprep.mubr.bf16.mxu0 0
      %3674 = vmatmul.mubr.bf16.gmra.mxu0 %v3525
      %v3675 = vpop.f32.mrf.mxu0
      %v3676 = vadd.f32 0.0, %v3675
      %v3677 = vpop.f32.mrf.mxu0
      %v3678 = vpop.f32.mrf.mxu0
      %v3679 = vadd.f32 0.0, %v3678
      %v3680 = vpop.f32.mrf.mxu0
      %3681 = vmatprep.mubr.bf16.mxu0 0
      %3682 = vmatmul.mubr.bf16.gmra.mxu0 %v3528
      %v3683 = vpop.f32.mrf.mxu0
      %v3684 = vadd.f32 0.0, %v3683
      %v3685 = vpop.f32.mrf.mxu0
      %v3686 = vpop.f32.mrf.mxu0
      %v3687 = vadd.f32 0.0, %v3686
      %v3688 = vpop.f32.mrf.mxu0
      %3689 = vmatprep.mubr.bf16.mxu0 0
      %3690 = vmatmul.mubr.bf16.gmra.mxu0 %v3531
      %v3691 = vpop.f32.mrf.mxu0
      %v3692 = vadd.f32 0.0, %v3691
      %v3693 = vpop.f32.mrf.mxu0
      %v3694 = vpop.f32.mrf.mxu0
      %v3695 = vadd.f32 0.0, %v3694
      %v3696 = vpop.f32.mrf.mxu0
      %3697 = vdwg.mxu0
      %v3698 = vpack.c.bf16 %v3575, %v3572
      %v3699 = vpack.c.bf16 %v3583, %v3580
      %v3700 = vpack.c.bf16 %v3591, %v3588
      %v3701 = vpack.c.bf16 %v3599, %v3596
      %v3702 = vpack.c.bf16 %v3607, %v3604
      %v3703 = vpack.c.bf16 %v3615, %v3612
      %v3704 = vpack.c.bf16 %v3623, %v3620
      %v3705 = vpack.c.bf16 %v3631, %v3628
      %v3706 = vpack.c.bf16 %v3639, %v3636
      %v3707 = vpack.c.bf16 %v3647, %v3644
      %v3708 = vpack.c.bf16 %v3655, %v3652
      %v3709 = vpack.c.bf16 %v3663, %v3660
      %v3710 = vpack.c.bf16 %v3671, %v3668
      %v3711 = vpack.c.bf16 %v3679, %v3676
      %v3712 = vpack.c.bf16 %v3687, %v3684
      %v3713 = vpack.c.bf16 %v3695, %v3692
      %v3730 = vunpack.c.l.b16 %v3698
      %v3731 = vunpack.c.h.b16 %v3698
      %v3732 = vunpack.c.l.b16 %v3699
      %v3733 = vunpack.c.h.b16 %v3699
      %v3734 = vunpack.c.l.b16 %v3700
      %v3735 = vunpack.c.h.b16 %v3700
      %v3736 = vunpack.c.l.b16 %v3701
      %v3737 = vunpack.c.h.b16 %v3701
      %v3738 = vunpack.c.l.b16 %v3702
      %v3739 = vunpack.c.h.b16 %v3702
      %v3740 = vunpack.c.l.b16 %v3703
      %v3741 = vunpack.c.h.b16 %v3703
      %v3742 = vunpack.c.l.b16 %v3704
      %v3743 = vunpack.c.h.b16 %v3704
      %v3744 = vunpack.c.l.b16 %v3705
      %v3745 = vunpack.c.h.b16 %v3705
      %v3746 = vunpack.c.l.b16 %v3706
      %v3747 = vunpack.c.h.b16 %v3706
      %v3748 = vunpack.c.l.b16 %v3707
      %v3749 = vunpack.c.h.b16 %v3707
      %v3750 = vunpack.c.l.b16 %v3708
      %v3751 = vunpack.c.h.b16 %v3708
      %v3752 = vunpack.c.l.b16 %v3709
      %v3753 = vunpack.c.h.b16 %v3709
      %v3754 = vunpack.c.l.b16 %v3710
      %v3755 = vunpack.c.h.b16 %v3710
      %v3756 = vunpack.c.l.b16 %v3711
      %v3757 = vunpack.c.h.b16 %v3711
      %v3758 = vunpack.c.l.b16 %v3712
      %v3759 = vunpack.c.h.b16 %v3712
      %v3760 = vunpack.c.l.b16 %v3713
      %v3761 = vunpack.c.h.b16 %v3713
      %v3762 = vpack.c.b16 %v3730, %v3730
      %v3763 = vpack.c.b16 %v3731, %v3731
      %v3764 = vpack.c.b16 %v3732, %v3732
      %v3765 = vpack.c.b16 %v3733, %v3733
      %v3766 = vpack.c.b16 %v3734, %v3734
      %v3767 = vpack.c.b16 %v3735, %v3735
      %v3768 = vpack.c.b16 %v3736, %v3736
      %v3769 = vpack.c.b16 %v3737, %v3737
      %v3770 = vpack.c.b16 %v3738, %v3738
      %v3771 = vpack.c.b16 %v3739, %v3739
      %v3772 = vpack.c.b16 %v3740, %v3740
      %v3773 = vpack.c.b16 %v3741, %v3741
      %v3774 = vpack.c.b16 %v3742, %v3742
      %v3775 = vpack.c.b16 %v3743, %v3743
      %v3776 = vpack.c.b16 %v3744, %v3744
      %v3777 = vpack.c.b16 %v3745, %v3745
      %v3778 = vpack.c.b16 %v3746, %v3746
      %v3779 = vpack.c.b16 %v3747, %v3747
      %v3780 = vpack.c.b16 %v3748, %v3748
      %v3781 = vpack.c.b16 %v3749, %v3749
      %v3782 = vpack.c.b16 %v3750, %v3750
      %v3783 = vpack.c.b16 %v3751, %v3751
      %v3784 = vpack.c.b16 %v3752, %v3752
      %v3785 = vpack.c.b16 %v3753, %v3753
      %v3786 = vpack.c.b16 %v3754, %v3754
      %v3787 = vpack.c.b16 %v3755, %v3755
      %v3788 = vpack.c.b16 %v3756, %v3756
      %v3789 = vpack.c.b16 %v3757, %v3757
      %v3790 = vpack.c.b16 %v3758, %v3758
      %v3791 = vpack.c.b16 %v3759, %v3759
      %v3792 = vpack.c.b16 %v3760, %v3760
      %v3793 = vpack.c.b16 %v3761, %v3761
      %3826 = vst.msk [vmem:[%s177] sm:$0xf] %vm215, %v3762
      %3827 = vst.msk [vmem:[%s177 + $0x4] sm:$0xf] %vm215, %v3763
      %3828 = vst.msk [vmem:[%s177 + $0x8] sm:$0xf] %vm215, %v3764
      %3829 = vst.msk [vmem:[%s177 + $0xc] sm:$0xf] %vm215, %v3765
      %3830 = vst.msk [vmem:[%s177 + $0x10] sm:$0xf] %vm215, %v3766
      %3831 = vst.msk [vmem:[%s177 + $0x14] sm:$0xf] %vm215, %v3767
      %3832 = vst.msk [vmem:[%s177 + $0x18] sm:$0xf] %vm215, %v3768
      %3833 = vst.msk [vmem:[%s177 + $0x1c] sm:$0xf] %vm215, %v3769
      %3834 = vst.msk [vmem:[%s177 + $0x20] sm:$0xf] %vm215, %v3770
      %3835 = vst.msk [vmem:[%s177 + $0x24] sm:$0xf] %vm215, %v3771
      %3836 = vst.msk [vmem:[%s177 + $0x28] sm:$0xf] %vm215, %v3772
      %3837 = vst.msk [vmem:[%s177 + $0x2c] sm:$0xf] %vm215, %v3773
      %3838 = vst.msk [vmem:[%s177 + $0x30] sm:$0xf] %vm215, %v3774
      %3839 = vst.msk [vmem:[%s177 + $0x34] sm:$0xf] %vm215, %v3775
      %3840 = vst.msk [vmem:[%s177 + $0x38] sm:$0xf] %vm215, %v3776
      %3841 = vst.msk [vmem:[%s177 + $0x3c] sm:$0xf] %vm215, %v3777
      %3842 = vst.msk [vmem:[%s177 + $0x40] sm:$0xf] %vm215, %v3778
      %3843 = vst.msk [vmem:[%s177 + $0x44] sm:$0xf] %vm215, %v3779
      %3844 = vst.msk [vmem:[%s177 + $0x48] sm:$0xf] %vm215, %v3780
      %3845 = vst.msk [vmem:[%s177 + $0x4c] sm:$0xf] %vm215, %v3781
      %3846 = vst.msk [vmem:[%s177 + $0x50] sm:$0xf] %vm215, %v3782
      %3847 = vst.msk [vmem:[%s177 + $0x54] sm:$0xf] %vm215, %v3783
      %3848 = vst.msk [vmem:[%s177 + $0x58] sm:$0xf] %vm215, %v3784
      %3849 = vst.msk [vmem:[%s177 + $0x5c] sm:$0xf] %vm215, %v3785
      %3850 = vst.msk [vmem:[%s177 + $0x60] sm:$0xf] %vm215, %v3786
      %3851 = vst.msk [vmem:[%s177 + $0x64] sm:$0xf] %vm215, %v3787
      %3852 = vst.msk [vmem:[%s177 + $0x68] sm:$0xf] %vm215, %v3788
      %3853 = vst.msk [vmem:[%s177 + $0x6c] sm:$0xf] %vm215, %v3789
      %3854 = vst.msk [vmem:[%s177 + $0x70] sm:$0xf] %vm215, %v3790
      %3855 = vst.msk [vmem:[%s177 + $0x74] sm:$0xf] %vm215, %v3791
      %3856 = vst.msk [vmem:[%s177 + $0x78] sm:$0xf] %vm215, %v3792
      %3857 = vst.msk [vmem:[%s177 + $0x7c] sm:$0xf] %vm215, %v3793
      %v3858 = vadd.f32 %v3572, %v3575
      %v3859 = vadd.f32 %v3858, %v3580
      %v3860 = vadd.f32 %v3859, %v3583
      %v3861 = vadd.f32 %v3860, %v3588
      %v3862 = vadd.f32 %v3861, %v3591
      %v3863 = vadd.f32 %v3862, %v3596
      %v3864 = vadd.f32 %v3863, %v3599
      %v3865 = vadd.f32 %v3864, %v3604
      %v3866 = vadd.f32 %v3865, %v3607
      %v3867 = vadd.f32 %v3866, %v3612
      %v3868 = vadd.f32 %v3867, %v3615
      %v3869 = vadd.f32 %v3868, %v3620
      %v3870 = vadd.f32 %v3869, %v3623
      %v3871 = vadd.f32 %v3870, %v3628
      %v3872 = vadd.f32 %v3871, %v3631
      %v3873 = vadd.f32 %v3872, %v3636
      %v3874 = vadd.f32 %v3873, %v3639
      %v3875 = vadd.f32 %v3874, %v3644
      %v3876 = vadd.f32 %v3875, %v3647
      %v3877 = vadd.f32 %v3876, %v3652
      %v3878 = vadd.f32 %v3877, %v3655
      %v3879 = vadd.f32 %v3878, %v3660
      %v3880 = vadd.f32 %v3879, %v3663
      %v3881 = vadd.f32 %v3880, %v3668
      %v3882 = vadd.f32 %v3881, %v3671
      %v3883 = vadd.f32 %v3882, %v3676
      %v3884 = vadd.f32 %v3883, %v3679
      %v3885 = vadd.f32 %v3884, %v3684
      %v3886 = vadd.f32 %v3885, %v3687
      %v3887 = vadd.f32 %v3886, %v3692
      %v3888 = vadd.f32 %v3887, %v3695
      %v3889 = vrot.slane %v3888, 4
      %v3890 = vadd.f32 %v3888, %v3889
      %v3891 = vrot.slane %v3890, 2
      %v3892 = vadd.f32 %v3890, %v3891
      %v3893 = vrot.slane %v3892, 1
      %v3894 = vadd.f32 %v3892, %v3893
      %v3895 = vadd.f32 %v3894, 0.0
      %v3896 = vmul.f32 %v3572, %v3572
      %v3897 = vmul.f32 %v3575, %v3575
      %v3898 = vmul.f32 %v3580, %v3580
      %v3899 = vmul.f32 %v3583, %v3583
      %v3900 = vmul.f32 %v3588, %v3588
      %v3901 = vmul.f32 %v3591, %v3591
      %v3902 = vmul.f32 %v3596, %v3596
      %v3903 = vmul.f32 %v3599, %v3599
      %v3904 = vmul.f32 %v3604, %v3604
      %v3905 = vmul.f32 %v3607, %v3607
      %v3906 = vmul.f32 %v3612, %v3612
      %v3907 = vmul.f32 %v3615, %v3615
      %v3908 = vmul.f32 %v3620, %v3620
      %v3909 = vmul.f32 %v3623, %v3623
      %v3910 = vmul.f32 %v3628, %v3628
      %v3911 = vmul.f32 %v3631, %v3631
      %v3912 = vmul.f32 %v3636, %v3636
      %v3913 = vmul.f32 %v3639, %v3639
      %v3914 = vmul.f32 %v3644, %v3644
      %v3915 = vmul.f32 %v3647, %v3647
      %v3916 = vmul.f32 %v3652, %v3652
      %v3917 = vmul.f32 %v3655, %v3655
      %v3918 = vmul.f32 %v3660, %v3660
      %v3919 = vmul.f32 %v3663, %v3663
      %v3920 = vmul.f32 %v3668, %v3668
      %v3921 = vmul.f32 %v3671, %v3671
      %v3922 = vmul.f32 %v3676, %v3676
      %v3923 = vmul.f32 %v3679, %v3679
      %v3924 = vmul.f32 %v3684, %v3684
      %v3925 = vmul.f32 %v3687, %v3687
      %v3926 = vmul.f32 %v3692, %v3692
      %v3927 = vmul.f32 %v3695, %v3695
      %v3928 = vadd.f32 %v3896, %v3897
      %v3929 = vadd.f32 %v3928, %v3898
      %v3930 = vadd.f32 %v3929, %v3899
      %v3931 = vadd.f32 %v3930, %v3900
      %v3932 = vadd.f32 %v3931, %v3901
      %v3933 = vadd.f32 %v3932, %v3902
      %v3934 = vadd.f32 %v3933, %v3903
      %v3935 = vadd.f32 %v3934, %v3904
      %v3936 = vadd.f32 %v3935, %v3905
      %v3937 = vadd.f32 %v3936, %v3906
      %v3938 = vadd.f32 %v3937, %v3907
      %v3939 = vadd.f32 %v3938, %v3908
      %v3940 = vadd.f32 %v3939, %v3909
      %v3941 = vadd.f32 %v3940, %v3910
      %v3942 = vadd.f32 %v3941, %v3911
      %v3943 = vadd.f32 %v3942, %v3912
      %v3944 = vadd.f32 %v3943, %v3913
      %v3945 = vadd.f32 %v3944, %v3914
      %v3946 = vadd.f32 %v3945, %v3915
      %v3947 = vadd.f32 %v3946, %v3916
      %v3948 = vadd.f32 %v3947, %v3917
      %v3949 = vadd.f32 %v3948, %v3918
      %v3950 = vadd.f32 %v3949, %v3919
      %v3951 = vadd.f32 %v3950, %v3920
      %v3952 = vadd.f32 %v3951, %v3921
      %v3953 = vadd.f32 %v3952, %v3922
      %v3954 = vadd.f32 %v3953, %v3923
      %v3955 = vadd.f32 %v3954, %v3924
      %v3956 = vadd.f32 %v3955, %v3925
      %v3957 = vadd.f32 %v3956, %v3926
      %v3958 = vadd.f32 %v3957, %v3927
      %v3959 = vrot.slane %v3958, 4
      %v3960 = vadd.f32 %v3958, %v3959
      %v3961 = vrot.slane %v3960, 2
      %v3962 = vadd.f32 %v3960, %v3961
      %v3963 = vrot.slane %v3962, 1
      %v3964 = vadd.f32 %v3962, %v3963
      %v3965 = vadd.f32 %v3964, 0.0
      %3966 = vst [vmem:[%s181] sm:$0x1] %v3895
      %3967 = vst [vmem:[%s181 + $0x1] sm:$0x1] %v3965
      %p3968 = scmp.lt.s32.totalorder %s15, 1
      %s3969 = scalar_select %p3968, %s15, 1
      %s3970 = smul.addr %s3969, 32
      %s3971 = smul.addr %s3970, 4
      %s3972 = scalar_lea.vmem %s2, %s3971
      %p3973 = scmp.lt.s32.totalorder %s15, 1
      %s3974 = scalar_select %p3973, %s15, 1
      %s3975 = smul.addr %s3974, 2
      %s3976 = scalar_lea.vmem %s3, %s3975
      // Predicated region
      $region29: #{conv_bn_relu_forward.2} parent=27 // pred_check
        %p3977 = pneg %p80
      $region30: #{conv_bn_relu_forward.2} parent=27 // pred_check_branch
        %3979 = sbr.rel (%p3977) target = $region32
      $region31: #{conv_bn_relu_forward.2} parent=27 // pred_region
        _
      $region32: #{conv_bn_relu_forward.2} parent=27 // pred_fallthru
        _
      // Predicated region
      $region33: #{conv_bn_relu_forward.2} parent=27 // pred_check
        %p3980 = pneg %p106
      $region34: #{conv_bn_relu_forward.2} parent=27 // pred_check_branch
        %3982 = sbr.rel (%p3980) target = $region36
      $region35: #{conv_bn_relu_forward.2} parent=27 // pred_region
        _
      $region36: #{conv_bn_relu_forward.2} parent=27 // pred_fallthru
        _
    $region28: #{conv_bn_relu_forward.2} parent=5 // pred_fallthru
      _
    %p3983 = scmp.le.s32.totalorder 2, %s10
    // Predicated region
    $region37: #{conv_bn_relu_forward.2} parent=5 // pred_check
      %p3984 = pneg %p3983
    $region38: #{conv_bn_relu_forward.2} parent=5 // pred_check_branch
      %3986 = sbr.rel (%p3984) target = $region40
    $region39: #{conv_bn_relu_forward.2} parent=5 // pred_region
      %s3987 = ssub.s32 %s10, 2
      // Predicated region
      $region41: #{conv_bn_relu_forward.2} parent=39 // pred_check
        %p3988 = pneg %p86
      $region42: #{conv_bn_relu_forward.2} parent=39 // pred_check_branch
        %3990 = sbr.rel (%p3988) target = $region44
      $region43: #{conv_bn_relu_forward.2} parent=39 // pred_region
        %p3991 = scmp.lt.s32.totalorder %s16, 1
        %s3992 = scalar_select %p3991, %s16, 1
        %s3993 = smul.addr %s3992, 32
        %s3994 = smul.addr %s3993, 4
        %s3995 = scalar_lea.vmem %s2, %s3994
      $region44: #{conv_bn_relu_forward.2} parent=39 // pred_fallthru
        _
      // Predicated region
      $region45: #{conv_bn_relu_forward.2} parent=39 // pred_check
        %p3996 = pneg %p112
      $region46: #{conv_bn_relu_forward.2} parent=39 // pred_check_branch
        %3998 = sbr.rel (%p3996) target = $region48
      $region47: #{conv_bn_relu_forward.2} parent=39 // pred_region
        %p3999 = scmp.lt.s32.totalorder %s16, 1
        %s4000 = scalar_select %p3999, %s16, 1
        %s4001 = smul.addr %s4000, 2
        %s4002 = scalar_lea.vmem %s3, %s4001
      $region48: #{conv_bn_relu_forward.2} parent=39 // pred_fallthru
        _
    $region40: #{conv_bn_relu_forward.2} parent=5 // pred_fallthru
      _
  $region6: #{conv_bn_relu_forward.2} parent=0 // loop_footer
    %s14 = sadd.s32 1, %s10
  $region7: #{conv_bn_relu_forward.2} parent=0 // loop_footer_branch
    %9 = sbr.rel target = $region3
  $region8: #{conv_bn_relu_forward.2} parent=0 // loop_exit
    _

</llo_original>
